<compile_context>
chip_gen: v6e
topology: v6e:2x2x1
jax: 0.10.0
libtpu: 0.0.40
codegen_flags: <defaults>
</compile_context>

<pallas_src>
import numpy as np
import jax
import jax.numpy as jnp
from jax.experimental import pallas as pl
from jax.experimental.pallas import tpu as pltpu

N_WORD = 16
N_H = 32
N_DEPTH = 2
NUM_CHOSEN = 5  # the torch module always builds 5 chosen-column slots


def _vmem():
    return pl.BlockSpec(memory_space=pltpu.MemorySpace.VMEM)


def _smem():
    return pl.BlockSpec(memory_space=pltpu.MemorySpace.SMEM)


def _read_lengths(len_ref, n):
    """(n,) int32 SMEM ref -> (n, 1) int32 vector (scalar reads + broadcast)."""
    return jnp.concatenate(
        [jnp.full((1, 1), len_ref[i], jnp.int32) for i in range(n)], axis=0)


# ----------------------------------------------------------------------------
# Pallas kernel 1: bidirectional packed-sequence LSTM recurrence (one layer)
# ----------------------------------------------------------------------------
def _bilstm_layer_kernel(len_ref, xpf_ref, xpb_ref, whf_ref, whb_ref,
                         outf_ref, outb_ref):
    # xpf/xpb: (T, N, 4*Hd) pre-projected inputs (x @ Wih.T + bih + bhh)
    # whf/whb: (Hd, 4*Hd)   recurrent weights, layout (in, out)
    # outf/outb: (T, N, Hd) per-direction hidden states (0 at padded steps)
    f32 = jnp.float32
    T, N, G = xpf_ref.shape
    Hd = G // 4
    lens = _read_lengths(len_ref, N)                       # (N, 1) int32

    def run_direction(xp_ref, wh_ref, out_ref, reverse):
        wh = wh_ref[...]                                   # (Hd, 4Hd), hoisted
        h = jnp.zeros((N, Hd), f32)
        c = jnp.zeros((N, Hd), f32)
        ts = range(T - 1, -1, -1) if reverse else range(T)
        for t in ts:                                       # tiny T: fully unrolled
            gates = xp_ref[t] + jnp.dot(h, wh, preferred_element_type=f32)
            i = jax.nn.sigmoid(gates[:, 0 * Hd:1 * Hd])
            f = jax.nn.sigmoid(gates[:, 1 * Hd:2 * Hd])
            g = jnp.tanh(gates[:, 2 * Hd:3 * Hd])
            o = jax.nn.sigmoid(gates[:, 3 * Hd:4 * Hd])
            c_new = f * c + i * g
            h_new = o * jnp.tanh(c_new)
            mask = t < lens                                # (N, 1) bool
            out_ref[t] = jnp.where(mask, h_new, 0.0)       # packed-seq: 0 at pad
            h = jnp.where(mask, h_new, h)                  # pad steps keep state
            c = jnp.where(mask, c_new, c)

    run_direction(xpf_ref, whf_ref, outf_ref, reverse=False)
    run_direction(xpb_ref, whb_ref, outb_ref, reverse=True)


def _bilstm_layer_impl(x, lengths, fwd_p, bwd_p):
    """One bidirectional LSTM layer with packed-sequence semantics.

    The input projection is hoisted out of the recurrence as one big matmul
    per direction; only the recurrent part runs inside the Pallas kernel.
    """
    N, T, _ = x.shape
    Wih_f, Whh_f, bih_f, bhh_f = fwd_p
    Wih_b, Whh_b, bih_b, bhh_b = bwd_p
    Hd = Whh_f.shape[1]
    xt = jnp.transpose(x, (1, 0, 2)).astype(jnp.float32)   # (T, N, in)
    xpf = jnp.dot(xt, Wih_f.T, precision='highest') + (bih_f + bhh_f)
    xpb = jnp.dot(xt, Wih_b.T, precision='highest') + (bih_b + bhh_b)
    outf, outb = pl.pallas_call(
        _bilstm_layer_kernel,
        out_shape=(jax.ShapeDtypeStruct((T, N, Hd), jnp.float32),
                   jax.ShapeDtypeStruct((T, N, Hd), jnp.float32)),
        in_specs=[_smem(), _vmem(), _vmem(), _vmem(), _vmem()],
        out_specs=(_vmem(), _vmem()),
    )(lengths.astype(jnp.int32), xpf, xpb,
      Whh_f.T.astype(jnp.float32), Whh_b.T.astype(jnp.float32))
    return jnp.transpose(jnp.concatenate([outf, outb], axis=-1), (1, 0, 2))


bilstm_layer = jax.jit(_bilstm_layer_impl)


def bi_lstm(x, lengths, layer_params):
    # TODO(synk): LSTM inter-layer dropout (train-only, p=0.3) is omitted;
    # this is the eval-mode forward pass.
    h = x
    for lp in layer_params:
        h = bilstm_layer(h, lengths, lp['fwd'], lp['bwd'])
    return h


def col_name_encode(col_emb_var, col_name_len, col_len_list, col_lstm_params,
                    lstm_fn):
    total_cols = col_emb_var.shape[0]
    name_hidden = lstm_fn(col_emb_var, col_name_len, col_lstm_params)
    name_out = name_hidden[jnp.arange(total_cols), col_name_len - 1]  # (tot, N_h)
    B = len(col_len_list)
    max_col = max(col_len_list)
    col_enc = jnp.zeros((B, max_col, N_H), jnp.float32)
    st = 0
    for b, cl in enumerate(col_len_list):
        col_enc = col_enc.at[b, :cl].set(name_out[st:st + cl])
        st += cl
    return col_enc


# ----------------------------------------------------------------------------
# Pallas kernel 2: attention + scoring heads
# ----------------------------------------------------------------------------
def _softmax_last(x):
    m = jnp.max(x, axis=-1, keepdims=True)
    e = jnp.exp(x - m)
    return e * pl.reciprocal(jnp.sum(e, axis=-1, keepdims=True), approx=True)


def cond_predictor_kernel(q_len_ref, col_len_ref,
                          q_enc_ref, col_enc_ref, col_emb_ref,
                          w_att_ref, b_att_ref, w_num_ref, b_num_ref,
                          w_col_ref, b_col_ref, w_op_ref, b_op_ref,
                          wcn_ref, bcn_ref, wco_ref, bco_ref, wop_ref, bop_ref,
                          out_ref):
    f32 = jnp.float32
    qe = q_enc_ref[...]            # (B, Q, H)
    ce = col_enc_ref[...]          # (B, C, H)
    cb = col_emb_ref[...]          # (B, 5, H)
    B, Q, H = qe.shape
    C = ce.shape[1]
    NC = cb.shape[1]
    neg = jnp.asarray(-100.0, f32)

    # Length masks from SMEM scalars.
    q_lens = _read_lengths(q_len_ref, B)                                # (B, 1)
    c_lens = _read_lengths(col_len_ref, B)                              # (B, 1)
    q_valid = jax.lax.broadcasted_iota(jnp.int32, (B, Q), 1) < q_lens   # (B, Q)
    c_valid = jax.lax.broadcasted_iota(jnp.int32, (B, C), 1) < c_lens   # (B, C)

    # Fused projection of q_enc for the three attention heads:
    # one (B*Q, H) @ (H, 3H) matmul instead of three (B*Q, H) @ (H, H).
    qa_all = (jnp.dot(qe.reshape(B * Q, H), w_att_ref[...],
                      preferred_element_type=f32) + b_att_ref[...]
              ).reshape(B, Q, 3 * H)
    qa_num = qa_all[:, :, 0 * H:1 * H]
    qa_col = qa_all[:, :, 1 * H:2 * H]
    qa_op = qa_all[:, :, 2 * H:3 * H]

    # ----- number-of-conditions head (col_num_score) -----
    att_num = jnp.einsum('bch,bqh->bcq', ce, qa_num, preferred_element_type=f32)
    att_num = jnp.where(c_valid[:, :, None] & q_valid[:, None, :], att_num, neg)
    p_num = _softmax_last(att_num)                                      # (B,C,Q)
    # sum_c sum_q p[b,c,q]*qe[b,q,h] == sum_q (sum_c p)[b,q]*qe[b,q,h]
    w_q = jnp.sum(p_num, axis=1)                                        # (B, Q)
    q_weighted_num = jnp.sum(w_q[:, :, None] * qe, axis=1)              # (B, H)
    h_num = jnp.tanh(jnp.dot(q_weighted_num, w_num_ref[...],
                             preferred_element_type=f32) + b_num_ref[...])
    num_sc = jnp.dot(h_num, wcn_ref[...],
                     preferred_element_type=f32) + bcn_ref[...]         # (B, 6)

    # ----- per-column head (col_score) -----
    att = jnp.einsum('bch,bqh->bcq', ce, qa_col, preferred_element_type=f32)
    att = jnp.where(q_valid[:, None, :], att, neg)
    p_col = _softmax_last(att)
    q_weighted = jnp.einsum('bcq,bqh->bch', p_col, qe,
                            preferred_element_type=f32)                 # (B,C,H)
    # K-concat fusion: tanh([qw, ce] @ [W_q; W_c] + b) == tanh(qw@W_q + ce@W_c + b)
    xc = jnp.concatenate([q_weighted, ce], axis=-1).reshape(B * C, 2 * H)
    h_col = jnp.tanh(jnp.dot(xc, w_col_ref[...],
                             preferred_element_type=f32) + b_col_ref[...])
    col_sc = (jnp.dot(h_col, wco_ref[...],
                      preferred_element_type=f32) + bco_ref[...]).reshape(B, C)
    col_sc = jnp.where(c_valid, col_sc, neg)                            # (B, C)

    # ----- operator head (op_score) -----
    att_op = jnp.einsum('bnh,bqh->bnq', cb, qa_op, preferred_element_type=f32)
    att_op = jnp.where(q_valid[:, None, :], att_op, neg)
    p_op = _softmax_last(att_op)
    q_weighted_op = jnp.einsum('bnq,bqh->bnh', p_op, qe,
                               preferred_element_type=f32)              # (B,5,H)
    xo = jnp.concatenate([q_weighted_op, cb], axis=-1).reshape(B * NC, 2 * H)
    h_op = jnp.tanh(jnp.dot(xo, w_op_ref[...],
                            preferred_element_type=f32) + b_op_ref[...])
    op_sc = jnp.dot(h_op, wop_ref[...],
                    preferred_element_type=f32) + bop_ref[...]          # (B*5,12)

    # Flatten op scores to (B, 5*12) with static row slices + lane concats
    # (avoids a sublane->lane reshape inside the kernel).
    op_rows = []
    for b in range(B):
        op_rows.append(jnp.concatenate(
            [op_sc[b * NC + n:b * NC + n + 1, :] for n in range(NC)], axis=-1))
    op_flat = jnp.concatenate(op_rows, axis=0)                          # (B, 60)

    # Lane-dense single output slab: [num | col | op | zero-pad] -> (B, 128k)
    pad = out_ref.shape[1] - (6 + C + NC * 12)
    pieces = [num_sc, col_sc, op_flat]
    if pad > 0:
        pieces.append(jnp.zeros((B, pad), jnp.float32))
    out_ref[...] = jnp.concatenate(pieces, axis=-1)


def _cond_predictor_scores_impl(q_enc, col_enc, col_emb5, q_len, col_len, head):
    B, Q, H = q_enc.shape
    C = col_enc.shape[1]
    NC = col_emb5.shape[1]
    n_used = 6 + C + NC * 12
    out_w = max(128, ((n_used + 127) // 128) * 128)   # lane-dense output slab

    W8, b8 = head['W8'], head['b8']
    # Fused weight layouts, all (in, out):
    W_att = jnp.concatenate([W8[0], W8[2], W8[5]], axis=1)              # (H, 3H)
    b_att = jnp.concatenate([b8[0], b8[2], b8[5]], axis=0).reshape(1, 3 * H)
    W_num, b_num = W8[1], b8[1].reshape(1, H)
    W_col = jnp.concatenate([W8[3], W8[4]], axis=0)                     # (2H, H)
    b_col = (b8[3] + b8[4]).reshape(1, H)
    W_op = jnp.concatenate([W8[6], W8[7]], axis=0)                      # (2H, H)
    b_op = (b8[6] + b8[7]).reshape(1, H)

    args = (q_len.astype(jnp.int32), col_len.astype(jnp.int32),
            q_enc.astype(jnp.float32), col_enc.astype(jnp.float32),
            col_emb5.astype(jnp.float32),
            W_att, b_att, W_num, b_num, W_col, b_col, W_op, b_op,
            head['Wcn'], head['bcn'], head['Wco'], head['bco'],
            head['Wop'], head['bop'])
    in_specs = [_smem(), _smem()] + [_vmem() for _ in range(len(args) - 2)]

    slab = pl.pallas_call(
        cond_predictor_kernel,
        out_shape=jax.ShapeDtypeStruct((B, out_w), jnp.float32),
        in_specs=in_specs,
        out_specs=_vmem(),
    )(*args)

    col_num_score = slab[:, :6]
    col_score = slab[:, 6:6 + C]
    op_score = slab[:, 6 + C:6 + C + NC * 12].reshape(B, NC, 12)
    return col_num_score, col_score, op_score


cond_predictor_scores = jax.jit(_cond_predictor_scores_impl)


# ----------------------------------------------------------------------------
# Pure-JAX reference bi-LSTM (lax.scan) for validating the Pallas recurrence
# ----------------------------------------------------------------------------
def _lstm_dir_ref(x, lengths, Wih, Whh, bih, bhh, reverse):
    N, T, _ = x.shape
    Hd = Whh.shape[1]
    h0 = jnp.zeros((N, Hd), jnp.float32)
    c0 = jnp.zeros((N, Hd), jnp.float32)
    ts = jnp.arange(T)
    if reverse:
        ts = ts[::-1]

    def step(carry, t):
        h, c = carry
        xt = jax.lax.dynamic_index_in_dim(x, t, axis=1, keepdims=False)
        gates = (jnp.dot(xt, Wih.T, precision='highest')
                 + jnp.dot(h, Whh.T, precision='highest') + bih + bhh)
        i, f, g, o = jnp.split(gates, 4, axis=-1)
        i = jax.nn.sigmoid(i)
        f = jax.nn.sigmoid(f)
        g = jnp.tanh(g)
        o = jax.nn.sigmoid(o)
        c_new = f * c + i * g
        h_new = o * jnp.tanh(c_new)
        mask = (t < lengths)[:, None]
        h = jnp.where(mask, h_new, h)
        c = jnp.where(mask, c_new, c)
        out = jnp.where(mask, h, 0.0)
        return (h, c), out

    _, outs = jax.lax.scan(step, (h0, c0), ts)
    outs = jnp.transpose(outs, (1, 0, 2))
    if reverse:
        outs = outs[:, ::-1, :]
    return outs


def _bi_lstm_ref(x, lengths, layer_params):
    h = x
    for lp in layer_params:
        fwd = _lstm_dir_ref(h, lengths, *lp['fwd'], reverse=False)
        bwd = _lstm_dir_ref(h, lengths, *lp['bwd'], reverse=True)
        h = jnp.concatenate([fwd, bwd], axis=-1)
    return h


# ----------------------------------------------------------------------------
# NumPy reference of the scoring heads
# ----------------------------------------------------------------------------
def _reference_scores(q_enc, col_enc, col_emb5, q_len, col_len, p):
    qe = np.asarray(q_enc); ce = np.asarray(col_enc); cb = np.asarray(col_emb5)
    B, Q, H = qe.shape
    C = ce.shape[1]
    q_valid = np.arange(Q)[None, None, :] < np.asarray(q_len)[:, None, None]
    c_valid = np.arange(C)[None, :, None] < np.asarray(col_len)[:, None, None]
    W8 = np.asarray(p['W8']); b8 = np.asarray(p['b8'])

    def lin(x, i):
        return x @ W8[i] + b8[i]

    def softmax(x):
        m = x.max(-1, keepdims=True)
        e = np.exp(x - m)
        return e / e.sum(-1, keepdims=True)

    att_num = np.einsum('bch,bqh->bcq', ce, lin(qe, 0))
    att_num = np.where(c_valid & q_valid, att_num, -100.0)
    p_num = softmax(att_num)
    qwn = np.einsum('bcq,bqh->bh', p_num, qe)
    num_score = np.tanh(lin(qwn, 1)) @ np.asarray(p['Wcn']) + np.asarray(p['bcn'])

    att = np.einsum('bch,bqh->bcq', ce, lin(qe, 2))
    att = np.where(q_valid, att, -100.0)
    pc = softmax(att)
    qw = np.einsum('bcq,bqh->bch', pc, qe)
    h = np.tanh(lin(qw, 3) + lin(ce, 4))
    col_score = (h @ np.asarray(p['Wco']) + np.asarray(p['bco']))[..., 0]
    col_score = np.where(c_valid[:, :, 0], col_score, -100.0)

    att_op = np.einsum('bnh,bqh->bnq', cb, lin(qe, 5))
    att_op = np.where(q_valid, att_op, -100.0)
    po = softmax(att_op)
    qwo = np.einsum('bnq,bqh->bnh', po, qe)
    ho = np.tanh(lin(qwo, 6) + lin(cb, 7))
    op_score = ho @ np.asarray(p['Wop']) + np.asarray(p['bop'])
    return num_score, col_score, op_score


# ----------------------------------------------------------------------------
# Deterministic parameter initialization (synthetic weights)
# ----------------------------------------------------------------------------
def init_params(key):
    keys = iter(jax.random.split(key, 256))

    def u(shape, scale=0.1):
        return jax.random.uniform(next(keys), shape, jnp.float32, -scale, scale)

    Hd = N_H // 2

    def lstm_params(first_in):
        layers = []
        for layer in range(N_DEPTH):
            in_dim = first_in if layer == 0 else N_H
            layers.append({
                'fwd': (u((4 * Hd, in_dim)), u((4 * Hd, Hd)),
                        u((4 * Hd,)), u((4 * Hd,))),
                'bwd': (u((4 * Hd, in_dim)), u((4 * Hd, Hd)),
                        u((4 * Hd,)), u((4 * Hd,))),
            })
        return layers

    q_lstm = lstm_params(N_WORD)
    col_lstm = lstm_params(N_WORD)

    # 8 hidden->hidden linears, layout (in, out):
    # 0 q_num_att, 1 col_num_out_q, 2 q_att, 3 col_out_q, 4 col_out_c,
    # 5 op_att, 6 op_out_q, 7 op_out_c
    W8 = jnp.stack([u((N_H, N_H)) for _ in range(8)])
    b8 = jnp.stack([u((N_H,)) for _ in range(8)])
    head = {
        'W8': W8, 'b8': b8,
        'Wcn': u((N_H, 6)),  'bcn': u((6,)).reshape(1, 6),
        'Wco': u((N_H, 1)),  'bco': u((1,)).reshape(1, 1),
        'Wop': u((N_H, 12)), 'bop': u((12,)).reshape(1, 12),
    }
    return q_lstm, col_lstm, head


# ----------------------------------------------------------------------------
if __name__ == "__main__":
    key = jax.random.PRNGKey(0)
    kq, kc, kp = jax.random.split(key, 3)

    B = 2
    q_len_list = [8, 6]
    col_len_list = [4, 3]
    col_name_len_list = [2, 3, 1, 2, 3, 2, 1]   # tokens per column name
    max_q = max(q_len_list)
    max_name = max(col_name_len_list)
    total_cols = sum(col_len_list)
    # gt_cond: list (per batch) of (col_idx, op, value) tuples
    # TODO(synk): the gt_cond=None branch (argmax(col_num) + argsort(col_score)
    # column selection) is a host-side, data-dependent ragged gather and is not
    # implemented here; only the ground-truth-conditioned path is.
    gt_cond = [[(1, 0, 'a'), (3, 2, 'b')], [(2, 1, 'c')]]

    q_emb_var = jax.random.normal(kq, (B, max_q, N_WORD), jnp.float32)
    col_emb_var = jax.random.normal(kc, (total_cols, max_name, N_WORD),
                                    jnp.float32)

    q_lstm_p, col_lstm_p, head_p = init_params(kp)

    q_len = jnp.array(q_len_list, jnp.int32)
    col_len = jnp.array(col_len_list, jnp.int32)
    name_len = jnp.array(col_name_len_list, jnp.int32)

    # Encoders: Pallas bi-LSTM recurrence (input projections hoisted outside)
    q_enc = bi_lstm(q_emb_var, q_len, q_lstm_p)                  # (B, max_q, N_h)
    col_enc = col_name_encode(col_emb_var, name_len, col_len_list,
                              col_lstm_p, bi_lstm)
    q_enc, col_enc = jax.block_until_ready((q_enc, col_enc))

    # Validate the Pallas LSTM recurrence against the lax.scan reference.
    q_enc_ref = _bi_lstm_ref(q_emb_var, q_len, q_lstm_p)
    col_enc_ref = col_name_encode(col_emb_var, name_len, col_len_list,
                                  col_lstm_p, _bi_lstm_ref)
    np.testing.assert_allclose(np.asarray(q_enc), np.asarray(q_enc_ref),
                               rtol=2e-3, atol=2e-3)
    np.testing.assert_allclose(np.asarray(col_enc), np.asarray(col_enc_ref),
                               rtol=2e-3, atol=2e-3)

    # Chosen-column embeddings (gt_cond branch), padded with column 0 to 5 slots
    chosen = [[c[0] for c in one] for one in gt_cond]
    col_emb5 = jnp.stack([
        col_enc[b, jnp.array(chosen[b] + [0] * (NUM_CHOSEN - len(chosen[b])),
                             jnp.int32)]
        for b in range(B)])

    outs = cond_predictor_scores(q_enc, col_enc, col_emb5, q_len, col_len,
                                 head_p)
    col_num_score, col_score, op_score = jax.block_until_ready(outs)

    ref = _reference_scores(q_enc, col_enc, col_emb5,
                            np.array(q_len_list), np.array(col_len_list),
                            head_p)
    # 5e-3 tolerance leaves headroom for the approx-reciprocal softmax (EUP).
    for got, want in zip((col_num_score, col_score, op_score), ref):
        np.testing.assert_allclose(np.asarray(got), np.asarray(want),
                                   rtol=5e-3, atol=5e-3)

    assert col_num_score.shape == (B, 6)
    assert col_score.shape == (B, max(col_len_list))
    assert op_score.shape == (B, NUM_CHOSEN, 12)
    print("KERNEL_OK")
</pallas_src>

<mosaic_0001>
module attributes {stable_mosaic.version = 11 : i64} {
  func.func @_bilstm_layer_kernel(%arg0: memref<2xi32, #tpu.memory_space<smem>>, %arg1: memref<8x2x64xf32, #tpu.memory_space<vmem>>, %arg2: memref<8x2x64xf32, #tpu.memory_space<vmem>>, %arg3: memref<16x64xf32, #tpu.memory_space<vmem>>, %arg4: memref<16x64xf32, #tpu.memory_space<vmem>>, %arg5: memref<8x2x16xf32, #tpu.memory_space<vmem>>, %arg6: memref<8x2x16xf32, #tpu.memory_space<vmem>>) attributes {dimension_semantics = [], scalar_prefetch = 0 : i64, scratch_operands = 0 : i64, tpu.core_type = #tpu.core_type<tc>} {
    %c0 = arith.constant 0 : index
    %0 = memref.load %arg0[%c0] : memref<2xi32, #tpu.memory_space<smem>>
    %1 = vector.broadcast %0 : i32 to vector<1x1xi32>
    %c1 = arith.constant 1 : index
    %2 = memref.load %arg0[%c1] : memref<2xi32, #tpu.memory_space<smem>>
    %3 = vector.broadcast %2 : i32 to vector<1x1xi32>
    %4 = tpu.concatenate %1, %3 in 0 : vector<1x1xi32>, vector<1x1xi32> -> vector<2x1xi32>
    %c0_0 = arith.constant 0 : index
    %c0_1 = arith.constant 0 : index
    %5 = vector.load %arg3[%c0_0, %c0_1] : memref<16x64xf32, #tpu.memory_space<vmem>>, vector<16x64xf32>
    %cst = arith.constant 0.000000e+00 : f32
    %6 = vector.broadcast %cst : f32 to vector<2x16xf32>
    %cst_2 = arith.constant 0.000000e+00 : f32
    %7 = vector.broadcast %cst_2 : f32 to vector<2x16xf32>
    %c0_3 = arith.constant 0 : index
    %c0_4 = arith.constant 0 : index
    %c0_5 = arith.constant 0 : index
    %8 = vector.load %arg1[%c0_3, %c0_4, %c0_5] : memref<8x2x64xf32, #tpu.memory_space<vmem>>, vector<1x2x64xf32>
    %9 = vector.shape_cast %8 : vector<1x2x64xf32> to vector<2x64xf32>
    %cst_6 = arith.constant dense<0.000000e+00> : vector<2x64xf32>
    %10 = tpu.matmul %6, %5, %cst_6 {dimension_numbers = #tpu.dot_dimension_numbers<[1], [0], [0], [1], [0, 0, 1, 1], [], []>} : vector<2x16xf32>, vector<16x64xf32>, vector<2x64xf32> -> vector<2x64xf32>
    %11 = arith.addf %9, %10 : vector<2x64xf32>
    %12 = vector.extract_strided_slice %11 {offsets = [0, 0], sizes = [2, 16], strides = [1, 1]} : vector<2x64xf32> to vector<2x16xf32>
    %13 = arith.negf %12 : vector<2x16xf32>
    %14 = math.exp %13 : vector<2x16xf32>
    %cst_7 = arith.constant 1.000000e+00 : f32
    %15 = vector.broadcast %cst_7 : f32 to vector<2x16xf32>
    %16 = arith.addf %15, %14 : vector<2x16xf32>
    %17 = arith.divf %15, %16 : vector<2x16xf32>
    %18 = vector.extract_strided_slice %11 {offsets = [0, 16], sizes = [2, 16], strides = [1, 1]} : vector<2x64xf32> to vector<2x16xf32>
    %19 = arith.negf %18 : vector<2x16xf32>
    %20 = math.exp %19 : vector<2x16xf32>
    %cst_8 = arith.constant 1.000000e+00 : f32
    %21 = vector.broadcast %cst_8 : f32 to vector<2x16xf32>
    %22 = arith.addf %21, %20 : vector<2x16xf32>
    %23 = arith.divf %21, %22 : vector<2x16xf32>
    %24 = vector.extract_strided_slice %11 {offsets = [0, 32], sizes = [2, 16], strides = [1, 1]} : vector<2x64xf32> to vector<2x16xf32>
    %25 = math.tanh %24 : vector<2x16xf32>
    %26 = vector.extract_strided_slice %11 {offsets = [0, 48], sizes = [2, 16], strides = [1, 1]} : vector<2x64xf32> to vector<2x16xf32>
    %27 = arith.negf %26 : vector<2x16xf32>
    %28 = math.exp %27 : vector<2x16xf32>
    %cst_9 = arith.constant 1.000000e+00 : f32
    %29 = vector.broadcast %cst_9 : f32 to vector<2x16xf32>
    %30 = arith.addf %29, %28 : vector<2x16xf32>
    %31 = arith.divf %29, %30 : vector<2x16xf32>
    %32 = arith.mulf %23, %7 : vector<2x16xf32>
    %33 = arith.mulf %17, %25 : vector<2x16xf32>
    %34 = arith.addf %32, %33 : vector<2x16xf32>
    %35 = math.tanh %34 : vector<2x16xf32>
    %36 = arith.mulf %31, %35 : vector<2x16xf32>
    %c0_i32 = arith.constant 0 : i32
    %37 = vector.broadcast %c0_i32 : i32 to vector<2x1xi32>
    %38 = arith.cmpi sgt, %4, %37 : vector<2x1xi32>
    %cst_10 = arith.constant 0.000000e+00 : f32
    %39 = vector.shape_cast %38 : vector<2x1xi1> to vector<2x1xi1>
    %40 = vector.broadcast %39 : vector<2x1xi1> to vector<2x16xi1>
    %41 = vector.broadcast %cst_10 : f32 to vector<2x16xf32>
    %42 = arith.select %40, %36, %41 : vector<2x16xi1>, vector<2x16xf32>
    %c0_11 = arith.constant 0 : index
    %c0_12 = arith.constant 0 : index
    %c0_13 = arith.constant 0 : index
    %43 = vector.load %arg5[%c0_11, %c0_12, %c0_13] : memref<8x2x16xf32, #tpu.memory_space<vmem>>, vector<1x2x16xf32>
    %44 = vector.shape_cast %43 : vector<1x2x16xf32> to vector<2x16xf32>
    %45 = vector.shape_cast %42 : vector<2x16xf32> to vector<1x2x16xf32>
    tpu.vector_store %arg5[%c0_11, %c0_12, %c0_13], %45 {strides = array<i32>} : memref<8x2x16xf32, #tpu.memory_space<vmem>>, vector<1x2x16xf32>,
    %46 = vector.shape_cast %38 : vector<2x1xi1> to vector<2x1xi1>
    %47 = vector.broadcast %46 : vector<2x1xi1> to vector<2x16xi1>
    %48 = arith.select %47, %36, %6 : vector<2x16xi1>, vector<2x16xf32>
    %49 = vector.shape_cast %38 : vector<2x1xi1> to vector<2x1xi1>
    %50 = vector.broadcast %49 : vector<2x1xi1> to vector<2x16xi1>
    %51 = arith.select %50, %34, %7 : vector<2x16xi1>, vector<2x16xf32>
    %c1_14 = arith.constant 1 : index
    %c0_15 = arith.constant 0 : index
    %c0_16 = arith.constant 0 : index
    %52 = vector.load %arg1[%c1_14, %c0_15, %c0_16] : memref<8x2x64xf32, #tpu.memory_space<vmem>>, vector<1x2x64xf32>
    %53 = vector.shape_cast %52 : vector<1x2x64xf32> to vector<2x64xf32>
    %cst_17 = arith.constant dense<0.000000e+00> : vector<2x64xf32>
    %54 = tpu.matmul %48, %5, %cst_17 {dimension_numbers = #tpu.dot_dimension_numbers<[1], [0], [0], [1], [0, 0, 1, 1], [], []>} : vector<2x16xf32>, vector<16x64xf32>, vector<2x64xf32> -> vector<2x64xf32>
    %55 = arith.addf %53, %54 : vector<2x64xf32>
    %56 = vector.extract_strided_slice %55 {offsets = [0, 0], sizes = [2, 16], strides = [1, 1]} : vector<2x64xf32> to vector<2x16xf32>
    %57 = arith.negf %56 : vector<2x16xf32>
    %58 = math.exp %57 : vector<2x16xf32>
    %cst_18 = arith.constant 1.000000e+00 : f32
    %59 = vector.broadcast %cst_18 : f32 to vector<2x16xf32>
    %60 = arith.addf %59, %58 : vector<2x16xf32>
    %61 = arith.divf %59, %60 : vector<2x16xf32>
    %62 = vector.extract_strided_slice %55 {offsets = [0, 16], sizes = [2, 16], strides = [1, 1]} : vector<2x64xf32> to vector<2x16xf32>
    %63 = arith.negf %62 : vector<2x16xf32>
    %64 = math.exp %63 : vector<2x16xf32>
    %cst_19 = arith.constant 1.000000e+00 : f32
    %65 = vector.broadcast %cst_19 : f32 to vector<2x16xf32>
    %66 = arith.addf %65, %64 : vector<2x16xf32>
    %67 = arith.divf %65, %66 : vector<2x16xf32>
    %68 = vector.extract_strided_slice %55 {offsets = [0, 32], sizes = [2, 16], strides = [1, 1]} : vector<2x64xf32> to vector<2x16xf32>
    %69 = math.tanh %68 : vector<2x16xf32>
    %70 = vector.extract_strided_slice %55 {offsets = [0, 48], sizes = [2, 16], strides = [1, 1]} : vector<2x64xf32> to vector<2x16xf32>
    %71 = arith.negf %70 : vector<2x16xf32>
    %72 = math.exp %71 : vector<2x16xf32>
    %cst_20 = arith.constant 1.000000e+00 : f32
    %73 = vector.broadcast %cst_20 : f32 to vector<2x16xf32>
    %74 = arith.addf %73, %72 : vector<2x16xf32>
    %75 = arith.divf %73, %74 : vector<2x16xf32>
    %76 = arith.mulf %67, %51 : vector<2x16xf32>
    %77 = arith.mulf %61, %69 : vector<2x16xf32>
    %78 = arith.addf %76, %77 : vector<2x16xf32>
    %79 = math.tanh %78 : vector<2x16xf32>
    %80 = arith.mulf %75, %79 : vector<2x16xf32>
    %c1_i32 = arith.constant 1 : i32
    %81 = vector.broadcast %c1_i32 : i32 to vector<2x1xi32>
    %82 = arith.cmpi sgt, %4, %81 : vector<2x1xi32>
    %cst_21 = arith.constant 0.000000e+00 : f32
    %83 = vector.shape_cast %82 : vector<2x1xi1> to vector<2x1xi1>
    %84 = vector.broadcast %83 : vector<2x1xi1> to vector<2x16xi1>
    %85 = vector.broadcast %cst_21 : f32 to vector<2x16xf32>
    %86 = arith.select %84, %80, %85 : vector<2x16xi1>, vector<2x16xf32>
    %c1_22 = arith.constant 1 : index
    %c0_23 = arith.constant 0 : index
    %c0_24 = arith.constant 0 : index
    %87 = vector.load %arg5[%c1_22, %c0_23, %c0_24] : memref<8x2x16xf32, #tpu.memory_space<vmem>>, vector<1x2x16xf32>
    %88 = vector.shape_cast %87 : vector<1x2x16xf32> to vector<2x16xf32>
    %89 = vector.shape_cast %86 : vector<2x16xf32> to vector<1x2x16xf32>
    tpu.vector_store %arg5[%c1_22, %c0_23, %c0_24], %89 {strides = array<i32>} : memref<8x2x16xf32, #tpu.memory_space<vmem>>, vector<1x2x16xf32>,
    %90 = vector.shape_cast %82 : vector<2x1xi1> to vector<2x1xi1>
    %91 = vector.broadcast %90 : vector<2x1xi1> to vector<2x16xi1>
    %92 = arith.select %91, %80, %48 : vector<2x16xi1>, vector<2x16xf32>
    %93 = vector.shape_cast %82 : vector<2x1xi1> to vector<2x1xi1>
    %94 = vector.broadcast %93 : vector<2x1xi1> to vector<2x16xi1>
    %95 = arith.select %94, %78, %51 : vector<2x16xi1>, vector<2x16xf32>
    %c2 = arith.constant 2 : index
    %c0_25 = arith.constant 0 : index
    %c0_26 = arith.constant 0 : index
    %96 = vector.load %arg1[%c2, %c0_25, %c0_26] : memref<8x2x64xf32, #tpu.memory_space<vmem>>, vector<1x2x64xf32>
    %97 = vector.shape_cast %96 : vector<1x2x64xf32> to vector<2x64xf32>
    %cst_27 = arith.constant dense<0.000000e+00> : vector<2x64xf32>
    %98 = tpu.matmul %92, %5, %cst_27 {dimension_numbers = #tpu.dot_dimension_numbers<[1], [0], [0], [1], [0, 0, 1, 1], [], []>} : vector<2x16xf32>, vector<16x64xf32>, vector<2x64xf32> -> vector<2x64xf32>
    %99 = arith.addf %97, %98 : vector<2x64xf32>
    %100 = vector.extract_strided_slice %99 {offsets = [0, 0], sizes = [2, 16], strides = [1, 1]} : vector<2x64xf32> to vector<2x16xf32>
    %101 = arith.negf %100 : vector<2x16xf32>
    %102 = math.exp %101 : vector<2x16xf32>
    %cst_28 = arith.constant 1.000000e+00 : f32
    %103 = vector.broadcast %cst_28 : f32 to vector<2x16xf32>
    %104 = arith.addf %103, %102 : vector<2x16xf32>
    %105 = arith.divf %103, %104 : vector<2x16xf32>
    %106 = vector.extract_strided_slice %99 {offsets = [0, 16], sizes = [2, 16], strides = [1, 1]} : vector<2x64xf32> to vector<2x16xf32>
    %107 = arith.negf %106 : vector<2x16xf32>
    %108 = math.exp %107 : vector<2x16xf32>
    %cst_29 = arith.constant 1.000000e+00 : f32
    %109 = vector.broadcast %cst_29 : f32 to vector<2x16xf32>
    %110 = arith.addf %109, %108 : vector<2x16xf32>
    %111 = arith.divf %109, %110 : vector<2x16xf32>
    %112 = vector.extract_strided_slice %99 {offsets = [0, 32], sizes = [2, 16], strides = [1, 1]} : vector<2x64xf32> to vector<2x16xf32>
    %113 = math.tanh %112 : vector<2x16xf32>
    %114 = vector.extract_strided_slice %99 {offsets = [0, 48], sizes = [2, 16], strides = [1, 1]} : vector<2x64xf32> to vector<2x16xf32>
    %115 = arith.negf %114 : vector<2x16xf32>
    %116 = math.exp %115 : vector<2x16xf32>
    %cst_30 = arith.constant 1.000000e+00 : f32
    %117 = vector.broadcast %cst_30 : f32 to vector<2x16xf32>
    %118 = arith.addf %117, %116 : vector<2x16xf32>
    %119 = arith.divf %117, %118 : vector<2x16xf32>
    %120 = arith.mulf %111, %95 : vector<2x16xf32>
    %121 = arith.mulf %105, %113 : vector<2x16xf32>
    %122 = arith.addf %120, %121 : vector<2x16xf32>
    %123 = math.tanh %122 : vector<2x16xf32>
    %124 = arith.mulf %119, %123 : vector<2x16xf32>
    %c2_i32 = arith.constant 2 : i32
    %125 = vector.broadcast %c2_i32 : i32 to vector<2x1xi32>
    %126 = arith.cmpi sgt, %4, %125 : vector<2x1xi32>
    %cst_31 = arith.constant 0.000000e+00 : f32
    %127 = vector.shape_cast %126 : vector<2x1xi1> to vector<2x1xi1>
    %128 = vector.broadcast %127 : vector<2x1xi1> to vector<2x16xi1>
    %129 = vector.broadcast %cst_31 : f32 to vector<2x16xf32>
    %130 = arith.select %128, %124, %129 : vector<2x16xi1>, vector<2x16xf32>
    %c2_32 = arith.constant 2 : index
    %c0_33 = arith.constant 0 : index
    %c0_34 = arith.constant 0 : index
    %131 = vector.load %arg5[%c2_32, %c0_33, %c0_34] : memref<8x2x16xf32, #tpu.memory_space<vmem>>, vector<1x2x16xf32>
    %132 = vector.shape_cast %131 : vector<1x2x16xf32> to vector<2x16xf32>
    %133 = vector.shape_cast %130 : vector<2x16xf32> to vector<1x2x16xf32>
    tpu.vector_store %arg5[%c2_32, %c0_33, %c0_34], %133 {strides = array<i32>} : memref<8x2x16xf32, #tpu.memory_space<vmem>>, vector<1x2x16xf32>,
    %134 = vector.shape_cast %126 : vector<2x1xi1> to vector<2x1xi1>
    %135 = vector.broadcast %134 : vector<2x1xi1> to vector<2x16xi1>
    %136 = arith.select %135, %124, %92 : vector<2x16xi1>, vector<2x16xf32>
    %137 = vector.shape_cast %126 : vector<2x1xi1> to vector<2x1xi1>
    %138 = vector.broadcast %137 : vector<2x1xi1> to vector<2x16xi1>
    %139 = arith.select %138, %122, %95 : vector<2x16xi1>, vector<2x16xf32>
    %c3 = arith.constant 3 : index
    %c0_35 = arith.constant 0 : index
    %c0_36 = arith.constant 0 : index
    %140 = vector.load %arg1[%c3, %c0_35, %c0_36] : memref<8x2x64xf32, #tpu.memory_space<vmem>>, vector<1x2x64xf32>
    %141 = vector.shape_cast %140 : vector<1x2x64xf32> to vector<2x64xf32>
    %cst_37 = arith.constant dense<0.000000e+00> : vector<2x64xf32>
    %142 = tpu.matmul %136, %5, %cst_37 {dimension_numbers = #tpu.dot_dimension_numbers<[1], [0], [0], [1], [0, 0, 1, 1], [], []>} : vector<2x16xf32>, vector<16x64xf32>, vector<2x64xf32> -> vector<2x64xf32>
    %143 = arith.addf %141, %142 : vector<2x64xf32>
    %144 = vector.extract_strided_slice %143 {offsets = [0, 0], sizes = [2, 16], strides = [1, 1]} : vector<2x64xf32> to vector<2x16xf32>
    %145 = arith.negf %144 : vector<2x16xf32>
    %146 = math.exp %145 : vector<2x16xf32>
    %cst_38 = arith.constant 1.000000e+00 : f32
    %147 = vector.broadcast %cst_38 : f32 to vector<2x16xf32>
    %148 = arith.addf %147, %146 : vector<2x16xf32>
    %149 = arith.divf %147, %148 : vector<2x16xf32>
    %150 = vector.extract_strided_slice %143 {offsets = [0, 16], sizes = [2, 16], strides = [1, 1]} : vector<2x64xf32> to vector<2x16xf32>
    %151 = arith.negf %150 : vector<2x16xf32>
    %152 = math.exp %151 : vector<2x16xf32>
    %cst_39 = arith.constant 1.000000e+00 : f32
    %153 = vector.broadcast %cst_39 : f32 to vector<2x16xf32>
    %154 = arith.addf %153, %152 : vector<2x16xf32>
    %155 = arith.divf %153, %154 : vector<2x16xf32>
    %156 = vector.extract_strided_slice %143 {offsets = [0, 32], sizes = [2, 16], strides = [1, 1]} : vector<2x64xf32> to vector<2x16xf32>
    %157 = math.tanh %156 : vector<2x16xf32>
    %158 = vector.extract_strided_slice %143 {offsets = [0, 48], sizes = [2, 16], strides = [1, 1]} : vector<2x64xf32> to vector<2x16xf32>
    %159 = arith.negf %158 : vector<2x16xf32>
    %160 = math.exp %159 : vector<2x16xf32>
    %cst_40 = arith.constant 1.000000e+00 : f32
    %161 = vector.broadcast %cst_40 : f32 to vector<2x16xf32>
    %162 = arith.addf %161, %160 : vector<2x16xf32>
    %163 = arith.divf %161, %162 : vector<2x16xf32>
    %164 = arith.mulf %155, %139 : vector<2x16xf32>
    %165 = arith.mulf %149, %157 : vector<2x16xf32>
    %166 = arith.addf %164, %165 : vector<2x16xf32>
    %167 = math.tanh %166 : vector<2x16xf32>
    %168 = arith.mulf %163, %167 : vector<2x16xf32>
    %c3_i32 = arith.constant 3 : i32
    %169 = vector.broadcast %c3_i32 : i32 to vector<2x1xi32>
    %170 = arith.cmpi sgt, %4, %169 : vector<2x1xi32>
    %cst_41 = arith.constant 0.000000e+00 : f32
    %171 = vector.shape_cast %170 : vector<2x1xi1> to vector<2x1xi1>
    %172 = vector.broadcast %171 : vector<2x1xi1> to vector<2x16xi1>
    %173 = vector.broadcast %cst_41 : f32 to vector<2x16xf32>
    %174 = arith.select %172, %168, %173 : vector<2x16xi1>, vector<2x16xf32>
    %c3_42 = arith.constant 3 : index
    %c0_43 = arith.constant 0 : index
    %c0_44 = arith.constant 0 : index
    %175 = vector.load %arg5[%c3_42, %c0_43, %c0_44] : memref<8x2x16xf32, #tpu.memory_space<vmem>>, vector<1x2x16xf32>
    %176 = vector.shape_cast %175 : vector<1x2x16xf32> to vector<2x16xf32>
    %177 = vector.shape_cast %174 : vector<2x16xf32> to vector<1x2x16xf32>
    tpu.vector_store %arg5[%c3_42, %c0_43, %c0_44], %177 {strides = array<i32>} : memref<8x2x16xf32, #tpu.memory_space<vmem>>, vector<1x2x16xf32>,
    %178 = vector.shape_cast %170 : vector<2x1xi1> to vector<2x1xi1>
    %179 = vector.broadcast %178 : vector<2x1xi1> to vector<2x16xi1>
    %180 = arith.select %179, %168, %136 : vector<2x16xi1>, vector<2x16xf32>
    %181 = vector.shape_cast %170 : vector<2x1xi1> to vector<2x1xi1>
    %182 = vector.broadcast %181 : vector<2x1xi1> to vector<2x16xi1>
    %183 = arith.select %182, %166, %139 : vector<2x16xi1>, vector<2x16xf32>
    %c4 = arith.constant 4 : index
    %c0_45 = arith.constant 0 : index
    %c0_46 = arith.constant 0 : index
    %184 = vector.load %arg1[%c4, %c0_45, %c0_46] : memref<8x2x64xf32, #tpu.memory_space<vmem>>, vector<1x2x64xf32>
    %185 = vector.shape_cast %184 : vector<1x2x64xf32> to vector<2x64xf32>
    %cst_47 = arith.constant dense<0.000000e+00> : vector<2x64xf32>
    %186 = tpu.matmul %180, %5, %cst_47 {dimension_numbers = #tpu.dot_dimension_numbers<[1], [0], [0], [1], [0, 0, 1, 1], [], []>} : vector<2x16xf32>, vector<16x64xf32>, vector<2x64xf32> -> vector<2x64xf32>
    %187 = arith.addf %185, %186 : vector<2x64xf32>
    %188 = vector.extract_strided_slice %187 {offsets = [0, 0], sizes = [2, 16], strides = [1, 1]} : vector<2x64xf32> to vector<2x16xf32>
    %189 = arith.negf %188 : vector<2x16xf32>
    %190 = math.exp %189 : vector<2x16xf32>
    %cst_48 = arith.constant 1.000000e+00 : f32
    %191 = vector.broadcast %cst_48 : f32 to vector<2x16xf32>
    %192 = arith.addf %191, %190 : vector<2x16xf32>
    %193 = arith.divf %191, %192 : vector<2x16xf32>
    %194 = vector.extract_strided_slice %187 {offsets = [0, 16], sizes = [2, 16], strides = [1, 1]} : vector<2x64xf32> to vector<2x16xf32>
    %195 = arith.negf %194 : vector<2x16xf32>
    %196 = math.exp %195 : vector<2x16xf32>
    %cst_49 = arith.constant 1.000000e+00 : f32
    %197 = vector.broadcast %cst_49 : f32 to vector<2x16xf32>
    %198 = arith.addf %197, %196 : vector<2x16xf32>
    %199 = arith.divf %197, %198 : vector<2x16xf32>
    %200 = vector.extract_strided_slice %187 {offsets = [0, 32], sizes = [2, 16], strides = [1, 1]} : vector<2x64xf32> to vector<2x16xf32>
    %201 = math.tanh %200 : vector<2x16xf32>
    %202 = vector.extract_strided_slice %187 {offsets = [0, 48], sizes = [2, 16], strides = [1, 1]} : vector<2x64xf32> to vector<2x16xf32>
    %203 = arith.negf %202 : vector<2x16xf32>
    %204 = math.exp %203 : vector<2x16xf32>
    %cst_50 = arith.constant 1.000000e+00 : f32
    %205 = vector.broadcast %cst_50 : f32 to vector<2x16xf32>
    %206 = arith.addf %205, %204 : vector<2x16xf32>
    %207 = arith.divf %205, %206 : vector<2x16xf32>
    %208 = arith.mulf %199, %183 : vector<2x16xf32>
    %209 = arith.mulf %193, %201 : vector<2x16xf32>
    %210 = arith.addf %208, %209 : vector<2x16xf32>
    %211 = math.tanh %210 : vector<2x16xf32>
    %212 = arith.mulf %207, %211 : vector<2x16xf32>
    %c4_i32 = arith.constant 4 : i32
    %213 = vector.broadcast %c4_i32 : i32 to vector<2x1xi32>
    %214 = arith.cmpi sgt, %4, %213 : vector<2x1xi32>
    %cst_51 = arith.constant 0.000000e+00 : f32
    %215 = vector.shape_cast %214 : vector<2x1xi1> to vector<2x1xi1>
    %216 = vector.broadcast %215 : vector<2x1xi1> to vector<2x16xi1>
    %217 = vector.broadcast %cst_51 : f32 to vector<2x16xf32>
    %218 = arith.select %216, %212, %217 : vector<2x16xi1>, vector<2x16xf32>
    %c4_52 = arith.constant 4 : index
    %c0_53 = arith.constant 0 : index
    %c0_54 = arith.constant 0 : index
    %219 = vector.load %arg5[%c4_52, %c0_53, %c0_54] : memref<8x2x16xf32, #tpu.memory_space<vmem>>, vector<1x2x16xf32>
    %220 = vector.shape_cast %219 : vector<1x2x16xf32> to vector<2x16xf32>
    %221 = vector.shape_cast %218 : vector<2x16xf32> to vector<1x2x16xf32>
    tpu.vector_store %arg5[%c4_52, %c0_53, %c0_54], %221 {strides = array<i32>} : memref<8x2x16xf32, #tpu.memory_space<vmem>>, vector<1x2x16xf32>,
    %222 = vector.shape_cast %214 : vector<2x1xi1> to vector<2x1xi1>
    %223 = vector.broadcast %222 : vector<2x1xi1> to vector<2x16xi1>
    %224 = arith.select %223, %212, %180 : vector<2x16xi1>, vector<2x16xf32>
    %225 = vector.shape_cast %214 : vector<2x1xi1> to vector<2x1xi1>
    %226 = vector.broadcast %225 : vector<2x1xi1> to vector<2x16xi1>
    %227 = arith.select %226, %210, %183 : vector<2x16xi1>, vector<2x16xf32>
    %c5 = arith.constant 5 : index
    %c0_55 = arith.constant 0 : index
    %c0_56 = arith.constant 0 : index
    %228 = vector.load %arg1[%c5, %c0_55, %c0_56] : memref<8x2x64xf32, #tpu.memory_space<vmem>>, vector<1x2x64xf32>
    %229 = vector.shape_cast %228 : vector<1x2x64xf32> to vector<2x64xf32>
    %cst_57 = arith.constant dense<0.000000e+00> : vector<2x64xf32>
    %230 = tpu.matmul %224, %5, %cst_57 {dimension_numbers = #tpu.dot_dimension_numbers<[1], [0], [0], [1], [0, 0, 1, 1], [], []>} : vector<2x16xf32>, vector<16x64xf32>, vector<2x64xf32> -> vector<2x64xf32>
    %231 = arith.addf %229, %230 : vector<2x64xf32>
    %232 = vector.extract_strided_slice %231 {offsets = [0, 0], sizes = [2, 16], strides = [1, 1]} : vector<2x64xf32> to vector<2x16xf32>
    %233 = arith.negf %232 : vector<2x16xf32>
    %234 = math.exp %233 : vector<2x16xf32>
    %cst_58 = arith.constant 1.000000e+00 : f32
    %235 = vector.broadcast %cst_58 : f32 to vector<2x16xf32>
    %236 = arith.addf %235, %234 : vector<2x16xf32>
    %237 = arith.divf %235, %236 : vector<2x16xf32>
    %238 = vector.extract_strided_slice %231 {offsets = [0, 16], sizes = [2, 16], strides = [1, 1]} : vector<2x64xf32> to vector<2x16xf32>
    %239 = arith.negf %238 : vector<2x16xf32>
    %240 = math.exp %239 : vector<2x16xf32>
    %cst_59 = arith.constant 1.000000e+00 : f32
    %241 = vector.broadcast %cst_59 : f32 to vector<2x16xf32>
    %242 = arith.addf %241, %240 : vector<2x16xf32>
    %243 = arith.divf %241, %242 : vector<2x16xf32>
    %244 = vector.extract_strided_slice %231 {offsets = [0, 32], sizes = [2, 16], strides = [1, 1]} : vector<2x64xf32> to vector<2x16xf32>
    %245 = math.tanh %244 : vector<2x16xf32>
    %246 = vector.extract_strided_slice %231 {offsets = [0, 48], sizes = [2, 16], strides = [1, 1]} : vector<2x64xf32> to vector<2x16xf32>
    %247 = arith.negf %246 : vector<2x16xf32>
    %248 = math.exp %247 : vector<2x16xf32>
    %cst_60 = arith.constant 1.000000e+00 : f32
    %249 = vector.broadcast %cst_60 : f32 to vector<2x16xf32>
    %250 = arith.addf %249, %248 : vector<2x16xf32>
    %251 = arith.divf %249, %250 : vector<2x16xf32>
    %252 = arith.mulf %243, %227 : vector<2x16xf32>
    %253 = arith.mulf %237, %245 : vector<2x16xf32>
    %254 = arith.addf %252, %253 : vector<2x16xf32>
    %255 = math.tanh %254 : vector<2x16xf32>
    %256 = arith.mulf %251, %255 : vector<2x16xf32>
    %c5_i32 = arith.constant 5 : i32
    %257 = vector.broadcast %c5_i32 : i32 to vector<2x1xi32>
    %258 = arith.cmpi sgt, %4, %257 : vector<2x1xi32>
    %cst_61 = arith.constant 0.000000e+00 : f32
    %259 = vector.shape_cast %258 : vector<2x1xi1> to vector<2x1xi1>
    %260 = vector.broadcast %259 : vector<2x1xi1> to vector<2x16xi1>
    %261 = vector.broadcast %cst_61 : f32 to vector<2x16xf32>
    %262 = arith.select %260, %256, %261 : vector<2x16xi1>, vector<2x16xf32>
    %c5_62 = arith.constant 5 : index
    %c0_63 = arith.constant 0 : index
    %c0_64 = arith.constant 0 : index
    %263 = vector.load %arg5[%c5_62, %c0_63, %c0_64] : memref<8x2x16xf32, #tpu.memory_space<vmem>>, vector<1x2x16xf32>
    %264 = vector.shape_cast %263 : vector<1x2x16xf32> to vector<2x16xf32>
    %265 = vector.shape_cast %262 : vector<2x16xf32> to vector<1x2x16xf32>
    tpu.vector_store %arg5[%c5_62, %c0_63, %c0_64], %265 {strides = array<i32>} : memref<8x2x16xf32, #tpu.memory_space<vmem>>, vector<1x2x16xf32>,
    %266 = vector.shape_cast %258 : vector<2x1xi1> to vector<2x1xi1>
    %267 = vector.broadcast %266 : vector<2x1xi1> to vector<2x16xi1>
    %268 = arith.select %267, %256, %224 : vector<2x16xi1>, vector<2x16xf32>
    %269 = vector.shape_cast %258 : vector<2x1xi1> to vector<2x1xi1>
    %270 = vector.broadcast %269 : vector<2x1xi1> to vector<2x16xi1>
    %271 = arith.select %270, %254, %227 : vector<2x16xi1>, vector<2x16xf32>
    %c6 = arith.constant 6 : index
    %c0_65 = arith.constant 0 : index
    %c0_66 = arith.constant 0 : index
    %272 = vector.load %arg1[%c6, %c0_65, %c0_66] : memref<8x2x64xf32, #tpu.memory_space<vmem>>, vector<1x2x64xf32>
    %273 = vector.shape_cast %272 : vector<1x2x64xf32> to vector<2x64xf32>
    %cst_67 = arith.constant dense<0.000000e+00> : vector<2x64xf32>
    %274 = tpu.matmul %268, %5, %cst_67 {dimension_numbers = #tpu.dot_dimension_numbers<[1], [0], [0], [1], [0, 0, 1, 1], [], []>} : vector<2x16xf32>, vector<16x64xf32>, vector<2x64xf32> -> vector<2x64xf32>
    %275 = arith.addf %273, %274 : vector<2x64xf32>
    %276 = vector.extract_strided_slice %275 {offsets = [0, 0], sizes = [2, 16], strides = [1, 1]} : vector<2x64xf32> to vector<2x16xf32>
    %277 = arith.negf %276 : vector<2x16xf32>
    %278 = math.exp %277 : vector<2x16xf32>
    %cst_68 = arith.constant 1.000000e+00 : f32
    %279 = vector.broadcast %cst_68 : f32 to vector<2x16xf32>
    %280 = arith.addf %279, %278 : vector<2x16xf32>
    %281 = arith.divf %279, %280 : vector<2x16xf32>
    %282 = vector.extract_strided_slice %275 {offsets = [0, 16], sizes = [2, 16], strides = [1, 1]} : vector<2x64xf32> to vector<2x16xf32>
    %283 = arith.negf %282 : vector<2x16xf32>
    %284 = math.exp %283 : vector<2x16xf32>
    %cst_69 = arith.constant 1.000000e+00 : f32
    %285 = vector.broadcast %cst_69 : f32 to vector<2x16xf32>
    %286 = arith.addf %285, %284 : vector<2x16xf32>
    %287 = arith.divf %285, %286 : vector<2x16xf32>
    %288 = vector.extract_strided_slice %275 {offsets = [0, 32], sizes = [2, 16], strides = [1, 1]} : vector<2x64xf32> to vector<2x16xf32>
    %289 = math.tanh %288 : vector<2x16xf32>
    %290 = vector.extract_strided_slice %275 {offsets = [0, 48], sizes = [2, 16], strides = [1, 1]} : vector<2x64xf32> to vector<2x16xf32>
    %291 = arith.negf %290 : vector<2x16xf32>
    %292 = math.exp %291 : vector<2x16xf32>
    %cst_70 = arith.constant 1.000000e+00 : f32
    %293 = vector.broadcast %cst_70 : f32 to vector<2x16xf32>
    %294 = arith.addf %293, %292 : vector<2x16xf32>
    %295 = arith.divf %293, %294 : vector<2x16xf32>
    %296 = arith.mulf %287, %271 : vector<2x16xf32>
    %297 = arith.mulf %281, %289 : vector<2x16xf32>
    %298 = arith.addf %296, %297 : vector<2x16xf32>
    %299 = math.tanh %298 : vector<2x16xf32>
    %300 = arith.mulf %295, %299 : vector<2x16xf32>
    %c6_i32 = arith.constant 6 : i32
    %301 = vector.broadcast %c6_i32 : i32 to vector<2x1xi32>
    %302 = arith.cmpi sgt, %4, %301 : vector<2x1xi32>
    %cst_71 = arith.constant 0.000000e+00 : f32
    %303 = vector.shape_cast %302 : vector<2x1xi1> to vector<2x1xi1>
    %304 = vector.broadcast %303 : vector<2x1xi1> to vector<2x16xi1>
    %305 = vector.broadcast %cst_71 : f32 to vector<2x16xf32>
    %306 = arith.select %304, %300, %305 : vector<2x16xi1>, vector<2x16xf32>
    %c6_72 = arith.constant 6 : index
    %c0_73 = arith.constant 0 : index
    %c0_74 = arith.constant 0 : index
    %307 = vector.load %arg5[%c6_72, %c0_73, %c0_74] : memref<8x2x16xf32, #tpu.memory_space<vmem>>, vector<1x2x16xf32>
    %308 = vector.shape_cast %307 : vector<1x2x16xf32> to vector<2x16xf32>
    %309 = vector.shape_cast %306 : vector<2x16xf32> to vector<1x2x16xf32>
    tpu.vector_store %arg5[%c6_72, %c0_73, %c0_74], %309 {strides = array<i32>} : memref<8x2x16xf32, #tpu.memory_space<vmem>>, vector<1x2x16xf32>,
    %310 = vector.shape_cast %302 : vector<2x1xi1> to vector<2x1xi1>
    %311 = vector.broadcast %310 : vector<2x1xi1> to vector<2x16xi1>
    %312 = arith.select %311, %300, %268 : vector<2x16xi1>, vector<2x16xf32>
    %313 = vector.shape_cast %302 : vector<2x1xi1> to vector<2x1xi1>
    %314 = vector.broadcast %313 : vector<2x1xi1> to vector<2x16xi1>
    %315 = arith.select %314, %298, %271 : vector<2x16xi1>, vector<2x16xf32>
    %c7 = arith.constant 7 : index
    %c0_75 = arith.constant 0 : index
    %c0_76 = arith.constant 0 : index
    %316 = vector.load %arg1[%c7, %c0_75, %c0_76] : memref<8x2x64xf32, #tpu.memory_space<vmem>>, vector<1x2x64xf32>
    %317 = vector.shape_cast %316 : vector<1x2x64xf32> to vector<2x64xf32>
    %cst_77 = arith.constant dense<0.000000e+00> : vector<2x64xf32>
    %318 = tpu.matmul %312, %5, %cst_77 {dimension_numbers = #tpu.dot_dimension_numbers<[1], [0], [0], [1], [0, 0, 1, 1], [], []>} : vector<2x16xf32>, vector<16x64xf32>, vector<2x64xf32> -> vector<2x64xf32>
    %319 = arith.addf %317, %318 : vector<2x64xf32>
    %320 = vector.extract_strided_slice %319 {offsets = [0, 0], sizes = [2, 16], strides = [1, 1]} : vector<2x64xf32> to vector<2x16xf32>
    %321 = arith.negf %320 : vector<2x16xf32>
    %322 = math.exp %321 : vector<2x16xf32>
    %cst_78 = arith.constant 1.000000e+00 : f32
    %323 = vector.broadcast %cst_78 : f32 to vector<2x16xf32>
    %324 = arith.addf %323, %322 : vector<2x16xf32>
    %325 = arith.divf %323, %324 : vector<2x16xf32>
    %326 = vector.extract_strided_slice %319 {offsets = [0, 16], sizes = [2, 16], strides = [1, 1]} : vector<2x64xf32> to vector<2x16xf32>
    %327 = arith.negf %326 : vector<2x16xf32>
    %328 = math.exp %327 : vector<2x16xf32>
    %cst_79 = arith.constant 1.000000e+00 : f32
    %329 = vector.broadcast %cst_79 : f32 to vector<2x16xf32>
    %330 = arith.addf %329, %328 : vector<2x16xf32>
    %331 = arith.divf %329, %330 : vector<2x16xf32>
    %332 = vector.extract_strided_slice %319 {offsets = [0, 32], sizes = [2, 16], strides = [1, 1]} : vector<2x64xf32> to vector<2x16xf32>
    %333 = math.tanh %332 : vector<2x16xf32>
    %334 = vector.extract_strided_slice %319 {offsets = [0, 48], sizes = [2, 16], strides = [1, 1]} : vector<2x64xf32> to vector<2x16xf32>
    %335 = arith.negf %334 : vector<2x16xf32>
    %336 = math.exp %335 : vector<2x16xf32>
    %cst_80 = arith.constant 1.000000e+00 : f32
    %337 = vector.broadcast %cst_80 : f32 to vector<2x16xf32>
    %338 = arith.addf %337, %336 : vector<2x16xf32>
    %339 = arith.divf %337, %338 : vector<2x16xf32>
    %340 = arith.mulf %331, %315 : vector<2x16xf32>
    %341 = arith.mulf %325, %333 : vector<2x16xf32>
    %342 = arith.addf %340, %341 : vector<2x16xf32>
    %343 = math.tanh %342 : vector<2x16xf32>
    %344 = arith.mulf %339, %343 : vector<2x16xf32>
    %c7_i32 = arith.constant 7 : i32
    %345 = vector.broadcast %c7_i32 : i32 to vector<2x1xi32>
    %346 = arith.cmpi sgt, %4, %345 : vector<2x1xi32>
    %cst_81 = arith.constant 0.000000e+00 : f32
    %347 = vector.shape_cast %346 : vector<2x1xi1> to vector<2x1xi1>
    %348 = vector.broadcast %347 : vector<2x1xi1> to vector<2x16xi1>
    %349 = vector.broadcast %cst_81 : f32 to vector<2x16xf32>
    %350 = arith.select %348, %344, %349 : vector<2x16xi1>, vector<2x16xf32>
    %c7_82 = arith.constant 7 : index
    %c0_83 = arith.constant 0 : index
    %c0_84 = arith.constant 0 : index
    %351 = vector.load %arg5[%c7_82, %c0_83, %c0_84] : memref<8x2x16xf32, #tpu.memory_space<vmem>>, vector<1x2x16xf32>
    %352 = vector.shape_cast %351 : vector<1x2x16xf32> to vector<2x16xf32>
    %353 = vector.shape_cast %350 : vector<2x16xf32> to vector<1x2x16xf32>
    tpu.vector_store %arg5[%c7_82, %c0_83, %c0_84], %353 {strides = array<i32>} : memref<8x2x16xf32, #tpu.memory_space<vmem>>, vector<1x2x16xf32>,
    %c0_85 = arith.constant 0 : index
    %c0_86 = arith.constant 0 : index
    %354 = vector.load %arg4[%c0_85, %c0_86] : memref<16x64xf32, #tpu.memory_space<vmem>>, vector<16x64xf32>
    %cst_87 = arith.constant 0.000000e+00 : f32
    %355 = vector.broadcast %cst_87 : f32 to vector<2x16xf32>
    %cst_88 = arith.constant 0.000000e+00 : f32
    %356 = vector.broadcast %cst_88 : f32 to vector<2x16xf32>
    %c7_89 = arith.constant 7 : index
    %c0_90 = arith.constant 0 : index
    %c0_91 = arith.constant 0 : index
    %357 = vector.load %arg2[%c7_89, %c0_90, %c0_91] : memref<8x2x64xf32, #tpu.memory_space<vmem>>, vector<1x2x64xf32>
    %358 = vector.shape_cast %357 : vector<1x2x64xf32> to vector<2x64xf32>
    %cst_92 = arith.constant dense<0.000000e+00> : vector<2x64xf32>
    %359 = tpu.matmul %355, %354, %cst_92 {dimension_numbers = #tpu.dot_dimension_numbers<[1], [0], [0], [1], [0, 0, 1, 1], [], []>} : vector<2x16xf32>, vector<16x64xf32>, vector<2x64xf32> -> vector<2x64xf32>
    %360 = arith.addf %358, %359 : vector<2x64xf32>
    %361 = vector.extract_strided_slice %360 {offsets = [0, 0], sizes = [2, 16], strides = [1, 1]} : vector<2x64xf32> to vector<2x16xf32>
    %362 = arith.negf %361 : vector<2x16xf32>
    %363 = math.exp %362 : vector<2x16xf32>
    %cst_93 = arith.constant 1.000000e+00 : f32
    %364 = vector.broadcast %cst_93 : f32 to vector<2x16xf32>
    %365 = arith.addf %364, %363 : vector<2x16xf32>
    %366 = arith.divf %364, %365 : vector<2x16xf32>
    %367 = vector.extract_strided_slice %360 {offsets = [0, 16], sizes = [2, 16], strides = [1, 1]} : vector<2x64xf32> to vector<2x16xf32>
    %368 = arith.negf %367 : vector<2x16xf32>
    %369 = math.exp %368 : vector<2x16xf32>
    %cst_94 = arith.constant 1.000000e+00 : f32
    %370 = vector.broadcast %cst_94 : f32 to vector<2x16xf32>
    %371 = arith.addf %370, %369 : vector<2x16xf32>
    %372 = arith.divf %370, %371 : vector<2x16xf32>
    %373 = vector.extract_strided_slice %360 {offsets = [0, 32], sizes = [2, 16], strides = [1, 1]} : vector<2x64xf32> to vector<2x16xf32>
    %374 = math.tanh %373 : vector<2x16xf32>
    %375 = vector.extract_strided_slice %360 {offsets = [0, 48], sizes = [2, 16], strides = [1, 1]} : vector<2x64xf32> to vector<2x16xf32>
    %376 = arith.negf %375 : vector<2x16xf32>
    %377 = math.exp %376 : vector<2x16xf32>
    %cst_95 = arith.constant 1.000000e+00 : f32
    %378 = vector.broadcast %cst_95 : f32 to vector<2x16xf32>
    %379 = arith.addf %378, %377 : vector<2x16xf32>
    %380 = arith.divf %378, %379 : vector<2x16xf32>
    %381 = arith.mulf %372, %356 : vector<2x16xf32>
    %382 = arith.mulf %366, %374 : vector<2x16xf32>
    %383 = arith.addf %381, %382 : vector<2x16xf32>
    %384 = math.tanh %383 : vector<2x16xf32>
    %385 = arith.mulf %380, %384 : vector<2x16xf32>
    %c7_i32_96 = arith.constant 7 : i32
    %386 = vector.broadcast %c7_i32_96 : i32 to vector<2x1xi32>
    %387 = arith.cmpi sgt, %4, %386 : vector<2x1xi32>
    %cst_97 = arith.constant 0.000000e+00 : f32
    %388 = vector.shape_cast %387 : vector<2x1xi1> to vector<2x1xi1>
    %389 = vector.broadcast %388 : vector<2x1xi1> to vector<2x16xi1>
    %390 = vector.broadcast %cst_97 : f32 to vector<2x16xf32>
    %391 = arith.select %389, %385, %390 : vector<2x16xi1>, vector<2x16xf32>
    %c7_98 = arith.constant 7 : index
    %c0_99 = arith.constant 0 : index
    %c0_100 = arith.constant 0 : index
    %392 = vector.load %arg6[%c7_98, %c0_99, %c0_100] : memref<8x2x16xf32, #tpu.memory_space<vmem>>, vector<1x2x16xf32>
    %393 = vector.shape_cast %392 : vector<1x2x16xf32> to vector<2x16xf32>
    %394 = vector.shape_cast %391 : vector<2x16xf32> to vector<1x2x16xf32>
    tpu.vector_store %arg6[%c7_98, %c0_99, %c0_100], %394 {strides = array<i32>} : memref<8x2x16xf32, #tpu.memory_space<vmem>>, vector<1x2x16xf32>,
    %395 = vector.shape_cast %387 : vector<2x1xi1> to vector<2x1xi1>
    %396 = vector.broadcast %395 : vector<2x1xi1> to vector<2x16xi1>
    %397 = arith.select %396, %385, %355 : vector<2x16xi1>, vector<2x16xf32>
    %398 = vector.shape_cast %387 : vector<2x1xi1> to vector<2x1xi1>
    %399 = vector.broadcast %398 : vector<2x1xi1> to vector<2x16xi1>
    %400 = arith.select %399, %383, %356 : vector<2x16xi1>, vector<2x16xf32>
    %c6_101 = arith.constant 6 : index
    %c0_102 = arith.constant 0 : index
    %c0_103 = arith.constant 0 : index
    %401 = vector.load %arg2[%c6_101, %c0_102, %c0_103] : memref<8x2x64xf32, #tpu.memory_space<vmem>>, vector<1x2x64xf32>
    %402 = vector.shape_cast %401 : vector<1x2x64xf32> to vector<2x64xf32>
    %cst_104 = arith.constant dense<0.000000e+00> : vector<2x64xf32>
    %403 = tpu.matmul %397, %354, %cst_104 {dimension_numbers = #tpu.dot_dimension_numbers<[1], [0], [0], [1], [0, 0, 1, 1], [], []>} : vector<2x16xf32>, vector<16x64xf32>, vector<2x64xf32> -> vector<2x64xf32>
    %404 = arith.addf %402, %403 : vector<2x64xf32>
    %405 = vector.extract_strided_slice %404 {offsets = [0, 0], sizes = [2, 16], strides = [1, 1]} : vector<2x64xf32> to vector<2x16xf32>
    %406 = arith.negf %405 : vector<2x16xf32>
    %407 = math.exp %406 : vector<2x16xf32>
    %cst_105 = arith.constant 1.000000e+00 : f32
    %408 = vector.broadcast %cst_105 : f32 to vector<2x16xf32>
    %409 = arith.addf %408, %407 : vector<2x16xf32>
    %410 = arith.divf %408, %409 : vector<2x16xf32>
    %411 = vector.extract_strided_slice %404 {offsets = [0, 16], sizes = [2, 16], strides = [1, 1]} : vector<2x64xf32> to vector<2x16xf32>
    %412 = arith.negf %411 : vector<2x16xf32>
    %413 = math.exp %412 : vector<2x16xf32>
    %cst_106 = arith.constant 1.000000e+00 : f32
    %414 = vector.broadcast %cst_106 : f32 to vector<2x16xf32>
    %415 = arith.addf %414, %413 : vector<2x16xf32>
    %416 = arith.divf %414, %415 : vector<2x16xf32>
    %417 = vector.extract_strided_slice %404 {offsets = [0, 32], sizes = [2, 16], strides = [1, 1]} : vector<2x64xf32> to vector<2x16xf32>
    %418 = math.tanh %417 : vector<2x16xf32>
    %419 = vector.extract_strided_slice %404 {offsets = [0, 48], sizes = [2, 16], strides = [1, 1]} : vector<2x64xf32> to vector<2x16xf32>
    %420 = arith.negf %419 : vector<2x16xf32>
    %421 = math.exp %420 : vector<2x16xf32>
    %cst_107 = arith.constant 1.000000e+00 : f32
    %422 = vector.broadcast %cst_107 : f32 to vector<2x16xf32>
    %423 = arith.addf %422, %421 : vector<2x16xf32>
    %424 = arith.divf %422, %423 : vector<2x16xf32>
    %425 = arith.mulf %416, %400 : vector<2x16xf32>
    %426 = arith.mulf %410, %418 : vector<2x16xf32>
    %427 = arith.addf %425, %426 : vector<2x16xf32>
    %428 = math.tanh %427 : vector<2x16xf32>
    %429 = arith.mulf %424, %428 : vector<2x16xf32>
    %c6_i32_108 = arith.constant 6 : i32
    %430 = vector.broadcast %c6_i32_108 : i32 to vector<2x1xi32>
    %431 = arith.cmpi sgt, %4, %430 : vector<2x1xi32>
    %cst_109 = arith.constant 0.000000e+00 : f32
    %432 = vector.shape_cast %431 : vector<2x1xi1> to vector<2x1xi1>
    %433 = vector.broadcast %432 : vector<2x1xi1> to vector<2x16xi1>
    %434 = vector.broadcast %cst_109 : f32 to vector<2x16xf32>
    %435 = arith.select %433, %429, %434 : vector<2x16xi1>, vector<2x16xf32>
    %c6_110 = arith.constant 6 : index
    %c0_111 = arith.constant 0 : index
    %c0_112 = arith.constant 0 : index
    %436 = vector.load %arg6[%c6_110, %c0_111, %c0_112] : memref<8x2x16xf32, #tpu.memory_space<vmem>>, vector<1x2x16xf32>
    %437 = vector.shape_cast %436 : vector<1x2x16xf32> to vector<2x16xf32>
    %438 = vector.shape_cast %435 : vector<2x16xf32> to vector<1x2x16xf32>
    tpu.vector_store %arg6[%c6_110, %c0_111, %c0_112], %438 {strides = array<i32>} : memref<8x2x16xf32, #tpu.memory_space<vmem>>, vector<1x2x16xf32>,
    %439 = vector.shape_cast %431 : vector<2x1xi1> to vector<2x1xi1>
    %440 = vector.broadcast %439 : vector<2x1xi1> to vector<2x16xi1>
    %441 = arith.select %440, %429, %397 : vector<2x16xi1>, vector<2x16xf32>
    %442 = vector.shape_cast %431 : vector<2x1xi1> to vector<2x1xi1>
    %443 = vector.broadcast %442 : vector<2x1xi1> to vector<2x16xi1>
    %444 = arith.select %443, %427, %400 : vector<2x16xi1>, vector<2x16xf32>
    %c5_113 = arith.constant 5 : index
    %c0_114 = arith.constant 0 : index
    %c0_115 = arith.constant 0 : index
    %445 = vector.load %arg2[%c5_113, %c0_114, %c0_115] : memref<8x2x64xf32, #tpu.memory_space<vmem>>, vector<1x2x64xf32>
    %446 = vector.shape_cast %445 : vector<1x2x64xf32> to vector<2x64xf32>
    %cst_116 = arith.constant dense<0.000000e+00> : vector<2x64xf32>
    %447 = tpu.matmul %441, %354, %cst_116 {dimension_numbers = #tpu.dot_dimension_numbers<[1], [0], [0], [1], [0, 0, 1, 1], [], []>} : vector<2x16xf32>, vector<16x64xf32>, vector<2x64xf32> -> vector<2x64xf32>
    %448 = arith.addf %446, %447 : vector<2x64xf32>
    %449 = vector.extract_strided_slice %448 {offsets = [0, 0], sizes = [2, 16], strides = [1, 1]} : vector<2x64xf32> to vector<2x16xf32>
    %450 = arith.negf %449 : vector<2x16xf32>
    %451 = math.exp %450 : vector<2x16xf32>
    %cst_117 = arith.constant 1.000000e+00 : f32
    %452 = vector.broadcast %cst_117 : f32 to vector<2x16xf32>
    %453 = arith.addf %452, %451 : vector<2x16xf32>
    %454 = arith.divf %452, %453 : vector<2x16xf32>
    %455 = vector.extract_strided_slice %448 {offsets = [0, 16], sizes = [2, 16], strides = [1, 1]} : vector<2x64xf32> to vector<2x16xf32>
    %456 = arith.negf %455 : vector<2x16xf32>
    %457 = math.exp %456 : vector<2x16xf32>
    %cst_118 = arith.constant 1.000000e+00 : f32
    %458 = vector.broadcast %cst_118 : f32 to vector<2x16xf32>
    %459 = arith.addf %458, %457 : vector<2x16xf32>
    %460 = arith.divf %458, %459 : vector<2x16xf32>
    %461 = vector.extract_strided_slice %448 {offsets = [0, 32], sizes = [2, 16], strides = [1, 1]} : vector<2x64xf32> to vector<2x16xf32>
    %462 = math.tanh %461 : vector<2x16xf32>
    %463 = vector.extract_strided_slice %448 {offsets = [0, 48], sizes = [2, 16], strides = [1, 1]} : vector<2x64xf32> to vector<2x16xf32>
    %464 = arith.negf %463 : vector<2x16xf32>
    %465 = math.exp %464 : vector<2x16xf32>
    %cst_119 = arith.constant 1.000000e+00 : f32
    %466 = vector.broadcast %cst_119 : f32 to vector<2x16xf32>
    %467 = arith.addf %466, %465 : vector<2x16xf32>
    %468 = arith.divf %466, %467 : vector<2x16xf32>
    %469 = arith.mulf %460, %444 : vector<2x16xf32>
    %470 = arith.mulf %454, %462 : vector<2x16xf32>
    %471 = arith.addf %469, %470 : vector<2x16xf32>
    %472 = math.tanh %471 : vector<2x16xf32>
    %473 = arith.mulf %468, %472 : vector<2x16xf32>
    %c5_i32_120 = arith.constant 5 : i32
    %474 = vector.broadcast %c5_i32_120 : i32 to vector<2x1xi32>
    %475 = arith.cmpi sgt, %4, %474 : vector<2x1xi32>
    %cst_121 = arith.constant 0.000000e+00 : f32
    %476 = vector.shape_cast %475 : vector<2x1xi1> to vector<2x1xi1>
    %477 = vector.broadcast %476 : vector<2x1xi1> to vector<2x16xi1>
    %478 = vector.broadcast %cst_121 : f32 to vector<2x16xf32>
    %479 = arith.select %477, %473, %478 : vector<2x16xi1>, vector<2x16xf32>
    %c5_122 = arith.constant 5 : index
    %c0_123 = arith.constant 0 : index
    %c0_124 = arith.constant 0 : index
    %480 = vector.load %arg6[%c5_122, %c0_123, %c0_124] : memref<8x2x16xf32, #tpu.memory_space<vmem>>, vector<1x2x16xf32>
    %481 = vector.shape_cast %480 : vector<1x2x16xf32> to vector<2x16xf32>
    %482 = vector.shape_cast %479 : vector<2x16xf32> to vector<1x2x16xf32>
    tpu.vector_store %arg6[%c5_122, %c0_123, %c0_124], %482 {strides = array<i32>} : memref<8x2x16xf32, #tpu.memory_space<vmem>>, vector<1x2x16xf32>,
    %483 = vector.shape_cast %475 : vector<2x1xi1> to vector<2x1xi1>
    %484 = vector.broadcast %483 : vector<2x1xi1> to vector<2x16xi1>
    %485 = arith.select %484, %473, %441 : vector<2x16xi1>, vector<2x16xf32>
    %486 = vector.shape_cast %475 : vector<2x1xi1> to vector<2x1xi1>
    %487 = vector.broadcast %486 : vector<2x1xi1> to vector<2x16xi1>
    %488 = arith.select %487, %471, %444 : vector<2x16xi1>, vector<2x16xf32>
    %c4_125 = arith.constant 4 : index
    %c0_126 = arith.constant 0 : index
    %c0_127 = arith.constant 0 : index
    %489 = vector.load %arg2[%c4_125, %c0_126, %c0_127] : memref<8x2x64xf32, #tpu.memory_space<vmem>>, vector<1x2x64xf32>
    %490 = vector.shape_cast %489 : vector<1x2x64xf32> to vector<2x64xf32>
    %cst_128 = arith.constant dense<0.000000e+00> : vector<2x64xf32>
    %491 = tpu.matmul %485, %354, %cst_128 {dimension_numbers = #tpu.dot_dimension_numbers<[1], [0], [0], [1], [0, 0, 1, 1], [], []>} : vector<2x16xf32>, vector<16x64xf32>, vector<2x64xf32> -> vector<2x64xf32>
    %492 = arith.addf %490, %491 : vector<2x64xf32>
    %493 = vector.extract_strided_slice %492 {offsets = [0, 0], sizes = [2, 16], strides = [1, 1]} : vector<2x64xf32> to vector<2x16xf32>
    %494 = arith.negf %493 : vector<2x16xf32>
    %495 = math.exp %494 : vector<2x16xf32>
    %cst_129 = arith.constant 1.000000e+00 : f32
    %496 = vector.broadcast %cst_129 : f32 to vector<2x16xf32>
    %497 = arith.addf %496, %495 : vector<2x16xf32>
    %498 = arith.divf %496, %497 : vector<2x16xf32>
    %499 = vector.extract_strided_slice %492 {offsets = [0, 16], sizes = [2, 16], strides = [1, 1]} : vector<2x64xf32> to vector<2x16xf32>
    %500 = arith.negf %499 : vector<2x16xf32>
    %501 = math.exp %500 : vector<2x16xf32>
    %cst_130 = arith.constant 1.000000e+00 : f32
    %502 = vector.broadcast %cst_130 : f32 to vector<2x16xf32>
    %503 = arith.addf %502, %501 : vector<2x16xf32>
    %504 = arith.divf %502, %503 : vector<2x16xf32>
    %505 = vector.extract_strided_slice %492 {offsets = [0, 32], sizes = [2, 16], strides = [1, 1]} : vector<2x64xf32> to vector<2x16xf32>
    %506 = math.tanh %505 : vector<2x16xf32>
    %507 = vector.extract_strided_slice %492 {offsets = [0, 48], sizes = [2, 16], strides = [1, 1]} : vector<2x64xf32> to vector<2x16xf32>
    %508 = arith.negf %507 : vector<2x16xf32>
    %509 = math.exp %508 : vector<2x16xf32>
    %cst_131 = arith.constant 1.000000e+00 : f32
    %510 = vector.broadcast %cst_131 : f32 to vector<2x16xf32>
    %511 = arith.addf %510, %509 : vector<2x16xf32>
    %512 = arith.divf %510, %511 : vector<2x16xf32>
    %513 = arith.mulf %504, %488 : vector<2x16xf32>
    %514 = arith.mulf %498, %506 : vector<2x16xf32>
    %515 = arith.addf %513, %514 : vector<2x16xf32>
    %516 = math.tanh %515 : vector<2x16xf32>
    %517 = arith.mulf %512, %516 : vector<2x16xf32>
    %c4_i32_132 = arith.constant 4 : i32
    %518 = vector.broadcast %c4_i32_132 : i32 to vector<2x1xi32>
    %519 = arith.cmpi sgt, %4, %518 : vector<2x1xi32>
    %cst_133 = arith.constant 0.000000e+00 : f32
    %520 = vector.shape_cast %519 : vector<2x1xi1> to vector<2x1xi1>
    %521 = vector.broadcast %520 : vector<2x1xi1> to vector<2x16xi1>
    %522 = vector.broadcast %cst_133 : f32 to vector<2x16xf32>
    %523 = arith.select %521, %517, %522 : vector<2x16xi1>, vector<2x16xf32>
    %c4_134 = arith.constant 4 : index
    %c0_135 = arith.constant 0 : index
    %c0_136 = arith.constant 0 : index
    %524 = vector.load %arg6[%c4_134, %c0_135, %c0_136] : memref<8x2x16xf32, #tpu.memory_space<vmem>>, vector<1x2x16xf32>
    %525 = vector.shape_cast %524 : vector<1x2x16xf32> to vector<2x16xf32>
    %526 = vector.shape_cast %523 : vector<2x16xf32> to vector<1x2x16xf32>
    tpu.vector_store %arg6[%c4_134, %c0_135, %c0_136], %526 {strides = array<i32>} : memref<8x2x16xf32, #tpu.memory_space<vmem>>, vector<1x2x16xf32>,
    %527 = vector.shape_cast %519 : vector<2x1xi1> to vector<2x1xi1>
    %528 = vector.broadcast %527 : vector<2x1xi1> to vector<2x16xi1>
    %529 = arith.select %528, %517, %485 : vector<2x16xi1>, vector<2x16xf32>
    %530 = vector.shape_cast %519 : vector<2x1xi1> to vector<2x1xi1>
    %531 = vector.broadcast %530 : vector<2x1xi1> to vector<2x16xi1>
    %532 = arith.select %531, %515, %488 : vector<2x16xi1>, vector<2x16xf32>
    %c3_137 = arith.constant 3 : index
    %c0_138 = arith.constant 0 : index
    %c0_139 = arith.constant 0 : index
    %533 = vector.load %arg2[%c3_137, %c0_138, %c0_139] : memref<8x2x64xf32, #tpu.memory_space<vmem>>, vector<1x2x64xf32>
    %534 = vector.shape_cast %533 : vector<1x2x64xf32> to vector<2x64xf32>
    %cst_140 = arith.constant dense<0.000000e+00> : vector<2x64xf32>
    %535 = tpu.matmul %529, %354, %cst_140 {dimension_numbers = #tpu.dot_dimension_numbers<[1], [0], [0], [1], [0, 0, 1, 1], [], []>} : vector<2x16xf32>, vector<16x64xf32>, vector<2x64xf32> -> vector<2x64xf32>
    %536 = arith.addf %534, %535 : vector<2x64xf32>
    %537 = vector.extract_strided_slice %536 {offsets = [0, 0], sizes = [2, 16], strides = [1, 1]} : vector<2x64xf32> to vector<2x16xf32>
    %538 = arith.negf %537 : vector<2x16xf32>
    %539 = math.exp %538 : vector<2x16xf32>
    %cst_141 = arith.constant 1.000000e+00 : f32
    %540 = vector.broadcast %cst_141 : f32 to vector<2x16xf32>
    %541 = arith.addf %540, %539 : vector<2x16xf32>
    %542 = arith.divf %540, %541 : vector<2x16xf32>
    %543 = vector.extract_strided_slice %536 {offsets = [0, 16], sizes = [2, 16], strides = [1, 1]} : vector<2x64xf32> to vector<2x16xf32>
    %544 = arith.negf %543 : vector<2x16xf32>
    %545 = math.exp %544 : vector<2x16xf32>
    %cst_142 = arith.constant 1.000000e+00 : f32
    %546 = vector.broadcast %cst_142 : f32 to vector<2x16xf32>
    %547 = arith.addf %546, %545 : vector<2x16xf32>
    %548 = arith.divf %546, %547 : vector<2x16xf32>
    %549 = vector.extract_strided_slice %536 {offsets = [0, 32], sizes = [2, 16], strides = [1, 1]} : vector<2x64xf32> to vector<2x16xf32>
    %550 = math.tanh %549 : vector<2x16xf32>
    %551 = vector.extract_strided_slice %536 {offsets = [0, 48], sizes = [2, 16], strides = [1, 1]} : vector<2x64xf32> to vector<2x16xf32>
    %552 = arith.negf %551 : vector<2x16xf32>
    %553 = math.exp %552 : vector<2x16xf32>
    %cst_143 = arith.constant 1.000000e+00 : f32
    %554 = vector.broadcast %cst_143 : f32 to vector<2x16xf32>
    %555 = arith.addf %554, %553 : vector<2x16xf32>
    %556 = arith.divf %554, %555 : vector<2x16xf32>
    %557 = arith.mulf %548, %532 : vector<2x16xf32>
    %558 = arith.mulf %542, %550 : vector<2x16xf32>
    %559 = arith.addf %557, %558 : vector<2x16xf32>
    %560 = math.tanh %559 : vector<2x16xf32>
    %561 = arith.mulf %556, %560 : vector<2x16xf32>
    %c3_i32_144 = arith.constant 3 : i32
    %562 = vector.broadcast %c3_i32_144 : i32 to vector<2x1xi32>
    %563 = arith.cmpi sgt, %4, %562 : vector<2x1xi32>
    %cst_145 = arith.constant 0.000000e+00 : f32
    %564 = vector.shape_cast %563 : vector<2x1xi1> to vector<2x1xi1>
    %565 = vector.broadcast %564 : vector<2x1xi1> to vector<2x16xi1>
    %566 = vector.broadcast %cst_145 : f32 to vector<2x16xf32>
    %567 = arith.select %565, %561, %566 : vector<2x16xi1>, vector<2x16xf32>
    %c3_146 = arith.constant 3 : index
    %c0_147 = arith.constant 0 : index
    %c0_148 = arith.constant 0 : index
    %568 = vector.load %arg6[%c3_146, %c0_147, %c0_148] : memref<8x2x16xf32, #tpu.memory_space<vmem>>, vector<1x2x16xf32>
    %569 = vector.shape_cast %568 : vector<1x2x16xf32> to vector<2x16xf32>
    %570 = vector.shape_cast %567 : vector<2x16xf32> to vector<1x2x16xf32>
    tpu.vector_store %arg6[%c3_146, %c0_147, %c0_148], %570 {strides = array<i32>} : memref<8x2x16xf32, #tpu.memory_space<vmem>>, vector<1x2x16xf32>,
    %571 = vector.shape_cast %563 : vector<2x1xi1> to vector<2x1xi1>
    %572 = vector.broadcast %571 : vector<2x1xi1> to vector<2x16xi1>
    %573 = arith.select %572, %561, %529 : vector<2x16xi1>, vector<2x16xf32>
    %574 = vector.shape_cast %563 : vector<2x1xi1> to vector<2x1xi1>
    %575 = vector.broadcast %574 : vector<2x1xi1> to vector<2x16xi1>
    %576 = arith.select %575, %559, %532 : vector<2x16xi1>, vector<2x16xf32>
    %c2_149 = arith.constant 2 : index
    %c0_150 = arith.constant 0 : index
    %c0_151 = arith.constant 0 : index
    %577 = vector.load %arg2[%c2_149, %c0_150, %c0_151] : memref<8x2x64xf32, #tpu.memory_space<vmem>>, vector<1x2x64xf32>
    %578 = vector.shape_cast %577 : vector<1x2x64xf32> to vector<2x64xf32>
    %cst_152 = arith.constant dense<0.000000e+00> : vector<2x64xf32>
    %579 = tpu.matmul %573, %354, %cst_152 {dimension_numbers = #tpu.dot_dimension_numbers<[1], [0], [0], [1], [0, 0, 1, 1], [], []>} : vector<2x16xf32>, vector<16x64xf32>, vector<2x64xf32> -> vector<2x64xf32>
    %580 = arith.addf %578, %579 : vector<2x64xf32>
    %581 = vector.extract_strided_slice %580 {offsets = [0, 0], sizes = [2, 16], strides = [1, 1]} : vector<2x64xf32> to vector<2x16xf32>
    %582 = arith.negf %581 : vector<2x16xf32>
    %583 = math.exp %582 : vector<2x16xf32>
    %cst_153 = arith.constant 1.000000e+00 : f32
    %584 = vector.broadcast %cst_153 : f32 to vector<2x16xf32>
    %585 = arith.addf %584, %583 : vector<2x16xf32>
    %586 = arith.divf %584, %585 : vector<2x16xf32>
    %587 = vector.extract_strided_slice %580 {offsets = [0, 16], sizes = [2, 16], strides = [1, 1]} : vector<2x64xf32> to vector<2x16xf32>
    %588 = arith.negf %587 : vector<2x16xf32>
    %589 = math.exp %588 : vector<2x16xf32>
    %cst_154 = arith.constant 1.000000e+00 : f32
    %590 = vector.broadcast %cst_154 : f32 to vector<2x16xf32>
    %591 = arith.addf %590, %589 : vector<2x16xf32>
    %592 = arith.divf %590, %591 : vector<2x16xf32>
    %593 = vector.extract_strided_slice %580 {offsets = [0, 32], sizes = [2, 16], strides = [1, 1]} : vector<2x64xf32> to vector<2x16xf32>
    %594 = math.tanh %593 : vector<2x16xf32>
    %595 = vector.extract_strided_slice %580 {offsets = [0, 48], sizes = [2, 16], strides = [1, 1]} : vector<2x64xf32> to vector<2x16xf32>
    %596 = arith.negf %595 : vector<2x16xf32>
    %597 = math.exp %596 : vector<2x16xf32>
    %cst_155 = arith.constant 1.000000e+00 : f32
    %598 = vector.broadcast %cst_155 : f32 to vector<2x16xf32>
    %599 = arith.addf %598, %597 : vector<2x16xf32>
    %600 = arith.divf %598, %599 : vector<2x16xf32>
    %601 = arith.mulf %592, %576 : vector<2x16xf32>
    %602 = arith.mulf %586, %594 : vector<2x16xf32>
    %603 = arith.addf %601, %602 : vector<2x16xf32>
    %604 = math.tanh %603 : vector<2x16xf32>
    %605 = arith.mulf %600, %604 : vector<2x16xf32>
    %c2_i32_156 = arith.constant 2 : i32
    %606 = vector.broadcast %c2_i32_156 : i32 to vector<2x1xi32>
    %607 = arith.cmpi sgt, %4, %606 : vector<2x1xi32>
    %cst_157 = arith.constant 0.000000e+00 : f32
    %608 = vector.shape_cast %607 : vector<2x1xi1> to vector<2x1xi1>
    %609 = vector.broadcast %608 : vector<2x1xi1> to vector<2x16xi1>
    %610 = vector.broadcast %cst_157 : f32 to vector<2x16xf32>
    %611 = arith.select %609, %605, %610 : vector<2x16xi1>, vector<2x16xf32>
    %c2_158 = arith.constant 2 : index
    %c0_159 = arith.constant 0 : index
    %c0_160 = arith.constant 0 : index
    %612 = vector.load %arg6[%c2_158, %c0_159, %c0_160] : memref<8x2x16xf32, #tpu.memory_space<vmem>>, vector<1x2x16xf32>
    %613 = vector.shape_cast %612 : vector<1x2x16xf32> to vector<2x16xf32>
    %614 = vector.shape_cast %611 : vector<2x16xf32> to vector<1x2x16xf32>
    tpu.vector_store %arg6[%c2_158, %c0_159, %c0_160], %614 {strides = array<i32>} : memref<8x2x16xf32, #tpu.memory_space<vmem>>, vector<1x2x16xf32>,
    %615 = vector.shape_cast %607 : vector<2x1xi1> to vector<2x1xi1>
    %616 = vector.broadcast %615 : vector<2x1xi1> to vector<2x16xi1>
    %617 = arith.select %616, %605, %573 : vector<2x16xi1>, vector<2x16xf32>
    %618 = vector.shape_cast %607 : vector<2x1xi1> to vector<2x1xi1>
    %619 = vector.broadcast %618 : vector<2x1xi1> to vector<2x16xi1>
    %620 = arith.select %619, %603, %576 : vector<2x16xi1>, vector<2x16xf32>
    %c1_161 = arith.constant 1 : index
    %c0_162 = arith.constant 0 : index
    %c0_163 = arith.constant 0 : index
    %621 = vector.load %arg2[%c1_161, %c0_162, %c0_163] : memref<8x2x64xf32, #tpu.memory_space<vmem>>, vector<1x2x64xf32>
    %622 = vector.shape_cast %621 : vector<1x2x64xf32> to vector<2x64xf32>
    %cst_164 = arith.constant dense<0.000000e+00> : vector<2x64xf32>
    %623 = tpu.matmul %617, %354, %cst_164 {dimension_numbers = #tpu.dot_dimension_numbers<[1], [0], [0], [1], [0, 0, 1, 1], [], []>} : vector<2x16xf32>, vector<16x64xf32>, vector<2x64xf32> -> vector<2x64xf32>
    %624 = arith.addf %622, %623 : vector<2x64xf32>
    %625 = vector.extract_strided_slice %624 {offsets = [0, 0], sizes = [2, 16], strides = [1, 1]} : vector<2x64xf32> to vector<2x16xf32>
    %626 = arith.negf %625 : vector<2x16xf32>
    %627 = math.exp %626 : vector<2x16xf32>
    %cst_165 = arith.constant 1.000000e+00 : f32
    %628 = vector.broadcast %cst_165 : f32 to vector<2x16xf32>
    %629 = arith.addf %628, %627 : vector<2x16xf32>
    %630 = arith.divf %628, %629 : vector<2x16xf32>
    %631 = vector.extract_strided_slice %624 {offsets = [0, 16], sizes = [2, 16], strides = [1, 1]} : vector<2x64xf32> to vector<2x16xf32>
    %632 = arith.negf %631 : vector<2x16xf32>
    %633 = math.exp %632 : vector<2x16xf32>
    %cst_166 = arith.constant 1.000000e+00 : f32
    %634 = vector.broadcast %cst_166 : f32 to vector<2x16xf32>
    %635 = arith.addf %634, %633 : vector<2x16xf32>
    %636 = arith.divf %634, %635 : vector<2x16xf32>
    %637 = vector.extract_strided_slice %624 {offsets = [0, 32], sizes = [2, 16], strides = [1, 1]} : vector<2x64xf32> to vector<2x16xf32>
    %638 = math.tanh %637 : vector<2x16xf32>
    %639 = vector.extract_strided_slice %624 {offsets = [0, 48], sizes = [2, 16], strides = [1, 1]} : vector<2x64xf32> to vector<2x16xf32>
    %640 = arith.negf %639 : vector<2x16xf32>
    %641 = math.exp %640 : vector<2x16xf32>
    %cst_167 = arith.constant 1.000000e+00 : f32
    %642 = vector.broadcast %cst_167 : f32 to vector<2x16xf32>
    %643 = arith.addf %642, %641 : vector<2x16xf32>
    %644 = arith.divf %642, %643 : vector<2x16xf32>
    %645 = arith.mulf %636, %620 : vector<2x16xf32>
    %646 = arith.mulf %630, %638 : vector<2x16xf32>
    %647 = arith.addf %645, %646 : vector<2x16xf32>
    %648 = math.tanh %647 : vector<2x16xf32>
    %649 = arith.mulf %644, %648 : vector<2x16xf32>
    %c1_i32_168 = arith.constant 1 : i32
    %650 = vector.broadcast %c1_i32_168 : i32 to vector<2x1xi32>
    %651 = arith.cmpi sgt, %4, %650 : vector<2x1xi32>
    %cst_169 = arith.constant 0.000000e+00 : f32
    %652 = vector.shape_cast %651 : vector<2x1xi1> to vector<2x1xi1>
    %653 = vector.broadcast %652 : vector<2x1xi1> to vector<2x16xi1>
    %654 = vector.broadcast %cst_169 : f32 to vector<2x16xf32>
    %655 = arith.select %653, %649, %654 : vector<2x16xi1>, vector<2x16xf32>
    %c1_170 = arith.constant 1 : index
    %c0_171 = arith.constant 0 : index
    %c0_172 = arith.constant 0 : index
    %656 = vector.load %arg6[%c1_170, %c0_171, %c0_172] : memref<8x2x16xf32, #tpu.memory_space<vmem>>, vector<1x2x16xf32>
    %657 = vector.shape_cast %656 : vector<1x2x16xf32> to vector<2x16xf32>
    %658 = vector.shape_cast %655 : vector<2x16xf32> to vector<1x2x16xf32>
    tpu.vector_store %arg6[%c1_170, %c0_171, %c0_172], %658 {strides = array<i32>} : memref<8x2x16xf32, #tpu.memory_space<vmem>>, vector<1x2x16xf32>,
    %659 = vector.shape_cast %651 : vector<2x1xi1> to vector<2x1xi1>
    %660 = vector.broadcast %659 : vector<2x1xi1> to vector<2x16xi1>
    %661 = arith.select %660, %649, %617 : vector<2x16xi1>, vector<2x16xf32>
    %662 = vector.shape_cast %651 : vector<2x1xi1> to vector<2x1xi1>
    %663 = vector.broadcast %662 : vector<2x1xi1> to vector<2x16xi1>
    %664 = arith.select %663, %647, %620 : vector<2x16xi1>, vector<2x16xf32>
    %c0_173 = arith.constant 0 : index
    %c0_174 = arith.constant 0 : index
    %c0_175 = arith.constant 0 : index
    %665 = vector.load %arg2[%c0_173, %c0_174, %c0_175] : memref<8x2x64xf32, #tpu.memory_space<vmem>>, vector<1x2x64xf32>
    %666 = vector.shape_cast %665 : vector<1x2x64xf32> to vector<2x64xf32>
    %cst_176 = arith.constant dense<0.000000e+00> : vector<2x64xf32>
    %667 = tpu.matmul %661, %354, %cst_176 {dimension_numbers = #tpu.dot_dimension_numbers<[1], [0], [0], [1], [0, 0, 1, 1], [], []>} : vector<2x16xf32>, vector<16x64xf32>, vector<2x64xf32> -> vector<2x64xf32>
    %668 = arith.addf %666, %667 : vector<2x64xf32>
    %669 = vector.extract_strided_slice %668 {offsets = [0, 0], sizes = [2, 16], strides = [1, 1]} : vector<2x64xf32> to vector<2x16xf32>
    %670 = arith.negf %669 : vector<2x16xf32>
    %671 = math.exp %670 : vector<2x16xf32>
    %cst_177 = arith.constant 1.000000e+00 : f32
    %672 = vector.broadcast %cst_177 : f32 to vector<2x16xf32>
    %673 = arith.addf %672, %671 : vector<2x16xf32>
    %674 = arith.divf %672, %673 : vector<2x16xf32>
    %675 = vector.extract_strided_slice %668 {offsets = [0, 16], sizes = [2, 16], strides = [1, 1]} : vector<2x64xf32> to vector<2x16xf32>
    %676 = arith.negf %675 : vector<2x16xf32>
    %677 = math.exp %676 : vector<2x16xf32>
    %cst_178 = arith.constant 1.000000e+00 : f32
    %678 = vector.broadcast %cst_178 : f32 to vector<2x16xf32>
    %679 = arith.addf %678, %677 : vector<2x16xf32>
    %680 = arith.divf %678, %679 : vector<2x16xf32>
    %681 = vector.extract_strided_slice %668 {offsets = [0, 32], sizes = [2, 16], strides = [1, 1]} : vector<2x64xf32> to vector<2x16xf32>
    %682 = math.tanh %681 : vector<2x16xf32>
    %683 = vector.extract_strided_slice %668 {offsets = [0, 48], sizes = [2, 16], strides = [1, 1]} : vector<2x64xf32> to vector<2x16xf32>
    %684 = arith.negf %683 : vector<2x16xf32>
    %685 = math.exp %684 : vector<2x16xf32>
    %cst_179 = arith.constant 1.000000e+00 : f32
    %686 = vector.broadcast %cst_179 : f32 to vector<2x16xf32>
    %687 = arith.addf %686, %685 : vector<2x16xf32>
    %688 = arith.divf %686, %687 : vector<2x16xf32>
    %689 = arith.mulf %680, %664 : vector<2x16xf32>
    %690 = arith.mulf %674, %682 : vector<2x16xf32>
    %691 = arith.addf %689, %690 : vector<2x16xf32>
    %692 = math.tanh %691 : vector<2x16xf32>
    %693 = arith.mulf %688, %692 : vector<2x16xf32>
    %c0_i32_180 = arith.constant 0 : i32
    %694 = vector.broadcast %c0_i32_180 : i32 to vector<2x1xi32>
    %695 = arith.cmpi sgt, %4, %694 : vector<2x1xi32>
    %cst_181 = arith.constant 0.000000e+00 : f32
    %696 = vector.shape_cast %695 : vector<2x1xi1> to vector<2x1xi1>
    %697 = vector.broadcast %696 : vector<2x1xi1> to vector<2x16xi1>
    %698 = vector.broadcast %cst_181 : f32 to vector<2x16xf32>
    %699 = arith.select %697, %693, %698 : vector<2x16xi1>, vector<2x16xf32>
    %c0_182 = arith.constant 0 : index
    %c0_183 = arith.constant 0 : index
    %c0_184 = arith.constant 0 : index
    %700 = vector.load %arg6[%c0_182, %c0_183, %c0_184] : memref<8x2x16xf32, #tpu.memory_space<vmem>>, vector<1x2x16xf32>
    %701 = vector.shape_cast %700 : vector<1x2x16xf32> to vector<2x16xf32>
    %702 = vector.shape_cast %699 : vector<2x16xf32> to vector<1x2x16xf32>
    tpu.vector_store %arg6[%c0_182, %c0_183, %c0_184], %702 {strides = array<i32>} : memref<8x2x16xf32, #tpu.memory_space<vmem>>, vector<1x2x16xf32>,
    return
  }
}

</mosaic_0001>

<llo_original>
// kernel: _bilstm_layer_impl.1
$region0: #{_bilstm_layer_impl.1}
  #allocation0 [shape = 'u32[]', space=smem, size = 0x4, offset = 0x4, fixed_abs, tag = 'smem constant byte address 0x4 - core index']
  #allocation1 [shape = 'u32[144,128]{1,0:T(1,128)}', space=vmem, size = 0x12000, scoped, tag = 'internal scratch']
  %s0 = inlined_call_operand.vmem [shape: s32[2], index: 0, kind: input, shape index: {}]
  %s1 = inlined_call_operand.vmem [shape: f32[8,2,64], index: 1, kind: input, shape index: {}]
  %s2 = inlined_call_operand.vmem [shape: f32[8,2,64], index: 2, kind: input, shape index: {}]
  %s3 = inlined_call_operand.vmem [shape: f32[16,64], index: 3, kind: input, shape index: {}]
  %s4 = inlined_call_operand.vmem [shape: f32[16,64], index: 4, kind: input, shape index: {}]
  %s5 = inlined_call_operand.vmem [shape: f32[8,2,16], index: 5, kind: output, shape index: {0}]
  %s6 = inlined_call_operand.vmem [shape: f32[8,2,16], index: 6, kind: output, shape index: {1}]
  %7 = xla_tuple %s5, %s6
  %s8 = sld [smem:[#allocation0]]
  $region42: #{_bilstm_layer_impl.1} parent=0
    _
  %s10 = ssub.s32 1, %s8
  %s11 = scalar_select 0, %s10, %s8
  $region1: #{_bilstm_layer_impl.1} parent=0
    #allocation2 [shape = 'u8[512]{0}', space=smem, size = 0x200, scoped, tag = 'input window, operand 0, single buffered']
    #allocation3 [shape = 's32[1]{0}', space=sflag, size = 0x4, scoped, tag = 'scoped memory for _bilstm_layer_impl.1']
    %12 = vsyncpa [#allocation3], 0
    // Predicated region
    $region2: #{_bilstm_layer_impl.1} parent=1 // pred_check
      _
    $region3: #{_bilstm_layer_impl.1} parent=1 // pred_check_branch
      %14 = sbr.rel (0) target = $region5
    $region4: #{_bilstm_layer_impl.1} parent=1 // pred_region
      %s16 = ssub.s32 16, 16
      %17 = vsyncadd [#allocation3], %s16
      %s19 = sshll.u32 %s0, 4
      %s20 = int_to_ptr.vmem [resolvable:$true] %s19
      %22 = dma.vmem_to_smem %s20, 16, [#allocation2], [#allocation3]
    $region5: #{_bilstm_layer_impl.1} parent=1 // pred_fallthru
      _
    // Predicated region
    $region6: #{_bilstm_layer_impl.1} parent=1 // pred_check
      _
    $region7: #{_bilstm_layer_impl.1} parent=1 // pred_check_branch
      %24 = sbr.rel (0) target = $region9
    $region8: #{_bilstm_layer_impl.1} parent=1 // pred_region
      _
    $region9: #{_bilstm_layer_impl.1} parent=1 // pred_fallthru
      _
    // Predicated region
    $region10: #{_bilstm_layer_impl.1} parent=1 // pred_check
      _
    $region11: #{_bilstm_layer_impl.1} parent=1 // pred_check_branch
      %26 = sbr.rel (0) target = $region13
    $region12: #{_bilstm_layer_impl.1} parent=1 // pred_region
      _
    $region13: #{_bilstm_layer_impl.1} parent=1 // pred_fallthru
      _
    // Predicated region
    $region14: #{_bilstm_layer_impl.1} parent=1 // pred_check
      _
    $region15: #{_bilstm_layer_impl.1} parent=1 // pred_check_branch
      %28 = sbr.rel (0) target = $region17
    $region16: #{_bilstm_layer_impl.1} parent=1 // pred_region
      _
    $region17: #{_bilstm_layer_impl.1} parent=1 // pred_fallthru
      _
    // Predicated region
    $region18: #{_bilstm_layer_impl.1} parent=1 // pred_check
      _
    $region19: #{_bilstm_layer_impl.1} parent=1 // pred_check_branch
      %30 = sbr.rel (0) target = $region21
    $region20: #{_bilstm_layer_impl.1} parent=1 // pred_region
      _
    $region21: #{_bilstm_layer_impl.1} parent=1 // pred_fallthru
      _
    // Predicated region
    $region22: #{_bilstm_layer_impl.1} parent=1 // pred_check
      _
    $region23: #{_bilstm_layer_impl.1} parent=1 // pred_check_branch
      %32 = sbr.rel (0) target = $region25
    $region24: #{_bilstm_layer_impl.1} parent=1 // pred_region
      %33 = dma.done [#allocation3], 16
    $region25: #{_bilstm_layer_impl.1} parent=1 // pred_fallthru
      _
    %34 = sfence
    %s35 = sld [smem:[#allocation2]]
    %v36 = vstv %s35
    %s37 = sld [smem:[#allocation2 + $0x1]]
    %v38 = vstv %s37
    %vm39 = vcmask 1040384
    %v40 = vsel %vm39, %v36, %v38
    %v41 = vld [vmem:[%s3] sm:$0xff]
    %v42 = vld [vmem:[%s3 + $0x8] sm:$0xff]
    %v43 = vld [vmem:[%s1] sm:$0x3]
    %vm44 = vcmask 130048
    %v46 = vsel %vm44, 0.0, 0
    %48 = vmatprep.subr.mxu0 0.0
    %49 = vmatpush1.msra.mxu0 0.0
    %50 = vmatprep.subr.mxu0 0.0
    %51 = vmatpush1.msra.mxu0 0.0
    %52 = vmatprep.subr.mxu0 0.0
    %53 = vmatpush1.msra.mxu0 0.0
    %54 = vmatprep.subr.mxu0 0.0
    %55 = vmatpush1.msra.mxu0 0.0
    %56 = vmatprep.subr.mxu0 0.0
    %57 = vmatpush1.msra.mxu0 0.0
    %58 = vmatprep.subr.mxu0 0.0
    %59 = vmatpush1.msra.mxu0 0.0
    %60 = vmatprep.subr.mxu0 0.0
    %61 = vmatpush1.msra.mxu0 0.0
    %62 = vmatprep.subr.mxu0 0.0
    %63 = vmatpush1.msra.mxu0 0.0
    %64 = vmatprep.subr.mxu0 0.0
    %65 = vmatpush1.msra.mxu0 0.0
    %66 = vmatprep.subr.mxu0 0.0
    %67 = vmatpush1.msra.mxu0 0.0
    %68 = vmatprep.subr.mxu0 0.0
    %69 = vmatpush1.msra.mxu0 0.0
    %70 = vmatprep.subr.mxu0 0.0
    %71 = vmatpush1.msra.mxu0 0.0
    %72 = vmatprep.subr.mxu0 0.0
    %73 = vmatpush1.msra.mxu0 0.0
    %74 = vmatprep.subr.mxu0 0.0
    %75 = vmatpush1.msra.mxu0 0.0
    %76 = vmatprep.subr.mxu0 0.0
    %77 = vmatpush1.msra.mxu0 %v42
    %78 = vmatprep.subr.mxu0 0.0
    %79 = vmatpush1.msra.mxu0 %v41
    %80 = vmatprep.subr.mxu0 0.0
    %81 = vmatpush2.msra.mxu0 0.0
    %82 = vmatprep.subr.mxu0 0.0
    %83 = vmatpush2.msra.mxu0 0.0
    %84 = vmatprep.subr.mxu0 0.0
    %85 = vmatpush2.msra.mxu0 0.0
    %86 = vmatprep.subr.mxu0 0.0
    %87 = vmatpush2.msra.mxu0 0.0
    %88 = vmatprep.subr.mxu0 0.0
    %89 = vmatpush2.msra.mxu0 0.0
    %90 = vmatprep.subr.mxu0 0.0
    %91 = vmatpush2.msra.mxu0 0.0
    %92 = vmatprep.subr.mxu0 0.0
    %93 = vmatpush2.msra.mxu0 0.0
    %94 = vmatprep.subr.mxu0 0.0
    %95 = vmatpush2.msra.mxu0 0.0
    %96 = vmatprep.subr.mxu0 0.0
    %97 = vmatpush2.msra.mxu0 0.0
    %98 = vmatprep.subr.mxu0 0.0
    %99 = vmatpush2.msra.mxu0 0.0
    %100 = vmatprep.subr.mxu0 0.0
    %101 = vmatpush2.msra.mxu0 0.0
    %102 = vmatprep.subr.mxu0 0.0
    %103 = vmatpush2.msra.mxu0 0.0
    %104 = vmatprep.subr.mxu0 0.0
    %105 = vmatpush2.msra.mxu0 0.0
    %106 = vmatprep.subr.mxu0 0.0
    %107 = vmatpush2.msra.mxu0 0.0
    %108 = vmatprep.subr.mxu0 0.0
    %109 = vmatpush2.msra.mxu0 0.0
    %110 = vmatprep.subr.mxu0 0.0
    %111 = vmatpush2.msra.mxu0 0.0
    %112 = vmatprep.mubr.f32.mxu0 0.0
    %113 = vmatmul.mubr.f32.gmra.mxu0 %v46
    %v114 = vpop.f32.mrf.mxu0
    %v115 = vadd.f32 0.0, %v114
    %v116 = vpop.f32.mrf.mxu0
    %117 = vdwg.mxu0
    %v118 = vadd.f32 %v43, %v115
    %v119 = vxor.u32 %v118, 2147483648
    %v120 = vmul.f32 %v119, 1.442695
    %v121 = vpow.pop %v120
    %v122 = vadd.f32 %v121, 1.0
    %v123 = vrcp.pop %v122
    %v124 = vmul.f32 1.0, %v123
    %v125 = vtanh.pop %v118
    %v126 = vmul.f32 %v124, 0.0
    %128 = vrot.lane.b32.xlu0 %v125, 96
    %v129 = vpop.permute.xlu0 %128
    %v131 = vmul.f32 %v124, %v129
    %133 = vrot.lane.b32.xlu0 %v131, 16
    %v134 = vpop.permute.xlu0 %133
    %v136 = vadd.f32 %v126, %v134
    %v137 = vtanh.pop %v136
    %139 = vrot.lane.b32.xlu0 %v137, 32
    %v140 = vpop.permute.xlu0 %139
    %v142 = vmul.f32 %v124, %v140
    %vm143 = vcmp.gt.s32.totalorder %v40, 0
    %v144 = vsel %vm143, 1, 0
    %145 = vset.pattern.permute.xlu0 0
    %146 = vperm.xlu0 %145, %v144
    %v147 = vpop.permute.xlu0 %146
    %vm148 = vcmp.eq.s32.totalorder %v147, 1
    %v149 = vsel %vm148, %v142, 0.0
    %151 = vrot.lane.b32.xlu0 %v149, 80
    %v152 = vpop.permute.xlu0 %151
    %vm154 = vcmask 123904
    %155 = vst.msk [vmem:[%s5] sm:$0x3] %vm154, %v152
    %v156 = vsel %vm148, %v136, 0.0
    %s157 = scalar_lea.vmem %s1, 2
    %v158 = vld [vmem:[%s157] sm:$0x3]
    %v159 = vsel %vm44, %v152, 0
    %161 = vmatprep.subr.mxu0 0.0
    %162 = vmatpush1.msra.mxu0 0.0
    %163 = vmatprep.subr.mxu0 0.0
    %164 = vmatpush1.msra.mxu0 0.0
    %165 = vmatprep.subr.mxu0 0.0
    %166 = vmatpush1.msra.mxu0 0.0
    %167 = vmatprep.subr.mxu0 0.0
    %168 = vmatpush1.msra.mxu0 0.0
    %169 = vmatprep.subr.mxu0 0.0
    %170 = vmatpush1.msra.mxu0 0.0
    %171 = vmatprep.subr.mxu0 0.0
    %172 = vmatpush1.msra.mxu0 0.0
    %173 = vmatprep.subr.mxu0 0.0
    %174 = vmatpush1.msra.mxu0 0.0
    %175 = vmatprep.subr.mxu0 0.0
    %176 = vmatpush1.msra.mxu0 0.0
    %177 = vmatprep.subr.mxu0 0.0
    %178 = vmatpush1.msra.mxu0 0.0
    %179 = vmatprep.subr.mxu0 0.0
    %180 = vmatpush1.msra.mxu0 0.0
    %181 = vmatprep.subr.mxu0 0.0
    %182 = vmatpush1.msra.mxu0 0.0
    %183 = vmatprep.subr.mxu0 0.0
    %184 = vmatpush1.msra.mxu0 0.0
    %185 = vmatprep.subr.mxu0 0.0
    %186 = vmatpush1.msra.mxu0 0.0
    %187 = vmatprep.subr.mxu0 0.0
    %188 = vmatpush1.msra.mxu0 0.0
    %189 = vmatprep.subr.mxu0 0.0
    %190 = vmatpush1.msra.mxu0 %v42
    %191 = vmatprep.subr.mxu0 0.0
    %192 = vmatpush1.msra.mxu0 %v41
    %193 = vmatprep.subr.mxu0 0.0
    %194 = vmatpush2.msra.mxu0 0.0
    %195 = vmatprep.subr.mxu0 0.0
    %196 = vmatpush2.msra.mxu0 0.0
    %197 = vmatprep.subr.mxu0 0.0
    %198 = vmatpush2.msra.mxu0 0.0
    %199 = vmatprep.subr.mxu0 0.0
    %200 = vmatpush2.msra.mxu0 0.0
    %201 = vmatprep.subr.mxu0 0.0
    %202 = vmatpush2.msra.mxu0 0.0
    %203 = vmatprep.subr.mxu0 0.0
    %204 = vmatpush2.msra.mxu0 0.0
    %205 = vmatprep.subr.mxu0 0.0
    %206 = vmatpush2.msra.mxu0 0.0
    %207 = vmatprep.subr.mxu0 0.0
    %208 = vmatpush2.msra.mxu0 0.0
    %209 = vmatprep.subr.mxu0 0.0
    %210 = vmatpush2.msra.mxu0 0.0
    %211 = vmatprep.subr.mxu0 0.0
    %212 = vmatpush2.msra.mxu0 0.0
    %213 = vmatprep.subr.mxu0 0.0
    %214 = vmatpush2.msra.mxu0 0.0
    %215 = vmatprep.subr.mxu0 0.0
    %216 = vmatpush2.msra.mxu0 0.0
    %217 = vmatprep.subr.mxu0 0.0
    %218 = vmatpush2.msra.mxu0 0.0
    %219 = vmatprep.subr.mxu0 0.0
    %220 = vmatpush2.msra.mxu0 0.0
    %221 = vmatprep.subr.mxu0 0.0
    %222 = vmatpush2.msra.mxu0 0.0
    %223 = vmatprep.subr.mxu0 0.0
    %224 = vmatpush2.msra.mxu0 0.0
    %225 = vmatprep.mubr.f32.mxu0 0.0
    %226 = vmatmul.mubr.f32.gmra.mxu0 %v159
    %v227 = vpop.f32.mrf.mxu0
    %v228 = vadd.f32 0.0, %v227
    %v229 = vpop.f32.mrf.mxu0
    %230 = vdwg.mxu0
    %v231 = vadd.f32 %v158, %v228
    %v232 = vxor.u32 %v231, 2147483648
    %v233 = vmul.f32 %v232, 1.442695
    %v234 = vpow.pop %v233
    %v235 = vadd.f32 %v234, 1.0
    %v236 = vrcp.pop %v235
    %v237 = vmul.f32 1.0, %v236
    %v238 = vtanh.pop %v231
    %v239 = vmul.f32 %v237, %v156
    %241 = vrot.lane.b32.xlu0 %v238, 96
    %v242 = vpop.permute.xlu0 %241
    %v244 = vmul.f32 %v237, %v242
    %246 = vrot.lane.b32.xlu0 %v244, 16
    %v247 = vpop.permute.xlu0 %246
    %v249 = vadd.f32 %v239, %v247
    %v250 = vtanh.pop %v249
    %252 = vrot.lane.b32.xlu0 %v250, 32
    %v253 = vpop.permute.xlu0 %252
    %v255 = vmul.f32 %v237, %v253
    %vm256 = vcmp.gt.s32.totalorder %v40, 1
    %v257 = vsel %vm256, 1, 0
    %258 = vset.pattern.permute.xlu0 0
    %259 = vperm.xlu0 %258, %v257
    %v260 = vpop.permute.xlu0 %259
    %vm261 = vcmp.eq.s32.totalorder %v260, 1
    %v262 = vsel %vm261, %v255, 0.0
    %264 = vrot.lane.b32.xlu0 %v262, 80
    %v265 = vpop.permute.xlu0 %264
    %s267 = scalar_lea.vmem %s5, 2
    %268 = vst.msk [vmem:[%s267] sm:$0x3] %vm154, %v265
    %v269 = vsel %vm261, %v255, %v149
    %v270 = vsel %vm261, %v249, %v156
    %s271 = scalar_lea.vmem %s1, 4
    %v272 = vld [vmem:[%s271] sm:$0x3]
    %274 = vrot.lane.b32.xlu0 %v269, 80
    %v275 = vpop.permute.xlu0 %274
    %v276 = vsel %vm44, %v275, 0
    %278 = vmatprep.subr.mxu0 0.0
    %279 = vmatpush1.msra.mxu0 0.0
    %280 = vmatprep.subr.mxu0 0.0
    %281 = vmatpush1.msra.mxu0 0.0
    %282 = vmatprep.subr.mxu0 0.0
    %283 = vmatpush1.msra.mxu0 0.0
    %284 = vmatprep.subr.mxu0 0.0
    %285 = vmatpush1.msra.mxu0 0.0
    %286 = vmatprep.subr.mxu0 0.0
    %287 = vmatpush1.msra.mxu0 0.0
    %288 = vmatprep.subr.mxu0 0.0
    %289 = vmatpush1.msra.mxu0 0.0
    %290 = vmatprep.subr.mxu0 0.0
    %291 = vmatpush1.msra.mxu0 0.0
    %292 = vmatprep.subr.mxu0 0.0
    %293 = vmatpush1.msra.mxu0 0.0
    %294 = vmatprep.subr.mxu0 0.0
    %295 = vmatpush1.msra.mxu0 0.0
    %296 = vmatprep.subr.mxu0 0.0
    %297 = vmatpush1.msra.mxu0 0.0
    %298 = vmatprep.subr.mxu0 0.0
    %299 = vmatpush1.msra.mxu0 0.0
    %300 = vmatprep.subr.mxu0 0.0
    %301 = vmatpush1.msra.mxu0 0.0
    %302 = vmatprep.subr.mxu0 0.0
    %303 = vmatpush1.msra.mxu0 0.0
    %304 = vmatprep.subr.mxu0 0.0
    %305 = vmatpush1.msra.mxu0 0.0
    %306 = vmatprep.subr.mxu0 0.0
    %307 = vmatpush1.msra.mxu0 %v42
    %308 = vmatprep.subr.mxu0 0.0
    %309 = vmatpush1.msra.mxu0 %v41
    %310 = vmatprep.subr.mxu0 0.0
    %311 = vmatpush2.msra.mxu0 0.0
    %312 = vmatprep.subr.mxu0 0.0
    %313 = vmatpush2.msra.mxu0 0.0
    %314 = vmatprep.subr.mxu0 0.0
    %315 = vmatpush2.msra.mxu0 0.0
    %316 = vmatprep.subr.mxu0 0.0
    %317 = vmatpush2.msra.mxu0 0.0
    %318 = vmatprep.subr.mxu0 0.0
    %319 = vmatpush2.msra.mxu0 0.0
    %320 = vmatprep.subr.mxu0 0.0
    %321 = vmatpush2.msra.mxu0 0.0
    %322 = vmatprep.subr.mxu0 0.0
    %323 = vmatpush2.msra.mxu0 0.0
    %324 = vmatprep.subr.mxu0 0.0
    %325 = vmatpush2.msra.mxu0 0.0
    %326 = vmatprep.subr.mxu0 0.0
    %327 = vmatpush2.msra.mxu0 0.0
    %328 = vmatprep.subr.mxu0 0.0
    %329 = vmatpush2.msra.mxu0 0.0
    %330 = vmatprep.subr.mxu0 0.0
    %331 = vmatpush2.msra.mxu0 0.0
    %332 = vmatprep.subr.mxu0 0.0
    %333 = vmatpush2.msra.mxu0 0.0
    %334 = vmatprep.subr.mxu0 0.0
    %335 = vmatpush2.msra.mxu0 0.0
    %336 = vmatprep.subr.mxu0 0.0
    %337 = vmatpush2.msra.mxu0 0.0
    %338 = vmatprep.subr.mxu0 0.0
    %339 = vmatpush2.msra.mxu0 0.0
    %340 = vmatprep.subr.mxu0 0.0
    %341 = vmatpush2.msra.mxu0 0.0
    %342 = vmatprep.mubr.f32.mxu0 0.0
    %343 = vmatmul.mubr.f32.gmra.mxu0 %v276
    %v344 = vpop.f32.mrf.mxu0
    %v345 = vadd.f32 0.0, %v344
    %v346 = vpop.f32.mrf.mxu0
    %347 = vdwg.mxu0
    %v348 = vadd.f32 %v272, %v345
    %v349 = vxor.u32 %v348, 2147483648
    %v350 = vmul.f32 %v349, 1.442695
    %v351 = vpow.pop %v350
    %v352 = vadd.f32 %v351, 1.0
    %v353 = vrcp.pop %v352
    %v354 = vmul.f32 1.0, %v353
    %v355 = vtanh.pop %v348
    %v356 = vmul.f32 %v354, %v270
    %358 = vrot.lane.b32.xlu0 %v355, 96
    %v359 = vpop.permute.xlu0 %358
    %v361 = vmul.f32 %v354, %v359
    %363 = vrot.lane.b32.xlu0 %v361, 16
    %v364 = vpop.permute.xlu0 %363
    %v366 = vadd.f32 %v356, %v364
    %v367 = vtanh.pop %v366
    %369 = vrot.lane.b32.xlu0 %v367, 32
    %v370 = vpop.permute.xlu0 %369
    %v372 = vmul.f32 %v354, %v370
    %vm373 = vcmp.gt.s32.totalorder %v40, 2
    %v374 = vsel %vm373, 1, 0
    %375 = vset.pattern.permute.xlu0 0
    %376 = vperm.xlu0 %375, %v374
    %v377 = vpop.permute.xlu0 %376
    %vm378 = vcmp.eq.s32.totalorder %v377, 1
    %v379 = vsel %vm378, %v372, 0.0
    %381 = vrot.lane.b32.xlu0 %v379, 80
    %v382 = vpop.permute.xlu0 %381
    %s384 = scalar_lea.vmem %s5, 4
    %385 = vst.msk [vmem:[%s384] sm:$0x3] %vm154, %v382
    %v386 = vsel %vm378, %v372, %v269
    %v387 = vsel %vm378, %v366, %v270
    %s388 = scalar_lea.vmem %s1, 6
    %v389 = vld [vmem:[%s388] sm:$0x3]
    %391 = vrot.lane.b32.xlu0 %v386, 80
    %v392 = vpop.permute.xlu0 %391
    %v393 = vsel %vm44, %v392, 0
    %395 = vmatprep.subr.mxu0 0.0
    %396 = vmatpush1.msra.mxu0 0.0
    %397 = vmatprep.subr.mxu0 0.0
    %398 = vmatpush1.msra.mxu0 0.0
    %399 = vmatprep.subr.mxu0 0.0
    %400 = vmatpush1.msra.mxu0 0.0
    %401 = vmatprep.subr.mxu0 0.0
    %402 = vmatpush1.msra.mxu0 0.0
    %403 = vmatprep.subr.mxu0 0.0
    %404 = vmatpush1.msra.mxu0 0.0
    %405 = vmatprep.subr.mxu0 0.0
    %406 = vmatpush1.msra.mxu0 0.0
    %407 = vmatprep.subr.mxu0 0.0
    %408 = vmatpush1.msra.mxu0 0.0
    %409 = vmatprep.subr.mxu0 0.0
    %410 = vmatpush1.msra.mxu0 0.0
    %411 = vmatprep.subr.mxu0 0.0
    %412 = vmatpush1.msra.mxu0 0.0
    %413 = vmatprep.subr.mxu0 0.0
    %414 = vmatpush1.msra.mxu0 0.0
    %415 = vmatprep.subr.mxu0 0.0
    %416 = vmatpush1.msra.mxu0 0.0
    %417 = vmatprep.subr.mxu0 0.0
    %418 = vmatpush1.msra.mxu0 0.0
    %419 = vmatprep.subr.mxu0 0.0
    %420 = vmatpush1.msra.mxu0 0.0
    %421 = vmatprep.subr.mxu0 0.0
    %422 = vmatpush1.msra.mxu0 0.0
    %423 = vmatprep.subr.mxu0 0.0
    %424 = vmatpush1.msra.mxu0 %v42
    %425 = vmatprep.subr.mxu0 0.0
    %426 = vmatpush1.msra.mxu0 %v41
    %427 = vmatprep.subr.mxu0 0.0
    %428 = vmatpush2.msra.mxu0 0.0
    %429 = vmatprep.subr.mxu0 0.0
    %430 = vmatpush2.msra.mxu0 0.0
    %431 = vmatprep.subr.mxu0 0.0
    %432 = vmatpush2.msra.mxu0 0.0
    %433 = vmatprep.subr.mxu0 0.0
    %434 = vmatpush2.msra.mxu0 0.0
    %435 = vmatprep.subr.mxu0 0.0
    %436 = vmatpush2.msra.mxu0 0.0
    %437 = vmatprep.subr.mxu0 0.0
    %438 = vmatpush2.msra.mxu0 0.0
    %439 = vmatprep.subr.mxu0 0.0
    %440 = vmatpush2.msra.mxu0 0.0
    %441 = vmatprep.subr.mxu0 0.0
    %442 = vmatpush2.msra.mxu0 0.0
    %443 = vmatprep.subr.mxu0 0.0
    %444 = vmatpush2.msra.mxu0 0.0
    %445 = vmatprep.subr.mxu0 0.0
    %446 = vmatpush2.msra.mxu0 0.0
    %447 = vmatprep.subr.mxu0 0.0
    %448 = vmatpush2.msra.mxu0 0.0
    %449 = vmatprep.subr.mxu0 0.0
    %450 = vmatpush2.msra.mxu0 0.0
    %451 = vmatprep.subr.mxu0 0.0
    %452 = vmatpush2.msra.mxu0 0.0
    %453 = vmatprep.subr.mxu0 0.0
    %454 = vmatpush2.msra.mxu0 0.0
    %455 = vmatprep.subr.mxu0 0.0
    %456 = vmatpush2.msra.mxu0 0.0
    %457 = vmatprep.subr.mxu0 0.0
    %458 = vmatpush2.msra.mxu0 0.0
    %459 = vmatprep.mubr.f32.mxu0 0.0
    %460 = vmatmul.mubr.f32.gmra.mxu0 %v393
    %v461 = vpop.f32.mrf.mxu0
    %v462 = vadd.f32 0.0, %v461
    %v463 = vpop.f32.mrf.mxu0
    %464 = vdwg.mxu0
    %v465 = vadd.f32 %v389, %v462
    %v466 = vxor.u32 %v465, 2147483648
    %v467 = vmul.f32 %v466, 1.442695
    %v468 = vpow.pop %v467
    %v469 = vadd.f32 %v468, 1.0
    %v470 = vrcp.pop %v469
    %v471 = vmul.f32 1.0, %v470
    %v472 = vtanh.pop %v465
    %v473 = vmul.f32 %v471, %v387
    %475 = vrot.lane.b32.xlu0 %v472, 96
    %v476 = vpop.permute.xlu0 %475
    %v478 = vmul.f32 %v471, %v476
    %480 = vrot.lane.b32.xlu0 %v478, 16
    %v481 = vpop.permute.xlu0 %480
    %v483 = vadd.f32 %v473, %v481
    %v484 = vtanh.pop %v483
    %486 = vrot.lane.b32.xlu0 %v484, 32
    %v487 = vpop.permute.xlu0 %486
    %v489 = vmul.f32 %v471, %v487
    %vm490 = vcmp.gt.s32.totalorder %v40, 3
    %v491 = vsel %vm490, 1, 0
    %492 = vset.pattern.permute.xlu0 0
    %493 = vperm.xlu0 %492, %v491
    %v494 = vpop.permute.xlu0 %493
    %vm495 = vcmp.eq.s32.totalorder %v494, 1
    %v496 = vsel %vm495, %v489, 0.0
    %498 = vrot.lane.b32.xlu0 %v496, 80
    %v499 = vpop.permute.xlu0 %498
    %s501 = scalar_lea.vmem %s5, 6
    %502 = vst.msk [vmem:[%s501] sm:$0x3] %vm154, %v499
    %v503 = vsel %vm495, %v489, %v386
    %v504 = vsel %vm495, %v483, %v387
    %s505 = scalar_lea.vmem %s1, 8
    %v506 = vld [vmem:[%s505] sm:$0x3]
    %508 = vrot.lane.b32.xlu0 %v503, 80
    %v509 = vpop.permute.xlu0 %508
    %v510 = vsel %vm44, %v509, 0
    %512 = vmatprep.subr.mxu0 0.0
    %513 = vmatpush1.msra.mxu0 0.0
    %514 = vmatprep.subr.mxu0 0.0
    %515 = vmatpush1.msra.mxu0 0.0
    %516 = vmatprep.subr.mxu0 0.0
    %517 = vmatpush1.msra.mxu0 0.0
    %518 = vmatprep.subr.mxu0 0.0
    %519 = vmatpush1.msra.mxu0 0.0
    %520 = vmatprep.subr.mxu0 0.0
    %521 = vmatpush1.msra.mxu0 0.0
    %522 = vmatprep.subr.mxu0 0.0
    %523 = vmatpush1.msra.mxu0 0.0
    %524 = vmatprep.subr.mxu0 0.0
    %525 = vmatpush1.msra.mxu0 0.0
    %526 = vmatprep.subr.mxu0 0.0
    %527 = vmatpush1.msra.mxu0 0.0
    %528 = vmatprep.subr.mxu0 0.0
    %529 = vmatpush1.msra.mxu0 0.0
    %530 = vmatprep.subr.mxu0 0.0
    %531 = vmatpush1.msra.mxu0 0.0
    %532 = vmatprep.subr.mxu0 0.0
    %533 = vmatpush1.msra.mxu0 0.0
    %534 = vmatprep.subr.mxu0 0.0
    %535 = vmatpush1.msra.mxu0 0.0
    %536 = vmatprep.subr.mxu0 0.0
    %537 = vmatpush1.msra.mxu0 0.0
    %538 = vmatprep.subr.mxu0 0.0
    %539 = vmatpush1.msra.mxu0 0.0
    %540 = vmatprep.subr.mxu0 0.0
    %541 = vmatpush1.msra.mxu0 %v42
    %542 = vmatprep.subr.mxu0 0.0
    %543 = vmatpush1.msra.mxu0 %v41
    %544 = vmatprep.subr.mxu0 0.0
    %545 = vmatpush2.msra.mxu0 0.0
    %546 = vmatprep.subr.mxu0 0.0
    %547 = vmatpush2.msra.mxu0 0.0
    %548 = vmatprep.subr.mxu0 0.0
    %549 = vmatpush2.msra.mxu0 0.0
    %550 = vmatprep.subr.mxu0 0.0
    %551 = vmatpush2.msra.mxu0 0.0
    %552 = vmatprep.subr.mxu0 0.0
    %553 = vmatpush2.msra.mxu0 0.0
    %554 = vmatprep.subr.mxu0 0.0
    %555 = vmatpush2.msra.mxu0 0.0
    %556 = vmatprep.subr.mxu0 0.0
    %557 = vmatpush2.msra.mxu0 0.0
    %558 = vmatprep.subr.mxu0 0.0
    %559 = vmatpush2.msra.mxu0 0.0
    %560 = vmatprep.subr.mxu0 0.0
    %561 = vmatpush2.msra.mxu0 0.0
    %562 = vmatprep.subr.mxu0 0.0
    %563 = vmatpush2.msra.mxu0 0.0
    %564 = vmatprep.subr.mxu0 0.0
    %565 = vmatpush2.msra.mxu0 0.0
    %566 = vmatprep.subr.mxu0 0.0
    %567 = vmatpush2.msra.mxu0 0.0
    %568 = vmatprep.subr.mxu0 0.0
    %569 = vmatpush2.msra.mxu0 0.0
    %570 = vmatprep.subr.mxu0 0.0
    %571 = vmatpush2.msra.mxu0 0.0
    %572 = vmatprep.subr.mxu0 0.0
    %573 = vmatpush2.msra.mxu0 0.0
    %574 = vmatprep.subr.mxu0 0.0
    %575 = vmatpush2.msra.mxu0 0.0
    %576 = vmatprep.mubr.f32.mxu0 0.0
    %577 = vmatmul.mubr.f32.gmra.mxu0 %v510
    %v578 = vpop.f32.mrf.mxu0
    %v579 = vadd.f32 0.0, %v578
    %v580 = vpop.f32.mrf.mxu0
    %581 = vdwg.mxu0
    %v582 = vadd.f32 %v506, %v579
    %v583 = vxor.u32 %v582, 2147483648
    %v584 = vmul.f32 %v583, 1.442695
    %v585 = vpow.pop %v584
    %v586 = vadd.f32 %v585, 1.0
    %v587 = vrcp.pop %v586
    %v588 = vmul.f32 1.0, %v587
    %v589 = vtanh.pop %v582
    %v590 = vmul.f32 %v588, %v504
    %592 = vrot.lane.b32.xlu0 %v589, 96
    %v593 = vpop.permute.xlu0 %592
    %v595 = vmul.f32 %v588, %v593
    %597 = vrot.lane.b32.xlu0 %v595, 16
    %v598 = vpop.permute.xlu0 %597
    %v600 = vadd.f32 %v590, %v598
    %v601 = vtanh.pop %v600
    %603 = vrot.lane.b32.xlu0 %v601, 32
    %v604 = vpop.permute.xlu0 %603
    %v606 = vmul.f32 %v588, %v604
    %vm607 = vcmp.gt.s32.totalorder %v40, 4
    %v608 = vsel %vm607, 1, 0
    %609 = vset.pattern.permute.xlu0 0
    %610 = vperm.xlu0 %609, %v608
    %v611 = vpop.permute.xlu0 %610
    %vm612 = vcmp.eq.s32.totalorder %v611, 1
    %v613 = vsel %vm612, %v606, 0.0
    %615 = vrot.lane.b32.xlu0 %v613, 80
    %v616 = vpop.permute.xlu0 %615
    %s618 = scalar_lea.vmem %s5, 8
    %619 = vst.msk [vmem:[%s618] sm:$0x3] %vm154, %v616
    %v620 = vsel %vm612, %v606, %v503
    %v621 = vsel %vm612, %v600, %v504
    %s622 = scalar_lea.vmem %s1, 10
    %v623 = vld [vmem:[%s622] sm:$0x3]
    %625 = vrot.lane.b32.xlu0 %v620, 80
    %v626 = vpop.permute.xlu0 %625
    %v627 = vsel %vm44, %v626, 0
    %629 = vmatprep.subr.mxu0 0.0
    %630 = vmatpush1.msra.mxu0 0.0
    %631 = vmatprep.subr.mxu0 0.0
    %632 = vmatpush1.msra.mxu0 0.0
    %633 = vmatprep.subr.mxu0 0.0
    %634 = vmatpush1.msra.mxu0 0.0
    %635 = vmatprep.subr.mxu0 0.0
    %636 = vmatpush1.msra.mxu0 0.0
    %637 = vmatprep.subr.mxu0 0.0
    %638 = vmatpush1.msra.mxu0 0.0
    %639 = vmatprep.subr.mxu0 0.0
    %640 = vmatpush1.msra.mxu0 0.0
    %641 = vmatprep.subr.mxu0 0.0
    %642 = vmatpush1.msra.mxu0 0.0
    %643 = vmatprep.subr.mxu0 0.0
    %644 = vmatpush1.msra.mxu0 0.0
    %645 = vmatprep.subr.mxu0 0.0
    %646 = vmatpush1.msra.mxu0 0.0
    %647 = vmatprep.subr.mxu0 0.0
    %648 = vmatpush1.msra.mxu0 0.0
    %649 = vmatprep.subr.mxu0 0.0
    %650 = vmatpush1.msra.mxu0 0.0
    %651 = vmatprep.subr.mxu0 0.0
    %652 = vmatpush1.msra.mxu0 0.0
    %653 = vmatprep.subr.mxu0 0.0
    %654 = vmatpush1.msra.mxu0 0.0
    %655 = vmatprep.subr.mxu0 0.0
    %656 = vmatpush1.msra.mxu0 0.0
    %657 = vmatprep.subr.mxu0 0.0
    %658 = vmatpush1.msra.mxu0 %v42
    %659 = vmatprep.subr.mxu0 0.0
    %660 = vmatpush1.msra.mxu0 %v41
    %661 = vmatprep.subr.mxu0 0.0
    %662 = vmatpush2.msra.mxu0 0.0
    %663 = vmatprep.subr.mxu0 0.0
    %664 = vmatpush2.msra.mxu0 0.0
    %665 = vmatprep.subr.mxu0 0.0
    %666 = vmatpush2.msra.mxu0 0.0
    %667 = vmatprep.subr.mxu0 0.0
    %668 = vmatpush2.msra.mxu0 0.0
    %669 = vmatprep.subr.mxu0 0.0
    %670 = vmatpush2.msra.mxu0 0.0
    %671 = vmatprep.subr.mxu0 0.0
    %672 = vmatpush2.msra.mxu0 0.0
    %673 = vmatprep.subr.mxu0 0.0
    %674 = vmatpush2.msra.mxu0 0.0
    %675 = vmatprep.subr.mxu0 0.0
    %676 = vmatpush2.msra.mxu0 0.0
    %677 = vmatprep.subr.mxu0 0.0
    %678 = vmatpush2.msra.mxu0 0.0
    %679 = vmatprep.subr.mxu0 0.0
    %680 = vmatpush2.msra.mxu0 0.0
    %681 = vmatprep.subr.mxu0 0.0
    %682 = vmatpush2.msra.mxu0 0.0
    %683 = vmatprep.subr.mxu0 0.0
    %684 = vmatpush2.msra.mxu0 0.0
    %685 = vmatprep.subr.mxu0 0.0
    %686 = vmatpush2.msra.mxu0 0.0
    %687 = vmatprep.subr.mxu0 0.0
    %688 = vmatpush2.msra.mxu0 0.0
    %689 = vmatprep.subr.mxu0 0.0
    %690 = vmatpush2.msra.mxu0 0.0
    %691 = vmatprep.subr.mxu0 0.0
    %692 = vmatpush2.msra.mxu0 0.0
    %693 = vmatprep.mubr.f32.mxu0 0.0
    %694 = vmatmul.mubr.f32.gmra.mxu0 %v627
    %v695 = vpop.f32.mrf.mxu0
    %v696 = vadd.f32 0.0, %v695
    %v697 = vpop.f32.mrf.mxu0
    %698 = vdwg.mxu0
    %v699 = vadd.f32 %v623, %v696
    %v700 = vxor.u32 %v699, 2147483648
    %v701 = vmul.f32 %v700, 1.442695
    %v702 = vpow.pop %v701
    %v703 = vadd.f32 %v702, 1.0
    %v704 = vrcp.pop %v703
    %v705 = vmul.f32 1.0, %v704
    %v706 = vtanh.pop %v699
    %v707 = vmul.f32 %v705, %v621
    %709 = vrot.lane.b32.xlu0 %v706, 96
    %v710 = vpop.permute.xlu0 %709
    %v712 = vmul.f32 %v705, %v710
    %714 = vrot.lane.b32.xlu0 %v712, 16
    %v715 = vpop.permute.xlu0 %714
    %v717 = vadd.f32 %v707, %v715
    %v718 = vtanh.pop %v717
    %720 = vrot.lane.b32.xlu0 %v718, 32
    %v721 = vpop.permute.xlu0 %720
    %v723 = vmul.f32 %v705, %v721
    %vm724 = vcmp.gt.s32.totalorder %v40, 5
    %v725 = vsel %vm724, 1, 0
    %726 = vset.pattern.permute.xlu0 0
    %727 = vperm.xlu0 %726, %v725
    %v728 = vpop.permute.xlu0 %727
    %vm729 = vcmp.eq.s32.totalorder %v728, 1
    %v730 = vsel %vm729, %v723, 0.0
    %732 = vrot.lane.b32.xlu0 %v730, 80
    %v733 = vpop.permute.xlu0 %732
    %s735 = scalar_lea.vmem %s5, 10
    %736 = vst.msk [vmem:[%s735] sm:$0x3] %vm154, %v733
    %v737 = vsel %vm729, %v723, %v620
    %v738 = vsel %vm729, %v717, %v621
    %s739 = scalar_lea.vmem %s1, 12
    %v740 = vld [vmem:[%s739] sm:$0x3]
    %742 = vrot.lane.b32.xlu0 %v737, 80
    %v743 = vpop.permute.xlu0 %742
    %v744 = vsel %vm44, %v743, 0
    %746 = vmatprep.subr.mxu0 0.0
    %747 = vmatpush1.msra.mxu0 0.0
    %748 = vmatprep.subr.mxu0 0.0
    %749 = vmatpush1.msra.mxu0 0.0
    %750 = vmatprep.subr.mxu0 0.0
    %751 = vmatpush1.msra.mxu0 0.0
    %752 = vmatprep.subr.mxu0 0.0
    %753 = vmatpush1.msra.mxu0 0.0
    %754 = vmatprep.subr.mxu0 0.0
    %755 = vmatpush1.msra.mxu0 0.0
    %756 = vmatprep.subr.mxu0 0.0
    %757 = vmatpush1.msra.mxu0 0.0
    %758 = vmatprep.subr.mxu0 0.0
    %759 = vmatpush1.msra.mxu0 0.0
    %760 = vmatprep.subr.mxu0 0.0
    %761 = vmatpush1.msra.mxu0 0.0
    %762 = vmatprep.subr.mxu0 0.0
    %763 = vmatpush1.msra.mxu0 0.0
    %764 = vmatprep.subr.mxu0 0.0
    %765 = vmatpush1.msra.mxu0 0.0
    %766 = vmatprep.subr.mxu0 0.0
    %767 = vmatpush1.msra.mxu0 0.0
    %768 = vmatprep.subr.mxu0 0.0
    %769 = vmatpush1.msra.mxu0 0.0
    %770 = vmatprep.subr.mxu0 0.0
    %771 = vmatpush1.msra.mxu0 0.0
    %772 = vmatprep.subr.mxu0 0.0
    %773 = vmatpush1.msra.mxu0 0.0
    %774 = vmatprep.subr.mxu0 0.0
    %775 = vmatpush1.msra.mxu0 %v42
    %776 = vmatprep.subr.mxu0 0.0
    %777 = vmatpush1.msra.mxu0 %v41
    %778 = vmatprep.subr.mxu0 0.0
    %779 = vmatpush2.msra.mxu0 0.0
    %780 = vmatprep.subr.mxu0 0.0
    %781 = vmatpush2.msra.mxu0 0.0
    %782 = vmatprep.subr.mxu0 0.0
    %783 = vmatpush2.msra.mxu0 0.0
    %784 = vmatprep.subr.mxu0 0.0
    %785 = vmatpush2.msra.mxu0 0.0
    %786 = vmatprep.subr.mxu0 0.0
    %787 = vmatpush2.msra.mxu0 0.0
    %788 = vmatprep.subr.mxu0 0.0
    %789 = vmatpush2.msra.mxu0 0.0
    %790 = vmatprep.subr.mxu0 0.0
    %791 = vmatpush2.msra.mxu0 0.0
    %792 = vmatprep.subr.mxu0 0.0
    %793 = vmatpush2.msra.mxu0 0.0
    %794 = vmatprep.subr.mxu0 0.0
    %795 = vmatpush2.msra.mxu0 0.0
    %796 = vmatprep.subr.mxu0 0.0
    %797 = vmatpush2.msra.mxu0 0.0
    %798 = vmatprep.subr.mxu0 0.0
    %799 = vmatpush2.msra.mxu0 0.0
    %800 = vmatprep.subr.mxu0 0.0
    %801 = vmatpush2.msra.mxu0 0.0
    %802 = vmatprep.subr.mxu0 0.0
    %803 = vmatpush2.msra.mxu0 0.0
    %804 = vmatprep.subr.mxu0 0.0
    %805 = vmatpush2.msra.mxu0 0.0
    %806 = vmatprep.subr.mxu0 0.0
    %807 = vmatpush2.msra.mxu0 0.0
    %808 = vmatprep.subr.mxu0 0.0
    %809 = vmatpush2.msra.mxu0 0.0
    %810 = vmatprep.mubr.f32.mxu0 0.0
    %811 = vmatmul.mubr.f32.gmra.mxu0 %v744
    %v812 = vpop.f32.mrf.mxu0
    %v813 = vadd.f32 0.0, %v812
    %v814 = vpop.f32.mrf.mxu0
    %815 = vdwg.mxu0
    %v816 = vadd.f32 %v740, %v813
    %v817 = vxor.u32 %v816, 2147483648
    %v818 = vmul.f32 %v817, 1.442695
    %v819 = vpow.pop %v818
    %v820 = vadd.f32 %v819, 1.0
    %v821 = vrcp.pop %v820
    %v822 = vmul.f32 1.0, %v821
    %v823 = vtanh.pop %v816
    %v824 = vmul.f32 %v822, %v738
    %826 = vrot.lane.b32.xlu0 %v823, 96
    %v827 = vpop.permute.xlu0 %826
    %v829 = vmul.f32 %v822, %v827
    %831 = vrot.lane.b32.xlu0 %v829, 16
    %v832 = vpop.permute.xlu0 %831
    %v834 = vadd.f32 %v824, %v832
    %v835 = vtanh.pop %v834
    %837 = vrot.lane.b32.xlu0 %v835, 32
    %v838 = vpop.permute.xlu0 %837
    %v840 = vmul.f32 %v822, %v838
    %vm841 = vcmp.gt.s32.totalorder %v40, 6
    %v842 = vsel %vm841, 1, 0
    %843 = vset.pattern.permute.xlu0 0
    %844 = vperm.xlu0 %843, %v842
    %v845 = vpop.permute.xlu0 %844
    %vm846 = vcmp.eq.s32.totalorder %v845, 1
    %v847 = vsel %vm846, %v840, 0.0
    %849 = vrot.lane.b32.xlu0 %v847, 80
    %v850 = vpop.permute.xlu0 %849
    %s852 = scalar_lea.vmem %s5, 12
    %853 = vst.msk [vmem:[%s852] sm:$0x3] %vm154, %v850
    %v854 = vsel %vm846, %v840, %v737
    %v855 = vsel %vm846, %v834, %v738
    %s856 = scalar_lea.vmem %s1, 14
    %v857 = vld [vmem:[%s856] sm:$0x3]
    %859 = vrot.lane.b32.xlu0 %v854, 80
    %v860 = vpop.permute.xlu0 %859
    %v861 = vsel %vm44, %v860, 0
    %863 = vmatprep.subr.mxu0 0.0
    %864 = vmatpush1.msra.mxu0 0.0
    %865 = vmatprep.subr.mxu0 0.0
    %866 = vmatpush1.msra.mxu0 0.0
    %867 = vmatprep.subr.mxu0 0.0
    %868 = vmatpush1.msra.mxu0 0.0
    %869 = vmatprep.subr.mxu0 0.0
    %870 = vmatpush1.msra.mxu0 0.0
    %871 = vmatprep.subr.mxu0 0.0
    %872 = vmatpush1.msra.mxu0 0.0
    %873 = vmatprep.subr.mxu0 0.0
    %874 = vmatpush1.msra.mxu0 0.0
    %875 = vmatprep.subr.mxu0 0.0
    %876 = vmatpush1.msra.mxu0 0.0
    %877 = vmatprep.subr.mxu0 0.0
    %878 = vmatpush1.msra.mxu0 0.0
    %879 = vmatprep.subr.mxu0 0.0
    %880 = vmatpush1.msra.mxu0 0.0
    %881 = vmatprep.subr.mxu0 0.0
    %882 = vmatpush1.msra.mxu0 0.0
    %883 = vmatprep.subr.mxu0 0.0
    %884 = vmatpush1.msra.mxu0 0.0
    %885 = vmatprep.subr.mxu0 0.0
    %886 = vmatpush1.msra.mxu0 0.0
    %887 = vmatprep.subr.mxu0 0.0
    %888 = vmatpush1.msra.mxu0 0.0
    %889 = vmatprep.subr.mxu0 0.0
    %890 = vmatpush1.msra.mxu0 0.0
    %891 = vmatprep.subr.mxu0 0.0
    %892 = vmatpush1.msra.mxu0 %v42
    %893 = vmatprep.subr.mxu0 0.0
    %894 = vmatpush1.msra.mxu0 %v41
    %895 = vmatprep.subr.mxu0 0.0
    %896 = vmatpush2.msra.mxu0 0.0
    %897 = vmatprep.subr.mxu0 0.0
    %898 = vmatpush2.msra.mxu0 0.0
    %899 = vmatprep.subr.mxu0 0.0
    %900 = vmatpush2.msra.mxu0 0.0
    %901 = vmatprep.subr.mxu0 0.0
    %902 = vmatpush2.msra.mxu0 0.0
    %903 = vmatprep.subr.mxu0 0.0
    %904 = vmatpush2.msra.mxu0 0.0
    %905 = vmatprep.subr.mxu0 0.0
    %906 = vmatpush2.msra.mxu0 0.0
    %907 = vmatprep.subr.mxu0 0.0
    %908 = vmatpush2.msra.mxu0 0.0
    %909 = vmatprep.subr.mxu0 0.0
    %910 = vmatpush2.msra.mxu0 0.0
    %911 = vmatprep.subr.mxu0 0.0
    %912 = vmatpush2.msra.mxu0 0.0
    %913 = vmatprep.subr.mxu0 0.0
    %914 = vmatpush2.msra.mxu0 0.0
    %915 = vmatprep.subr.mxu0 0.0
    %916 = vmatpush2.msra.mxu0 0.0
    %917 = vmatprep.subr.mxu0 0.0
    %918 = vmatpush2.msra.mxu0 0.0
    %919 = vmatprep.subr.mxu0 0.0
    %920 = vmatpush2.msra.mxu0 0.0
    %921 = vmatprep.subr.mxu0 0.0
    %922 = vmatpush2.msra.mxu0 0.0
    %923 = vmatprep.subr.mxu0 0.0
    %924 = vmatpush2.msra.mxu0 0.0
    %925 = vmatprep.subr.mxu0 0.0
    %926 = vmatpush2.msra.mxu0 0.0
    %927 = vmatprep.mubr.f32.mxu0 0.0
    %928 = vmatmul.mubr.f32.gmra.mxu0 %v861
    %v929 = vpop.f32.mrf.mxu0
    %v930 = vadd.f32 0.0, %v929
    %v931 = vpop.f32.mrf.mxu0
    %932 = vdwg.mxu0
    %v933 = vadd.f32 %v857, %v930
    %v934 = vxor.u32 %v933, 2147483648
    %v935 = vmul.f32 %v934, 1.442695
    %v936 = vpow.pop %v935
    %v937 = vadd.f32 %v936, 1.0
    %v938 = vrcp.pop %v937
    %v939 = vmul.f32 1.0, %v938
    %v940 = vtanh.pop %v933
    %v941 = vmul.f32 %v939, %v855
    %943 = vrot.lane.b32.xlu0 %v940, 96
    %v944 = vpop.permute.xlu0 %943
    %v946 = vmul.f32 %v939, %v944
    %948 = vrot.lane.b32.xlu0 %v946, 16
    %v949 = vpop.permute.xlu0 %948
    %v951 = vadd.f32 %v941, %v949
    %v952 = vtanh.pop %v951
    %954 = vrot.lane.b32.xlu0 %v952, 32
    %v955 = vpop.permute.xlu0 %954
    %v957 = vmul.f32 %v939, %v955
    %vm958 = vcmp.gt.s32.totalorder %v40, 7
    %v959 = vsel %vm958, 1, 0
    %960 = vset.pattern.permute.xlu0 0
    %961 = vperm.xlu0 %960, %v959
    %v962 = vpop.permute.xlu0 %961
    %vm963 = vcmp.eq.s32.totalorder %v962, 1
    %v964 = vsel %vm963, %v957, 0.0
    %966 = vrot.lane.b32.xlu0 %v964, 80
    %v967 = vpop.permute.xlu0 %966
    %s969 = scalar_lea.vmem %s5, 14
    %970 = vst.msk [vmem:[%s969] sm:$0x3] %vm154, %v967
    %v971 = vld [vmem:[%s4] sm:$0xff]
    %v972 = vld [vmem:[%s4 + $0x8] sm:$0xff]
    %s973 = scalar_lea.vmem %s2, 14
    %v974 = vld [vmem:[%s973] sm:$0x3]
    %975 = vmatprep.subr.mxu0 0.0
    %976 = vmatpush1.msra.mxu0 0.0
    %977 = vmatprep.subr.mxu0 0.0
    %978 = vmatpush1.msra.mxu0 0.0
    %979 = vmatprep.subr.mxu0 0.0
    %980 = vmatpush1.msra.mxu0 0.0
    %981 = vmatprep.subr.mxu0 0.0
    %982 = vmatpush1.msra.mxu0 0.0
    %983 = vmatprep.subr.mxu0 0.0
    %984 = vmatpush1.msra.mxu0 0.0
    %985 = vmatprep.subr.mxu0 0.0
    %986 = vmatpush1.msra.mxu0 0.0
    %987 = vmatprep.subr.mxu0 0.0
    %988 = vmatpush1.msra.mxu0 0.0
    %989 = vmatprep.subr.mxu0 0.0
    %990 = vmatpush1.msra.mxu0 0.0
    %991 = vmatprep.subr.mxu0 0.0
    %992 = vmatpush1.msra.mxu0 0.0
    %993 = vmatprep.subr.mxu0 0.0
    %994 = vmatpush1.msra.mxu0 0.0
    %995 = vmatprep.subr.mxu0 0.0
    %996 = vmatpush1.msra.mxu0 0.0
    %997 = vmatprep.subr.mxu0 0.0
    %998 = vmatpush1.msra.mxu0 0.0
    %999 = vmatprep.subr.mxu0 0.0
    %1000 = vmatpush1.msra.mxu0 0.0
    %1001 = vmatprep.subr.mxu0 0.0
    %1002 = vmatpush1.msra.mxu0 0.0
    %1003 = vmatprep.subr.mxu0 0.0
    %1004 = vmatpush1.msra.mxu0 %v972
    %1005 = vmatprep.subr.mxu0 0.0
    %1006 = vmatpush1.msra.mxu0 %v971
    %1007 = vmatprep.subr.mxu0 0.0
    %1008 = vmatpush2.msra.mxu0 0.0
    %1009 = vmatprep.subr.mxu0 0.0
    %1010 = vmatpush2.msra.mxu0 0.0
    %1011 = vmatprep.subr.mxu0 0.0
    %1012 = vmatpush2.msra.mxu0 0.0
    %1013 = vmatprep.subr.mxu0 0.0
    %1014 = vmatpush2.msra.mxu0 0.0
    %1015 = vmatprep.subr.mxu0 0.0
    %1016 = vmatpush2.msra.mxu0 0.0
    %1017 = vmatprep.subr.mxu0 0.0
    %1018 = vmatpush2.msra.mxu0 0.0
    %1019 = vmatprep.subr.mxu0 0.0
    %1020 = vmatpush2.msra.mxu0 0.0
    %1021 = vmatprep.subr.mxu0 0.0
    %1022 = vmatpush2.msra.mxu0 0.0
    %1023 = vmatprep.subr.mxu0 0.0
    %1024 = vmatpush2.msra.mxu0 0.0
    %1025 = vmatprep.subr.mxu0 0.0
    %1026 = vmatpush2.msra.mxu0 0.0
    %1027 = vmatprep.subr.mxu0 0.0
    %1028 = vmatpush2.msra.mxu0 0.0
    %1029 = vmatprep.subr.mxu0 0.0
    %1030 = vmatpush2.msra.mxu0 0.0
    %1031 = vmatprep.subr.mxu0 0.0
    %1032 = vmatpush2.msra.mxu0 0.0
    %1033 = vmatprep.subr.mxu0 0.0
    %1034 = vmatpush2.msra.mxu0 0.0
    %1035 = vmatprep.subr.mxu0 0.0
    %1036 = vmatpush2.msra.mxu0 0.0
    %1037 = vmatprep.subr.mxu0 0.0
    %1038 = vmatpush2.msra.mxu0 0.0
    %1039 = vmatprep.mubr.f32.mxu0 0.0
    %1040 = vmatmul.mubr.f32.gmra.mxu0 %v46
    %v1041 = vpop.f32.mrf.mxu0
    %v1042 = vadd.f32 0.0, %v1041
    %v1043 = vpop.f32.mrf.mxu0
    %1044 = vdwg.mxu0
    %v1045 = vadd.f32 %v974, %v1042
    %v1046 = vxor.u32 %v1045, 2147483648
    %v1047 = vmul.f32 %v1046, 1.442695
    %v1048 = vpow.pop %v1047
    %v1049 = vadd.f32 %v1048, 1.0
    %v1050 = vrcp.pop %v1049
    %v1051 = vmul.f32 1.0, %v1050
    %v1052 = vtanh.pop %v1045
    %v1053 = vmul.f32 %v1051, 0.0
    %1055 = vrot.lane.b32.xlu0 %v1052, 96
    %v1056 = vpop.permute.xlu0 %1055
    %v1058 = vmul.f32 %v1051, %v1056
    %1060 = vrot.lane.b32.xlu0 %v1058, 16
    %v1061 = vpop.permute.xlu0 %1060
    %v1063 = vadd.f32 %v1053, %v1061
    %v1064 = vtanh.pop %v1063
    %1066 = vrot.lane.b32.xlu0 %v1064, 32
    %v1067 = vpop.permute.xlu0 %1066
    %v1069 = vmul.f32 %v1051, %v1067
    %v1070 = vsel %vm963, %v1069, 0.0
    %1072 = vrot.lane.b32.xlu0 %v1070, 80
    %v1073 = vpop.permute.xlu0 %1072
    %s1075 = scalar_lea.vmem %s6, 14
    %1076 = vst.msk [vmem:[%s1075] sm:$0x3] %vm154, %v1073
    %v1077 = vsel %vm963, %v1063, 0.0
    %s1078 = scalar_lea.vmem %s2, 12
    %v1079 = vld [vmem:[%s1078] sm:$0x3]
    %v1080 = vsel %vm44, %v1073, 0
    %1082 = vmatprep.subr.mxu0 0.0
    %1083 = vmatpush1.msra.mxu0 0.0
    %1084 = vmatprep.subr.mxu0 0.0
    %1085 = vmatpush1.msra.mxu0 0.0
    %1086 = vmatprep.subr.mxu0 0.0
    %1087 = vmatpush1.msra.mxu0 0.0
    %1088 = vmatprep.subr.mxu0 0.0
    %1089 = vmatpush1.msra.mxu0 0.0
    %1090 = vmatprep.subr.mxu0 0.0
    %1091 = vmatpush1.msra.mxu0 0.0
    %1092 = vmatprep.subr.mxu0 0.0
    %1093 = vmatpush1.msra.mxu0 0.0
    %1094 = vmatprep.subr.mxu0 0.0
    %1095 = vmatpush1.msra.mxu0 0.0
    %1096 = vmatprep.subr.mxu0 0.0
    %1097 = vmatpush1.msra.mxu0 0.0
    %1098 = vmatprep.subr.mxu0 0.0
    %1099 = vmatpush1.msra.mxu0 0.0
    %1100 = vmatprep.subr.mxu0 0.0
    %1101 = vmatpush1.msra.mxu0 0.0
    %1102 = vmatprep.subr.mxu0 0.0
    %1103 = vmatpush1.msra.mxu0 0.0
    %1104 = vmatprep.subr.mxu0 0.0
    %1105 = vmatpush1.msra.mxu0 0.0
    %1106 = vmatprep.subr.mxu0 0.0
    %1107 = vmatpush1.msra.mxu0 0.0
    %1108 = vmatprep.subr.mxu0 0.0
    %1109 = vmatpush1.msra.mxu0 0.0
    %1110 = vmatprep.subr.mxu0 0.0
    %1111 = vmatpush1.msra.mxu0 %v972
    %1112 = vmatprep.subr.mxu0 0.0
    %1113 = vmatpush1.msra.mxu0 %v971
    %1114 = vmatprep.subr.mxu0 0.0
    %1115 = vmatpush2.msra.mxu0 0.0
    %1116 = vmatprep.subr.mxu0 0.0
    %1117 = vmatpush2.msra.mxu0 0.0
    %1118 = vmatprep.subr.mxu0 0.0
    %1119 = vmatpush2.msra.mxu0 0.0
    %1120 = vmatprep.subr.mxu0 0.0
    %1121 = vmatpush2.msra.mxu0 0.0
    %1122 = vmatprep.subr.mxu0 0.0
    %1123 = vmatpush2.msra.mxu0 0.0
    %1124 = vmatprep.subr.mxu0 0.0
    %1125 = vmatpush2.msra.mxu0 0.0
    %1126 = vmatprep.subr.mxu0 0.0
    %1127 = vmatpush2.msra.mxu0 0.0
    %1128 = vmatprep.subr.mxu0 0.0
    %1129 = vmatpush2.msra.mxu0 0.0
    %1130 = vmatprep.subr.mxu0 0.0
    %1131 = vmatpush2.msra.mxu0 0.0
    %1132 = vmatprep.subr.mxu0 0.0
    %1133 = vmatpush2.msra.mxu0 0.0
    %1134 = vmatprep.subr.mxu0 0.0
    %1135 = vmatpush2.msra.mxu0 0.0
    %1136 = vmatprep.subr.mxu0 0.0
    %1137 = vmatpush2.msra.mxu0 0.0
    %1138 = vmatprep.subr.mxu0 0.0
    %1139 = vmatpush2.msra.mxu0 0.0
    %1140 = vmatprep.subr.mxu0 0.0
    %1141 = vmatpush2.msra.mxu0 0.0
    %1142 = vmatprep.subr.mxu0 0.0
    %1143 = vmatpush2.msra.mxu0 0.0
    %1144 = vmatprep.subr.mxu0 0.0
    %1145 = vmatpush2.msra.mxu0 0.0
    %1146 = vmatprep.mubr.f32.mxu0 0.0
    %1147 = vmatmul.mubr.f32.gmra.mxu0 %v1080
    %v1148 = vpop.f32.mrf.mxu0
    %v1149 = vadd.f32 0.0, %v1148
    %v1150 = vpop.f32.mrf.mxu0
    %1151 = vdwg.mxu0
    %v1152 = vadd.f32 %v1079, %v1149
    %v1153 = vxor.u32 %v1152, 2147483648
    %v1154 = vmul.f32 %v1153, 1.442695
    %v1155 = vpow.pop %v1154
    %v1156 = vadd.f32 %v1155, 1.0
    %v1157 = vrcp.pop %v1156
    %v1158 = vmul.f32 1.0, %v1157
    %v1159 = vtanh.pop %v1152
    %v1160 = vmul.f32 %v1158, %v1077
    %1162 = vrot.lane.b32.xlu0 %v1159, 96
    %v1163 = vpop.permute.xlu0 %1162
    %v1165 = vmul.f32 %v1158, %v1163
    %1167 = vrot.lane.b32.xlu0 %v1165, 16
    %v1168 = vpop.permute.xlu0 %1167
    %v1170 = vadd.f32 %v1160, %v1168
    %v1171 = vtanh.pop %v1170
    %1173 = vrot.lane.b32.xlu0 %v1171, 32
    %v1174 = vpop.permute.xlu0 %1173
    %v1176 = vmul.f32 %v1158, %v1174
    %v1177 = vsel %vm846, %v1176, 0.0
    %1179 = vrot.lane.b32.xlu0 %v1177, 80
    %v1180 = vpop.permute.xlu0 %1179
    %s1182 = scalar_lea.vmem %s6, 12
    %1183 = vst.msk [vmem:[%s1182] sm:$0x3] %vm154, %v1180
    %v1184 = vsel %vm846, %v1176, %v1070
    %v1185 = vsel %vm846, %v1170, %v1077
    %s1186 = scalar_lea.vmem %s2, 10
    %v1187 = vld [vmem:[%s1186] sm:$0x3]
    %1189 = vrot.lane.b32.xlu0 %v1184, 80
    %v1190 = vpop.permute.xlu0 %1189
    %v1191 = vsel %vm44, %v1190, 0
    %1193 = vmatprep.subr.mxu0 0.0
    %1194 = vmatpush1.msra.mxu0 0.0
    %1195 = vmatprep.subr.mxu0 0.0
    %1196 = vmatpush1.msra.mxu0 0.0
    %1197 = vmatprep.subr.mxu0 0.0
    %1198 = vmatpush1.msra.mxu0 0.0
    %1199 = vmatprep.subr.mxu0 0.0
    %1200 = vmatpush1.msra.mxu0 0.0
    %1201 = vmatprep.subr.mxu0 0.0
    %1202 = vmatpush1.msra.mxu0 0.0
    %1203 = vmatprep.subr.mxu0 0.0
    %1204 = vmatpush1.msra.mxu0 0.0
    %1205 = vmatprep.subr.mxu0 0.0
    %1206 = vmatpush1.msra.mxu0 0.0
    %1207 = vmatprep.subr.mxu0 0.0
    %1208 = vmatpush1.msra.mxu0 0.0
    %1209 = vmatprep.subr.mxu0 0.0
    %1210 = vmatpush1.msra.mxu0 0.0
    %1211 = vmatprep.subr.mxu0 0.0
    %1212 = vmatpush1.msra.mxu0 0.0
    %1213 = vmatprep.subr.mxu0 0.0
    %1214 = vmatpush1.msra.mxu0 0.0
    %1215 = vmatprep.subr.mxu0 0.0
    %1216 = vmatpush1.msra.mxu0 0.0
    %1217 = vmatprep.subr.mxu0 0.0
    %1218 = vmatpush1.msra.mxu0 0.0
    %1219 = vmatprep.subr.mxu0 0.0
    %1220 = vmatpush1.msra.mxu0 0.0
    %1221 = vmatprep.subr.mxu0 0.0
    %1222 = vmatpush1.msra.mxu0 %v972
    %1223 = vmatprep.subr.mxu0 0.0
    %1224 = vmatpush1.msra.mxu0 %v971
    %1225 = vmatprep.subr.mxu0 0.0
    %1226 = vmatpush2.msra.mxu0 0.0
    %1227 = vmatprep.subr.mxu0 0.0
    %1228 = vmatpush2.msra.mxu0 0.0
    %1229 = vmatprep.subr.mxu0 0.0
    %1230 = vmatpush2.msra.mxu0 0.0
    %1231 = vmatprep.subr.mxu0 0.0
    %1232 = vmatpush2.msra.mxu0 0.0
    %1233 = vmatprep.subr.mxu0 0.0
    %1234 = vmatpush2.msra.mxu0 0.0
    %1235 = vmatprep.subr.mxu0 0.0
    %1236 = vmatpush2.msra.mxu0 0.0
    %1237 = vmatprep.subr.mxu0 0.0
    %1238 = vmatpush2.msra.mxu0 0.0
    %1239 = vmatprep.subr.mxu0 0.0
    %1240 = vmatpush2.msra.mxu0 0.0
    %1241 = vmatprep.subr.mxu0 0.0
    %1242 = vmatpush2.msra.mxu0 0.0
    %1243 = vmatprep.subr.mxu0 0.0
    %1244 = vmatpush2.msra.mxu0 0.0
    %1245 = vmatprep.subr.mxu0 0.0
    %1246 = vmatpush2.msra.mxu0 0.0
    %1247 = vmatprep.subr.mxu0 0.0
    %1248 = vmatpush2.msra.mxu0 0.0
    %1249 = vmatprep.subr.mxu0 0.0
    %1250 = vmatpush2.msra.mxu0 0.0
    %1251 = vmatprep.subr.mxu0 0.0
    %1252 = vmatpush2.msra.mxu0 0.0
    %1253 = vmatprep.subr.mxu0 0.0
    %1254 = vmatpush2.msra.mxu0 0.0
    %1255 = vmatprep.subr.mxu0 0.0
    %1256 = vmatpush2.msra.mxu0 0.0
    %1257 = vmatprep.mubr.f32.mxu0 0.0
    %1258 = vmatmul.mubr.f32.gmra.mxu0 %v1191
    %v1259 = vpop.f32.mrf.mxu0
    %v1260 = vadd.f32 0.0, %v1259
    %v1261 = vpop.f32.mrf.mxu0
    %1262 = vdwg.mxu0
    %v1263 = vadd.f32 %v1187, %v1260
    %v1264 = vxor.u32 %v1263, 2147483648
    %v1265 = vmul.f32 %v1264, 1.442695
    %v1266 = vpow.pop %v1265
    %v1267 = vadd.f32 %v1266, 1.0
    %v1268 = vrcp.pop %v1267
    %v1269 = vmul.f32 1.0, %v1268
    %v1270 = vtanh.pop %v1263
    %v1271 = vmul.f32 %v1269, %v1185
    %1273 = vrot.lane.b32.xlu0 %v1270, 96
    %v1274 = vpop.permute.xlu0 %1273
    %v1276 = vmul.f32 %v1269, %v1274
    %1278 = vrot.lane.b32.xlu0 %v1276, 16
    %v1279 = vpop.permute.xlu0 %1278
    %v1281 = vadd.f32 %v1271, %v1279
    %v1282 = vtanh.pop %v1281
    %1284 = vrot.lane.b32.xlu0 %v1282, 32
    %v1285 = vpop.permute.xlu0 %1284
    %v1287 = vmul.f32 %v1269, %v1285
    %v1288 = vsel %vm729, %v1287, 0.0
    %1290 = vrot.lane.b32.xlu0 %v1288, 80
    %v1291 = vpop.permute.xlu0 %1290
    %s1293 = scalar_lea.vmem %s6, 10
    %1294 = vst.msk [vmem:[%s1293] sm:$0x3] %vm154, %v1291
    %v1295 = vsel %vm729, %v1287, %v1184
    %v1296 = vsel %vm729, %v1281, %v1185
    %s1297 = scalar_lea.vmem %s2, 8
    %v1298 = vld [vmem:[%s1297] sm:$0x3]
    %1300 = vrot.lane.b32.xlu0 %v1295, 80
    %v1301 = vpop.permute.xlu0 %1300
    %v1302 = vsel %vm44, %v1301, 0
    %1304 = vmatprep.subr.mxu0 0.0
    %1305 = vmatpush1.msra.mxu0 0.0
    %1306 = vmatprep.subr.mxu0 0.0
    %1307 = vmatpush1.msra.mxu0 0.0
    %1308 = vmatprep.subr.mxu0 0.0
    %1309 = vmatpush1.msra.mxu0 0.0
    %1310 = vmatprep.subr.mxu0 0.0
    %1311 = vmatpush1.msra.mxu0 0.0
    %1312 = vmatprep.subr.mxu0 0.0
    %1313 = vmatpush1.msra.mxu0 0.0
    %1314 = vmatprep.subr.mxu0 0.0
    %1315 = vmatpush1.msra.mxu0 0.0
    %1316 = vmatprep.subr.mxu0 0.0
    %1317 = vmatpush1.msra.mxu0 0.0
    %1318 = vmatprep.subr.mxu0 0.0
    %1319 = vmatpush1.msra.mxu0 0.0
    %1320 = vmatprep.subr.mxu0 0.0
    %1321 = vmatpush1.msra.mxu0 0.0
    %1322 = vmatprep.subr.mxu0 0.0
    %1323 = vmatpush1.msra.mxu0 0.0
    %1324 = vmatprep.subr.mxu0 0.0
    %1325 = vmatpush1.msra.mxu0 0.0
    %1326 = vmatprep.subr.mxu0 0.0
    %1327 = vmatpush1.msra.mxu0 0.0
    %1328 = vmatprep.subr.mxu0 0.0
    %1329 = vmatpush1.msra.mxu0 0.0
    %1330 = vmatprep.subr.mxu0 0.0
    %1331 = vmatpush1.msra.mxu0 0.0
    %1332 = vmatprep.subr.mxu0 0.0
    %1333 = vmatpush1.msra.mxu0 %v972
    %1334 = vmatprep.subr.mxu0 0.0
    %1335 = vmatpush1.msra.mxu0 %v971
    %1336 = vmatprep.subr.mxu0 0.0
    %1337 = vmatpush2.msra.mxu0 0.0
    %1338 = vmatprep.subr.mxu0 0.0
    %1339 = vmatpush2.msra.mxu0 0.0
    %1340 = vmatprep.subr.mxu0 0.0
    %1341 = vmatpush2.msra.mxu0 0.0
    %1342 = vmatprep.subr.mxu0 0.0
    %1343 = vmatpush2.msra.mxu0 0.0
    %1344 = vmatprep.subr.mxu0 0.0
    %1345 = vmatpush2.msra.mxu0 0.0
    %1346 = vmatprep.subr.mxu0 0.0
    %1347 = vmatpush2.msra.mxu0 0.0
    %1348 = vmatprep.subr.mxu0 0.0
    %1349 = vmatpush2.msra.mxu0 0.0
    %1350 = vmatprep.subr.mxu0 0.0
    %1351 = vmatpush2.msra.mxu0 0.0
    %1352 = vmatprep.subr.mxu0 0.0
    %1353 = vmatpush2.msra.mxu0 0.0
    %1354 = vmatprep.subr.mxu0 0.0
    %1355 = vmatpush2.msra.mxu0 0.0
    %1356 = vmatprep.subr.mxu0 0.0
    %1357 = vmatpush2.msra.mxu0 0.0
    %1358 = vmatprep.subr.mxu0 0.0
    %1359 = vmatpush2.msra.mxu0 0.0
    %1360 = vmatprep.subr.mxu0 0.0
    %1361 = vmatpush2.msra.mxu0 0.0
    %1362 = vmatprep.subr.mxu0 0.0
    %1363 = vmatpush2.msra.mxu0 0.0
    %1364 = vmatprep.subr.mxu0 0.0
    %1365 = vmatpush2.msra.mxu0 0.0
    %1366 = vmatprep.subr.mxu0 0.0
    %1367 = vmatpush2.msra.mxu0 0.0
    %1368 = vmatprep.mubr.f32.mxu0 0.0
    %1369 = vmatmul.mubr.f32.gmra.mxu0 %v1302
    %v1370 = vpop.f32.mrf.mxu0
    %v1371 = vadd.f32 0.0, %v1370
    %v1372 = vpop.f32.mrf.mxu0
    %1373 = vdwg.mxu0
    %v1374 = vadd.f32 %v1298, %v1371
    %v1375 = vxor.u32 %v1374, 2147483648
    %v1376 = vmul.f32 %v1375, 1.442695
    %v1377 = vpow.pop %v1376
    %v1378 = vadd.f32 %v1377, 1.0
    %v1379 = vrcp.pop %v1378
    %v1380 = vmul.f32 1.0, %v1379
    %v1381 = vtanh.pop %v1374
    %v1382 = vmul.f32 %v1380, %v1296
    %1384 = vrot.lane.b32.xlu0 %v1381, 96
    %v1385 = vpop.permute.xlu0 %1384
    %v1387 = vmul.f32 %v1380, %v1385
    %1389 = vrot.lane.b32.xlu0 %v1387, 16
    %v1390 = vpop.permute.xlu0 %1389
    %v1392 = vadd.f32 %v1382, %v1390
    %v1393 = vtanh.pop %v1392
    %1395 = vrot.lane.b32.xlu0 %v1393, 32
    %v1396 = vpop.permute.xlu0 %1395
    %v1398 = vmul.f32 %v1380, %v1396
    %v1399 = vsel %vm612, %v1398, 0.0
    %1401 = vrot.lane.b32.xlu0 %v1399, 80
    %v1402 = vpop.permute.xlu0 %1401
    %s1404 = scalar_lea.vmem %s6, 8
    %1405 = vst.msk [vmem:[%s1404] sm:$0x3] %vm154, %v1402
    %v1406 = vsel %vm612, %v1398, %v1295
    %v1407 = vsel %vm612, %v1392, %v1296
    %s1408 = scalar_lea.vmem %s2, 6
    %v1409 = vld [vmem:[%s1408] sm:$0x3]
    %1411 = vrot.lane.b32.xlu0 %v1406, 80
    %v1412 = vpop.permute.xlu0 %1411
    %v1413 = vsel %vm44, %v1412, 0
    %1415 = vmatprep.subr.mxu0 0.0
    %1416 = vmatpush1.msra.mxu0 0.0
    %1417 = vmatprep.subr.mxu0 0.0
    %1418 = vmatpush1.msra.mxu0 0.0
    %1419 = vmatprep.subr.mxu0 0.0
    %1420 = vmatpush1.msra.mxu0 0.0
    %1421 = vmatprep.subr.mxu0 0.0
    %1422 = vmatpush1.msra.mxu0 0.0
    %1423 = vmatprep.subr.mxu0 0.0
    %1424 = vmatpush1.msra.mxu0 0.0
    %1425 = vmatprep.subr.mxu0 0.0
    %1426 = vmatpush1.msra.mxu0 0.0
    %1427 = vmatprep.subr.mxu0 0.0
    %1428 = vmatpush1.msra.mxu0 0.0
    %1429 = vmatprep.subr.mxu0 0.0
    %1430 = vmatpush1.msra.mxu0 0.0
    %1431 = vmatprep.subr.mxu0 0.0
    %1432 = vmatpush1.msra.mxu0 0.0
    %1433 = vmatprep.subr.mxu0 0.0
    %1434 = vmatpush1.msra.mxu0 0.0
    %1435 = vmatprep.subr.mxu0 0.0
    %1436 = vmatpush1.msra.mxu0 0.0
    %1437 = vmatprep.subr.mxu0 0.0
    %1438 = vmatpush1.msra.mxu0 0.0
    %1439 = vmatprep.subr.mxu0 0.0
    %1440 = vmatpush1.msra.mxu0 0.0
    %1441 = vmatprep.subr.mxu0 0.0
    %1442 = vmatpush1.msra.mxu0 0.0
    %1443 = vmatprep.subr.mxu0 0.0
    %1444 = vmatpush1.msra.mxu0 %v972
    %1445 = vmatprep.subr.mxu0 0.0
    %1446 = vmatpush1.msra.mxu0 %v971
    %1447 = vmatprep.subr.mxu0 0.0
    %1448 = vmatpush2.msra.mxu0 0.0
    %1449 = vmatprep.subr.mxu0 0.0
    %1450 = vmatpush2.msra.mxu0 0.0
    %1451 = vmatprep.subr.mxu0 0.0
    %1452 = vmatpush2.msra.mxu0 0.0
    %1453 = vmatprep.subr.mxu0 0.0
    %1454 = vmatpush2.msra.mxu0 0.0
    %1455 = vmatprep.subr.mxu0 0.0
    %1456 = vmatpush2.msra.mxu0 0.0
    %1457 = vmatprep.subr.mxu0 0.0
    %1458 = vmatpush2.msra.mxu0 0.0
    %1459 = vmatprep.subr.mxu0 0.0
    %1460 = vmatpush2.msra.mxu0 0.0
    %1461 = vmatprep.subr.mxu0 0.0
    %1462 = vmatpush2.msra.mxu0 0.0
    %1463 = vmatprep.subr.mxu0 0.0
    %1464 = vmatpush2.msra.mxu0 0.0
    %1465 = vmatprep.subr.mxu0 0.0
    %1466 = vmatpush2.msra.mxu0 0.0
    %1467 = vmatprep.subr.mxu0 0.0
    %1468 = vmatpush2.msra.mxu0 0.0
    %1469 = vmatprep.subr.mxu0 0.0
    %1470 = vmatpush2.msra.mxu0 0.0
    %1471 = vmatprep.subr.mxu0 0.0
    %1472 = vmatpush2.msra.mxu0 0.0
    %1473 = vmatprep.subr.mxu0 0.0
    %1474 = vmatpush2.msra.mxu0 0.0
    %1475 = vmatprep.subr.mxu0 0.0
    %1476 = vmatpush2.msra.mxu0 0.0
    %1477 = vmatprep.subr.mxu0 0.0
    %1478 = vmatpush2.msra.mxu0 0.0
    %1479 = vmatprep.mubr.f32.mxu0 0.0
    %1480 = vmatmul.mubr.f32.gmra.mxu0 %v1413
    %v1481 = vpop.f32.mrf.mxu0
    %v1482 = vadd.f32 0.0, %v1481
    %v1483 = vpop.f32.mrf.mxu0
    %1484 = vdwg.mxu0
    %v1485 = vadd.f32 %v1409, %v1482
    %v1486 = vxor.u32 %v1485, 2147483648
    %v1487 = vmul.f32 %v1486, 1.442695
    %v1488 = vpow.pop %v1487
    %v1489 = vadd.f32 %v1488, 1.0
    %v1490 = vrcp.pop %v1489
    %v1491 = vmul.f32 1.0, %v1490
    %v1492 = vtanh.pop %v1485
    %v1493 = vmul.f32 %v1491, %v1407
    %1495 = vrot.lane.b32.xlu0 %v1492, 96
    %v1496 = vpop.permute.xlu0 %1495
    %v1498 = vmul.f32 %v1491, %v1496
    %1500 = vrot.lane.b32.xlu0 %v1498, 16
    %v1501 = vpop.permute.xlu0 %1500
    %v1503 = vadd.f32 %v1493, %v1501
    %v1504 = vtanh.pop %v1503
    %1506 = vrot.lane.b32.xlu0 %v1504, 32
    %v1507 = vpop.permute.xlu0 %1506
    %v1509 = vmul.f32 %v1491, %v1507
    %v1510 = vsel %vm495, %v1509, 0.0
    %1512 = vrot.lane.b32.xlu0 %v1510, 80
    %v1513 = vpop.permute.xlu0 %1512
    %s1515 = scalar_lea.vmem %s6, 6
    %1516 = vst.msk [vmem:[%s1515] sm:$0x3] %vm154, %v1513
    %v1517 = vsel %vm495, %v1509, %v1406
    %v1518 = vsel %vm495, %v1503, %v1407
    %s1519 = scalar_lea.vmem %s2, 4
    %v1520 = vld [vmem:[%s1519] sm:$0x3]
    %1522 = vrot.lane.b32.xlu0 %v1517, 80
    %v1523 = vpop.permute.xlu0 %1522
    %v1524 = vsel %vm44, %v1523, 0
    %1526 = vmatprep.subr.mxu0 0.0
    %1527 = vmatpush1.msra.mxu0 0.0
    %1528 = vmatprep.subr.mxu0 0.0
    %1529 = vmatpush1.msra.mxu0 0.0
    %1530 = vmatprep.subr.mxu0 0.0
    %1531 = vmatpush1.msra.mxu0 0.0
    %1532 = vmatprep.subr.mxu0 0.0
    %1533 = vmatpush1.msra.mxu0 0.0
    %1534 = vmatprep.subr.mxu0 0.0
    %1535 = vmatpush1.msra.mxu0 0.0
    %1536 = vmatprep.subr.mxu0 0.0
    %1537 = vmatpush1.msra.mxu0 0.0
    %1538 = vmatprep.subr.mxu0 0.0
    %1539 = vmatpush1.msra.mxu0 0.0
    %1540 = vmatprep.subr.mxu0 0.0
    %1541 = vmatpush1.msra.mxu0 0.0
    %1542 = vmatprep.subr.mxu0 0.0
    %1543 = vmatpush1.msra.mxu0 0.0
    %1544 = vmatprep.subr.mxu0 0.0
    %1545 = vmatpush1.msra.mxu0 0.0
    %1546 = vmatprep.subr.mxu0 0.0
    %1547 = vmatpush1.msra.mxu0 0.0
    %1548 = vmatprep.subr.mxu0 0.0
    %1549 = vmatpush1.msra.mxu0 0.0
    %1550 = vmatprep.subr.mxu0 0.0
    %1551 = vmatpush1.msra.mxu0 0.0
    %1552 = vmatprep.subr.mxu0 0.0
    %1553 = vmatpush1.msra.mxu0 0.0
    %1554 = vmatprep.subr.mxu0 0.0
    %1555 = vmatpush1.msra.mxu0 %v972
    %1556 = vmatprep.subr.mxu0 0.0
    %1557 = vmatpush1.msra.mxu0 %v971
    %1558 = vmatprep.subr.mxu0 0.0
    %1559 = vmatpush2.msra.mxu0 0.0
    %1560 = vmatprep.subr.mxu0 0.0
    %1561 = vmatpush2.msra.mxu0 0.0
    %1562 = vmatprep.subr.mxu0 0.0
    %1563 = vmatpush2.msra.mxu0 0.0
    %1564 = vmatprep.subr.mxu0 0.0
    %1565 = vmatpush2.msra.mxu0 0.0
    %1566 = vmatprep.subr.mxu0 0.0
    %1567 = vmatpush2.msra.mxu0 0.0
    %1568 = vmatprep.subr.mxu0 0.0
    %1569 = vmatpush2.msra.mxu0 0.0
    %1570 = vmatprep.subr.mxu0 0.0
    %1571 = vmatpush2.msra.mxu0 0.0
    %1572 = vmatprep.subr.mxu0 0.0
    %1573 = vmatpush2.msra.mxu0 0.0
    %1574 = vmatprep.subr.mxu0 0.0
    %1575 = vmatpush2.msra.mxu0 0.0
    %1576 = vmatprep.subr.mxu0 0.0
    %1577 = vmatpush2.msra.mxu0 0.0
    %1578 = vmatprep.subr.mxu0 0.0
    %1579 = vmatpush2.msra.mxu0 0.0
    %1580 = vmatprep.subr.mxu0 0.0
    %1581 = vmatpush2.msra.mxu0 0.0
    %1582 = vmatprep.subr.mxu0 0.0
    %1583 = vmatpush2.msra.mxu0 0.0
    %1584 = vmatprep.subr.mxu0 0.0
    %1585 = vmatpush2.msra.mxu0 0.0
    %1586 = vmatprep.subr.mxu0 0.0
    %1587 = vmatpush2.msra.mxu0 0.0
    %1588 = vmatprep.subr.mxu0 0.0
    %1589 = vmatpush2.msra.mxu0 0.0
    %1590 = vmatprep.mubr.f32.mxu0 0.0
    %1591 = vmatmul.mubr.f32.gmra.mxu0 %v1524
    %v1592 = vpop.f32.mrf.mxu0
    %v1593 = vadd.f32 0.0, %v1592
    %v1594 = vpop.f32.mrf.mxu0
    %1595 = vdwg.mxu0
    %v1596 = vadd.f32 %v1520, %v1593
    %v1597 = vxor.u32 %v1596, 2147483648
    %v1598 = vmul.f32 %v1597, 1.442695
    %v1599 = vpow.pop %v1598
    %v1600 = vadd.f32 %v1599, 1.0
    %v1601 = vrcp.pop %v1600
    %v1602 = vmul.f32 1.0, %v1601
    %v1603 = vtanh.pop %v1596
    %v1604 = vmul.f32 %v1602, %v1518
    %1606 = vrot.lane.b32.xlu0 %v1603, 96
    %v1607 = vpop.permute.xlu0 %1606
    %v1609 = vmul.f32 %v1602, %v1607
    %1611 = vrot.lane.b32.xlu0 %v1609, 16
    %v1612 = vpop.permute.xlu0 %1611
    %v1614 = vadd.f32 %v1604, %v1612
    %v1615 = vtanh.pop %v1614
    %1617 = vrot.lane.b32.xlu0 %v1615, 32
    %v1618 = vpop.permute.xlu0 %1617
    %v1620 = vmul.f32 %v1602, %v1618
    %v1621 = vsel %vm378, %v1620, 0.0
    %1623 = vrot.lane.b32.xlu0 %v1621, 80
    %v1624 = vpop.permute.xlu0 %1623
    %s1626 = scalar_lea.vmem %s6, 4
    %1627 = vst.msk [vmem:[%s1626] sm:$0x3] %vm154, %v1624
    %v1628 = vsel %vm378, %v1620, %v1517
    %v1629 = vsel %vm378, %v1614, %v1518
    %s1630 = scalar_lea.vmem %s2, 2
    %v1631 = vld [vmem:[%s1630] sm:$0x3]
    %1633 = vrot.lane.b32.xlu0 %v1628, 80
    %v1634 = vpop.permute.xlu0 %1633
    %v1635 = vsel %vm44, %v1634, 0
    %1637 = vmatprep.subr.mxu0 0.0
    %1638 = vmatpush1.msra.mxu0 0.0
    %1639 = vmatprep.subr.mxu0 0.0
    %1640 = vmatpush1.msra.mxu0 0.0
    %1641 = vmatprep.subr.mxu0 0.0
    %1642 = vmatpush1.msra.mxu0 0.0
    %1643 = vmatprep.subr.mxu0 0.0
    %1644 = vmatpush1.msra.mxu0 0.0
    %1645 = vmatprep.subr.mxu0 0.0
    %1646 = vmatpush1.msra.mxu0 0.0
    %1647 = vmatprep.subr.mxu0 0.0
    %1648 = vmatpush1.msra.mxu0 0.0
    %1649 = vmatprep.subr.mxu0 0.0
    %1650 = vmatpush1.msra.mxu0 0.0
    %1651 = vmatprep.subr.mxu0 0.0
    %1652 = vmatpush1.msra.mxu0 0.0
    %1653 = vmatprep.subr.mxu0 0.0
    %1654 = vmatpush1.msra.mxu0 0.0
    %1655 = vmatprep.subr.mxu0 0.0
    %1656 = vmatpush1.msra.mxu0 0.0
    %1657 = vmatprep.subr.mxu0 0.0
    %1658 = vmatpush1.msra.mxu0 0.0
    %1659 = vmatprep.subr.mxu0 0.0
    %1660 = vmatpush1.msra.mxu0 0.0
    %1661 = vmatprep.subr.mxu0 0.0
    %1662 = vmatpush1.msra.mxu0 0.0
    %1663 = vmatprep.subr.mxu0 0.0
    %1664 = vmatpush1.msra.mxu0 0.0
    %1665 = vmatprep.subr.mxu0 0.0
    %1666 = vmatpush1.msra.mxu0 %v972
    %1667 = vmatprep.subr.mxu0 0.0
    %1668 = vmatpush1.msra.mxu0 %v971
    %1669 = vmatprep.subr.mxu0 0.0
    %1670 = vmatpush2.msra.mxu0 0.0
    %1671 = vmatprep.subr.mxu0 0.0
    %1672 = vmatpush2.msra.mxu0 0.0
    %1673 = vmatprep.subr.mxu0 0.0
    %1674 = vmatpush2.msra.mxu0 0.0
    %1675 = vmatprep.subr.mxu0 0.0
    %1676 = vmatpush2.msra.mxu0 0.0
    %1677 = vmatprep.subr.mxu0 0.0
    %1678 = vmatpush2.msra.mxu0 0.0
    %1679 = vmatprep.subr.mxu0 0.0
    %1680 = vmatpush2.msra.mxu0 0.0
    %1681 = vmatprep.subr.mxu0 0.0
    %1682 = vmatpush2.msra.mxu0 0.0
    %1683 = vmatprep.subr.mxu0 0.0
    %1684 = vmatpush2.msra.mxu0 0.0
    %1685 = vmatprep.subr.mxu0 0.0
    %1686 = vmatpush2.msra.mxu0 0.0
    %1687 = vmatprep.subr.mxu0 0.0
    %1688 = vmatpush2.msra.mxu0 0.0
    %1689 = vmatprep.subr.mxu0 0.0
    %1690 = vmatpush2.msra.mxu0 0.0
    %1691 = vmatprep.subr.mxu0 0.0
    %1692 = vmatpush2.msra.mxu0 0.0
    %1693 = vmatprep.subr.mxu0 0.0
    %1694 = vmatpush2.msra.mxu0 0.0
    %1695 = vmatprep.subr.mxu0 0.0
    %1696 = vmatpush2.msra.mxu0 0.0
    %1697 = vmatprep.subr.mxu0 0.0
    %1698 = vmatpush2.msra.mxu0 0.0
    %1699 = vmatprep.subr.mxu0 0.0
    %1700 = vmatpush2.msra.mxu0 0.0
    %1701 = vmatprep.mubr.f32.mxu0 0.0
    %1702 = vmatmul.mubr.f32.gmra.mxu0 %v1635
    %v1703 = vpop.f32.mrf.mxu0
    %v1704 = vadd.f32 0.0, %v1703
    %v1705 = vpop.f32.mrf.mxu0
    %1706 = vdwg.mxu0
    %v1707 = vadd.f32 %v1631, %v1704
    %v1708 = vxor.u32 %v1707, 2147483648
    %v1709 = vmul.f32 %v1708, 1.442695
    %v1710 = vpow.pop %v1709
    %v1711 = vadd.f32 %v1710, 1.0
    %v1712 = vrcp.pop %v1711
    %v1713 = vmul.f32 1.0, %v1712
    %v1714 = vtanh.pop %v1707
    %v1715 = vmul.f32 %v1713, %v1629
    %1717 = vrot.lane.b32.xlu0 %v1714, 96
    %v1718 = vpop.permute.xlu0 %1717
    %v1720 = vmul.f32 %v1713, %v1718
    %1722 = vrot.lane.b32.xlu0 %v1720, 16
    %v1723 = vpop.permute.xlu0 %1722
    %v1725 = vadd.f32 %v1715, %v1723
    %v1726 = vtanh.pop %v1725
    %1728 = vrot.lane.b32.xlu0 %v1726, 32
    %v1729 = vpop.permute.xlu0 %1728
    %v1731 = vmul.f32 %v1713, %v1729
    %v1732 = vsel %vm261, %v1731, 0.0
    %1734 = vrot.lane.b32.xlu0 %v1732, 80
    %v1735 = vpop.permute.xlu0 %1734
    %s1737 = scalar_lea.vmem %s6, 2
    %1738 = vst.msk [vmem:[%s1737] sm:$0x3] %vm154, %v1735
    %v1739 = vsel %vm261, %v1731, %v1628
    %v1740 = vsel %vm261, %v1725, %v1629
    %v1741 = vld [vmem:[%s2] sm:$0x3]
    %1743 = vrot.lane.b32.xlu0 %v1739, 80
    %v1744 = vpop.permute.xlu0 %1743
    %v1745 = vsel %vm44, %v1744, 0
    %1747 = vmatprep.subr.mxu0 0.0
    %1748 = vmatpush1.msra.mxu0 0.0
    %1749 = vmatprep.subr.mxu0 0.0
    %1750 = vmatpush1.msra.mxu0 0.0
    %1751 = vmatprep.subr.mxu0 0.0
    %1752 = vmatpush1.msra.mxu0 0.0
    %1753 = vmatprep.subr.mxu0 0.0
    %1754 = vmatpush1.msra.mxu0 0.0
    %1755 = vmatprep.subr.mxu0 0.0
    %1756 = vmatpush1.msra.mxu0 0.0
    %1757 = vmatprep.subr.mxu0 0.0
    %1758 = vmatpush1.msra.mxu0 0.0
    %1759 = vmatprep.subr.mxu0 0.0
    %1760 = vmatpush1.msra.mxu0 0.0
    %1761 = vmatprep.subr.mxu0 0.0
    %1762 = vmatpush1.msra.mxu0 0.0
    %1763 = vmatprep.subr.mxu0 0.0
    %1764 = vmatpush1.msra.mxu0 0.0
    %1765 = vmatprep.subr.mxu0 0.0
    %1766 = vmatpush1.msra.mxu0 0.0
    %1767 = vmatprep.subr.mxu0 0.0
    %1768 = vmatpush1.msra.mxu0 0.0
    %1769 = vmatprep.subr.mxu0 0.0
    %1770 = vmatpush1.msra.mxu0 0.0
    %1771 = vmatprep.subr.mxu0 0.0
    %1772 = vmatpush1.msra.mxu0 0.0
    %1773 = vmatprep.subr.mxu0 0.0
    %1774 = vmatpush1.msra.mxu0 0.0
    %1775 = vmatprep.subr.mxu0 0.0
    %1776 = vmatpush1.msra.mxu0 %v972
    %1777 = vmatprep.subr.mxu0 0.0
    %1778 = vmatpush1.msra.mxu0 %v971
    %1779 = vmatprep.subr.mxu0 0.0
    %1780 = vmatpush2.msra.mxu0 0.0
    %1781 = vmatprep.subr.mxu0 0.0
    %1782 = vmatpush2.msra.mxu0 0.0
    %1783 = vmatprep.subr.mxu0 0.0
    %1784 = vmatpush2.msra.mxu0 0.0
    %1785 = vmatprep.subr.mxu0 0.0
    %1786 = vmatpush2.msra.mxu0 0.0
    %1787 = vmatprep.subr.mxu0 0.0
    %1788 = vmatpush2.msra.mxu0 0.0
    %1789 = vmatprep.subr.mxu0 0.0
    %1790 = vmatpush2.msra.mxu0 0.0
    %1791 = vmatprep.subr.mxu0 0.0
    %1792 = vmatpush2.msra.mxu0 0.0
    %1793 = vmatprep.subr.mxu0 0.0
    %1794 = vmatpush2.msra.mxu0 0.0
    %1795 = vmatprep.subr.mxu0 0.0
    %1796 = vmatpush2.msra.mxu0 0.0
    %1797 = vmatprep.subr.mxu0 0.0
    %1798 = vmatpush2.msra.mxu0 0.0
    %1799 = vmatprep.subr.mxu0 0.0
    %1800 = vmatpush2.msra.mxu0 0.0
    %1801 = vmatprep.subr.mxu0 0.0
    %1802 = vmatpush2.msra.mxu0 0.0
    %1803 = vmatprep.subr.mxu0 0.0
    %1804 = vmatpush2.msra.mxu0 0.0
    %1805 = vmatprep.subr.mxu0 0.0
    %1806 = vmatpush2.msra.mxu0 0.0
    %1807 = vmatprep.subr.mxu0 0.0
    %1808 = vmatpush2.msra.mxu0 0.0
    %1809 = vmatprep.subr.mxu0 0.0
    %1810 = vmatpush2.msra.mxu0 0.0
    %1811 = vmatprep.mubr.f32.mxu0 0.0
    %1812 = vmatmul.mubr.f32.gmra.mxu0 %v1745
    %v1813 = vpop.f32.mrf.mxu0
    %v1814 = vadd.f32 0.0, %v1813
    %v1815 = vpop.f32.mrf.mxu0
    %1816 = vdwg.mxu0
    %v1817 = vadd.f32 %v1741, %v1814
    %v1818 = vxor.u32 %v1817, 2147483648
    %v1819 = vmul.f32 %v1818, 1.442695
    %v1820 = vpow.pop %v1819
    %v1821 = vadd.f32 %v1820, 1.0
    %v1822 = vrcp.pop %v1821
    %v1823 = vmul.f32 1.0, %v1822
    %v1824 = vtanh.pop %v1817
    %v1825 = vmul.f32 %v1823, %v1740
    %1827 = vrot.lane.b32.xlu0 %v1824, 96
    %v1828 = vpop.permute.xlu0 %1827
    %v1830 = vmul.f32 %v1823, %v1828
    %1832 = vrot.lane.b32.xlu0 %v1830, 16
    %v1833 = vpop.permute.xlu0 %1832
    %v1835 = vadd.f32 %v1825, %v1833
    %v1836 = vtanh.pop %v1835
    %1838 = vrot.lane.b32.xlu0 %v1836, 32
    %v1839 = vpop.permute.xlu0 %1838
    %v1841 = vmul.f32 %v1823, %v1839
    %v1842 = vsel %vm148, %v1841, 0.0
    %1844 = vrot.lane.b32.xlu0 %v1842, 80
    %v1845 = vpop.permute.xlu0 %1844
    %1847 = vst.msk [vmem:[%s6] sm:$0x3] %vm154, %v1845
    // Predicated region
    $region26: #{_bilstm_layer_impl.1} parent=1 // pred_check
      _
    $region27: #{_bilstm_layer_impl.1} parent=1 // pred_check_branch
      %1849 = sbr.rel (0) target = $region29
    $region28: #{_bilstm_layer_impl.1} parent=1 // pred_region
      _
    $region29: #{_bilstm_layer_impl.1} parent=1 // pred_fallthru
      _
    // Predicated region
    $region30: #{_bilstm_layer_impl.1} parent=1 // pred_check
      _
    $region31: #{_bilstm_layer_impl.1} parent=1 // pred_check_branch
      %1851 = sbr.rel (0) target = $region33
    $region32: #{_bilstm_layer_impl.1} parent=1 // pred_region
      _
    $region33: #{_bilstm_layer_impl.1} parent=1 // pred_fallthru
      _
    // Predicated region
    $region34: #{_bilstm_layer_impl.1} parent=1 // pred_check
      _
    $region35: #{_bilstm_layer_impl.1} parent=1 // pred_check_branch
      %1853 = sbr.rel (0) target = $region37
    $region36: #{_bilstm_layer_impl.1} parent=1 // pred_region
      _
    $region37: #{_bilstm_layer_impl.1} parent=1 // pred_fallthru
      _
    // Predicated region
    $region38: #{_bilstm_layer_impl.1} parent=1 // pred_check
      _
    $region39: #{_bilstm_layer_impl.1} parent=1 // pred_check_branch
      %1855 = sbr.rel (0) target = $region41
    $region40: #{_bilstm_layer_impl.1} parent=1 // pred_region
      _
    $region41: #{_bilstm_layer_impl.1} parent=1 // pred_fallthru
      _
    %1856 = vsyncpa [#allocation3], 1

</llo_original>
